<compile_context>
chip_gen: v7x
topology: tpu7x:2x2x1
jax: 0.10.0
libtpu: 0.0.40
codegen_flags: <defaults>
</compile_context>

<pallas_src>
import functools
import math

import jax
import jax.numpy as jnp
from jax.experimental import pallas as pl
from jax.experimental.pallas import tpu as pltpu


# ------------------------------ fused Pallas kernel ------------------------------

def _nonlocal_fused_kernel(xq_ref, xwin_ref, wg_ref, bg_ref, w_ref, b_ref, o_ref):
    """g conv + 2x2 pools + attention + W conv (BN folded) + residual, channels-first.

    xq_ref  : (1, C, Tq)        query tile of x (lanes = Tq, dense)
    xwin_ref: (1, NW, C, S_sub) window-permuted view of x (NW = 4 for 2x2 pool, 1 for none)
    wg_ref  : (Ci, C)           g 1x1 conv weight
    bg_ref  : (Ci, 1)           g 1x1 conv bias
    w_ref   : (C, Ci)           W 1x1 weight with BN scale folded in
    b_ref   : (C, 1)            W bias with BN shift folded in
    o_ref   : (1, C, Tq)        z = W_y + x tile (lanes = Tq, dense)
    """
    f32 = jnp.float32
    bf16 = jnp.bfloat16

    xq = xq_ref[0]                               # (C, Tq)  f32
    xwin = xwin_ref[0]                           # (NW, C, S_sub) f32

    # phi(x): 2x2 max-pool of x == max over the window axis (channels-first, lane-dense).
    phi = jnp.max(xwin, axis=0)                  # (C, S_sub)

    # g(x) -> 2x2 max-pool: 1x1 conv per window position, then max.  Adding the per-channel
    # bias after the max is exact.
    wg = wg_ref[...].astype(bf16)
    gx = None
    for j in range(xwin.shape[0]):
        gj = jnp.dot(wg, xwin[j].astype(bf16), preferred_element_type=f32)
        gx = gj if gx is None else jnp.maximum(gx, gj)
    gx = gx + bg_ref[...]                        # (Ci, S_sub)

    # Pre-fold the W projection (BN scale already folded) into the values.
    wgx = jnp.dot(w_ref[...].astype(bf16), gx.astype(bf16),
                  preferred_element_type=f32)    # (C, S_sub)

    # f^T = phi^T @ x_q  ("TN" matmul: contract the channel dim of both) -> (S_sub, Tq).
    f_t = jax.lax.dot_general(phi.astype(bf16), xq.astype(bf16),
                              (((0,), (0,)), ((), ())),
                              preferred_element_type=f32)

    # Softmax over the key axis (axis 0 == dim=-1 of f in the PyTorch code);
    # normalization deferred past the PV matmul.  Elementwise math stays f32.
    m = jnp.max(f_t, axis=0, keepdims=True)      # (1, Tq)
    e = jnp.exp(f_t - m)                         # (S_sub, Tq) f32
    denom = jnp.sum(e, axis=0, keepdims=True)    # (1, Tq)

    wy = jnp.dot(wgx.astype(bf16), e.astype(bf16),
                 preferred_element_type=f32)     # (C, Tq)
    inv = pl.reciprocal(denom, approx=True)      # EUP slot, (1, Tq)
    o_ref[0] = wy * inv + b_ref[...] + xq        # z = W_y + x   (lane-dense store)


# --------------------------------- wrapper ---------------------------------

def _pick_query_tile(S, C, S_sub, nw, budget_bytes=12 << 20):
    """Largest multiple of 128 dividing S whose per-step VMEM estimate fits the budget
    (budget is v5e's 16 MiB scoped default minus headroom, so no vmem_limit override
    is needed on any generation)."""
    if S % 128 != 0:
        return S                                  # small/odd inputs: one full-S block

    def est(tq):
        io = 2 * 2 * C * tq * 4                   # double-buffered x tile + out tile (f32)
        win = 2 * nw * C * S_sub * 4              # double-buffered window view of x (f32)
        attn = S_sub * tq * (4 + 4 + 2)           # f_t (f32) + e (f32) + e (bf16)
        misc = 3 * C * max(S_sub, tq) * 4         # phi / gx / wgx / bf16 copies (slack)
        return io + win + attn + misc

    best, t = 128, 128
    while t <= S:
        if S % t == 0 and est(t) <= budget_bytes:
            best = t
        t += 128
    return best


def nonlocal_block_forward(x, params, *, sub_sample=True, bn_layer=True, eps=1e-5):
    """Forward of _NonLocalBlockND (dimension=2, eval-mode BN).  x: (B, C, H, W) NCHW."""
    B, C, H, W = x.shape
    x = x.astype(jnp.float32)
    S = H * W
    x_flat = x.reshape(B, C, S)

    if sub_sample:
        assert H % 2 == 0 and W % 2 == 0, "sub_sample=True requires even H and W"
        S_sub = S // 4
        # Window-permuted view of x (one XLA rearrange); the 2x2 max-pool becomes an
        # in-kernel max over axis 1:  x_win[b, 2*dh+dw, c, h'*(W/2)+w'] = x[b, c, 2h'+dh, 2w'+dw]
        x_win = (x.reshape(B, C, H // 2, 2, W // 2, 2)
                   .transpose(0, 3, 5, 1, 2, 4)
                   .reshape(B, 4, C, S_sub))
    else:
        S_sub = S
        x_win = x_flat[:, None]                   # (B, 1, C, S): no pooling

    wg, bg = params["wg"], params["bg"]
    ww, bw = params["ww"], params["bw"]
    Ci = wg.shape[0]

    # Fold eval-mode BatchNorm into the W projection (exact for running-stats BN).
    if bn_layer:
        scale = params["bn_gamma"] * jax.lax.rsqrt(params["bn_var"] + eps)
        w_eff = ww * scale[:, None]
        b_eff = scale * (bw - params["bn_mean"]) + params["bn_beta"]
    else:
        w_eff, b_eff = ww, bw

    nw = x_win.shape[1]
    tq = _pick_query_tile(S, C, S_sub, nw)

    out = pl.pallas_call(
        _nonlocal_fused_kernel,
        out_shape=jax.ShapeDtypeStruct((B, C, S), jnp.float32),
        grid_spec=pltpu.PrefetchScalarGridSpec(
            num_scalar_prefetch=0,
            grid=(B, S // tq),
            in_specs=[
                pl.BlockSpec((1, C, tq), lambda b, q: (b, 0, q)),            # x query tile
                pl.BlockSpec((1, nw, C, S_sub), lambda b, q: (b, 0, 0, 0)),  # window view of x
                pl.BlockSpec((Ci, C), lambda b, q: (0, 0)),                  # Wg
                pl.BlockSpec((Ci, 1), lambda b, q: (0, 0)),                  # bg
                pl.BlockSpec((C, Ci), lambda b, q: (0, 0)),                  # W (BN folded)
                pl.BlockSpec((C, 1), lambda b, q: (0, 0)),                   # bias (BN folded)
            ],
            out_specs=pl.BlockSpec((1, C, tq), lambda b, q: (b, 0, q)),
        ),
        compiler_params=pltpu.CompilerParams(
            dimension_semantics=("parallel", "parallel")),
    )(x_flat, x_win, wg, bg.reshape(Ci, 1), w_eff, b_eff.reshape(C, 1))

    return out.reshape(B, C, H, W)


# ------------------------- pure-JAX reference (check) -------------------------

def _maxpool2x2(t):
    B, Ch, H, W = t.shape
    return t.reshape(B, Ch, H // 2, 2, W // 2, 2).max(axis=(3, 5))


def _reference_forward(x, params, *, sub_sample=True, bn_layer=True, eps=1e-5):
    B, C, H, W = x.shape
    Ci = params["wg"].shape[0]
    g_full = jnp.einsum("ic,bchw->bihw", params["wg"], x) + params["bg"][None, :, None, None]
    if sub_sample:
        g_p, phi = _maxpool2x2(g_full), _maxpool2x2(x)
    else:
        g_p, phi = g_full, x
    g_x = g_p.reshape(B, Ci, -1).transpose(0, 2, 1)        # (B, T, Ci)
    theta = x.reshape(B, C, -1).transpose(0, 2, 1)         # (B, S, C)
    phi_f = phi.reshape(B, C, -1)                          # (B, C, T)
    f = jnp.einsum("bsc,bct->bst", theta, phi_f)
    p = jax.nn.softmax(f, axis=-1)
    y = jnp.einsum("bst,bti->bsi", p, g_x).transpose(0, 2, 1).reshape(B, Ci, H, W)
    wy = jnp.einsum("ci,bihw->bchw", params["ww"], y) + params["bw"][None, :, None, None]
    if bn_layer:
        scale = params["bn_gamma"] * jax.lax.rsqrt(params["bn_var"] + eps)
        wy = ((wy - params["bn_mean"][None, :, None, None]) * scale[None, :, None, None]
              + params["bn_beta"][None, :, None, None])
    return wy + x


# ------------------------------------ main ------------------------------------

if __name__ == "__main__":
    key = jax.random.PRNGKey(0)
    ks = jax.random.split(key, 9)
    B, C, H, W = 2, 64, 32, 32                 # NCHW; in_channels=64 -> inter_channels=32
    Ci = C // 2

    x = 0.25 * jax.random.normal(ks[0], (B, C, H, W), jnp.float32)
    params = {
        # g: conv1x1(C -> Ci)
        "wg": jax.random.normal(ks[1], (Ci, C), jnp.float32) / math.sqrt(C),
        "bg": 0.1 * jax.random.normal(ks[2], (Ci,), jnp.float32),
        # W: conv1x1(Ci -> C) followed by BatchNorm (eval mode).
        # NOTE: the PyTorch module initializes the BN weight/bias to 0 (so z == x at init);
        # non-trivial values are used here so the kernel math is actually exercised.
        "ww": jax.random.normal(ks[3], (C, Ci), jnp.float32) / math.sqrt(Ci),
        "bw": 0.1 * jax.random.normal(ks[4], (C,), jnp.float32),
        "bn_gamma": 1.0 + 0.1 * jax.random.normal(ks[5], (C,), jnp.float32),
        "bn_beta": 0.1 * jax.random.normal(ks[6], (C,), jnp.float32),
        "bn_mean": 0.1 * jax.random.normal(ks[7], (C,), jnp.float32),
        "bn_var": jnp.abs(1.0 + 0.1 * jax.random.normal(ks[8], (C,), jnp.float32)),
    }

    fwd = jax.jit(functools.partial(nonlocal_block_forward, sub_sample=True, bn_layer=True))
    z = jax.block_until_ready(fwd(x, params))
    assert z.shape == (B, C, H, W), z.shape
    assert bool(jnp.all(jnp.isfinite(z)))

    # Correctness check against a pure-JAX (f32) reference of the same eval-mode-BN forward.
    z_ref = _reference_forward(x, params, sub_sample=True, bn_layer=True)
    err = float(jnp.max(jnp.abs(z - z_ref)) / (jnp.max(jnp.abs(z_ref)) + 1e-6))
    assert err < 2e-2, f"Pallas vs reference mismatch: rel-max err {err:.3e}"
    print("KERNEL_OK")
</pallas_src>

<mosaic_0001>
module attributes {stable_mosaic.version = 11 : i64} {
  func.func @_nonlocal_fused_kernel(%arg0: i32, %arg1: i32, %arg2: memref<1x64x1024xf32, #tpu.memory_space<vmem>>, %arg3: memref<1x4x64x256xf32, #tpu.memory_space<vmem>>, %arg4: memref<32x64xf32, #tpu.memory_space<vmem>>, %arg5: memref<32x1xf32, #tpu.memory_space<vmem>>, %arg6: memref<64x32xf32, #tpu.memory_space<vmem>>, %arg7: memref<64x1xf32, #tpu.memory_space<vmem>>, %arg8: memref<1x64x1024xf32, #tpu.memory_space<vmem>>) attributes {dimension_semantics = [#tpu.dimension_semantics<parallel>, #tpu.dimension_semantics<parallel>], iteration_bounds = array<i64: 2, 1>, scalar_prefetch = 0 : i64, scratch_operands = 0 : i64, tpu.core_type = #tpu.core_type<tc>, window_params = [{transform_indices = @transform_0, window_bounds = array<i64: 1, 64, 1024>}, {transform_indices = @transform_1, window_bounds = array<i64: 1, 4, 64, 256>}, {pipeline_mode = #tpu.pipeline_mode<synchronous>, transform_indices = @transform_2, window_bounds = array<i64: 32, 64>}, {pipeline_mode = #tpu.pipeline_mode<synchronous>, transform_indices = @transform_3, window_bounds = array<i64: 32, 1>}, {pipeline_mode = #tpu.pipeline_mode<synchronous>, transform_indices = @transform_4, window_bounds = array<i64: 64, 32>}, {pipeline_mode = #tpu.pipeline_mode<synchronous>, transform_indices = @transform_5, window_bounds = array<i64: 64, 1>}, {transform_indices = @transform_6, window_bounds = array<i64: 1, 64, 1024>}]} {
    %c0 = arith.constant 0 : index
    %c0_0 = arith.constant 0 : index
    %c0_1 = arith.constant 0 : index
    %0 = vector.load %arg2[%c0, %c0_0, %c0_1] : memref<1x64x1024xf32, #tpu.memory_space<vmem>>, vector<1x64x1024xf32>
    %1 = vector.shape_cast %0 : vector<1x64x1024xf32> to vector<64x1024xf32>
    %c0_2 = arith.constant 0 : index
    %c0_3 = arith.constant 0 : index
    %c0_4 = arith.constant 0 : index
    %c0_5 = arith.constant 0 : index
    %2 = vector.load %arg3[%c0_2, %c0_3, %c0_4, %c0_5] : memref<1x4x64x256xf32, #tpu.memory_space<vmem>>, vector<1x4x64x256xf32>
    %3 = vector.shape_cast %2 : vector<1x4x64x256xf32> to vector<4x64x256xf32>
    %cst = arith.constant dense<0xFF800000> : vector<64x256xf32>
    %4 = vector.multi_reduction <maximumf>, %3, %cst [0] : vector<4x64x256xf32> to vector<64x256xf32>
    %c0_6 = arith.constant 0 : index
    %c0_7 = arith.constant 0 : index
    %5 = vector.load %arg4[%c0_6, %c0_7] : memref<32x64xf32, #tpu.memory_space<vmem>>, vector<32x64xf32>
    %6 = arith.truncf %5 : vector<32x64xf32> to vector<32x64xbf16>
    %7 = vector.extract_strided_slice %3 {offsets = [0, 0, 0], sizes = [1, 64, 256], strides = [1, 1, 1]} : vector<4x64x256xf32> to vector<1x64x256xf32>
    %8 = vector.shape_cast %7 : vector<1x64x256xf32> to vector<64x256xf32>
    %9 = arith.truncf %8 : vector<64x256xf32> to vector<64x256xbf16>
    %cst_8 = arith.constant dense<0.000000e+00> : vector<32x256xf32>
    %10 = tpu.matmul %6, %9, %cst_8 {dimension_numbers = #tpu.dot_dimension_numbers<[1], [0], [0], [1], [0, 0, 1, 1], [], []>} : vector<32x64xbf16>, vector<64x256xbf16>, vector<32x256xf32> -> vector<32x256xf32>
    %11 = vector.extract_strided_slice %3 {offsets = [1, 0, 0], sizes = [1, 64, 256], strides = [1, 1, 1]} : vector<4x64x256xf32> to vector<1x64x256xf32>
    %12 = vector.shape_cast %11 : vector<1x64x256xf32> to vector<64x256xf32>
    %13 = arith.truncf %12 : vector<64x256xf32> to vector<64x256xbf16>
    %cst_9 = arith.constant dense<0.000000e+00> : vector<32x256xf32>
    %14 = tpu.matmul %6, %13, %cst_9 {dimension_numbers = #tpu.dot_dimension_numbers<[1], [0], [0], [1], [0, 0, 1, 1], [], []>} : vector<32x64xbf16>, vector<64x256xbf16>, vector<32x256xf32> -> vector<32x256xf32>
    %15 = arith.maximumf %10, %14 : vector<32x256xf32>
    %16 = vector.extract_strided_slice %3 {offsets = [2, 0, 0], sizes = [1, 64, 256], strides = [1, 1, 1]} : vector<4x64x256xf32> to vector<1x64x256xf32>
    %17 = vector.shape_cast %16 : vector<1x64x256xf32> to vector<64x256xf32>
    %18 = arith.truncf %17 : vector<64x256xf32> to vector<64x256xbf16>
    %cst_10 = arith.constant dense<0.000000e+00> : vector<32x256xf32>
    %19 = tpu.matmul %6, %18, %cst_10 {dimension_numbers = #tpu.dot_dimension_numbers<[1], [0], [0], [1], [0, 0, 1, 1], [], []>} : vector<32x64xbf16>, vector<64x256xbf16>, vector<32x256xf32> -> vector<32x256xf32>
    %20 = arith.maximumf %15, %19 : vector<32x256xf32>
    %21 = vector.extract_strided_slice %3 {offsets = [3, 0, 0], sizes = [1, 64, 256], strides = [1, 1, 1]} : vector<4x64x256xf32> to vector<1x64x256xf32>
    %22 = vector.shape_cast %21 : vector<1x64x256xf32> to vector<64x256xf32>
    %23 = arith.truncf %22 : vector<64x256xf32> to vector<64x256xbf16>
    %cst_11 = arith.constant dense<0.000000e+00> : vector<32x256xf32>
    %24 = tpu.matmul %6, %23, %cst_11 {dimension_numbers = #tpu.dot_dimension_numbers<[1], [0], [0], [1], [0, 0, 1, 1], [], []>} : vector<32x64xbf16>, vector<64x256xbf16>, vector<32x256xf32> -> vector<32x256xf32>
    %25 = arith.maximumf %20, %24 : vector<32x256xf32>
    %c0_12 = arith.constant 0 : index
    %c0_13 = arith.constant 0 : index
    %26 = vector.load %arg5[%c0_12, %c0_13] : memref<32x1xf32, #tpu.memory_space<vmem>>, vector<32x1xf32>
    %27 = vector.broadcast %26 : vector<32x1xf32> to vector<32x256xf32>
    %28 = arith.addf %25, %27 : vector<32x256xf32>
    %c0_14 = arith.constant 0 : index
    %c0_15 = arith.constant 0 : index
    %29 = vector.load %arg6[%c0_14, %c0_15] : memref<64x32xf32, #tpu.memory_space<vmem>>, vector<64x32xf32>
    %30 = arith.truncf %29 : vector<64x32xf32> to vector<64x32xbf16>
    %31 = arith.truncf %28 : vector<32x256xf32> to vector<32x256xbf16>
    %cst_16 = arith.constant dense<0.000000e+00> : vector<64x256xf32>
    %32 = tpu.matmul %30, %31, %cst_16 {dimension_numbers = #tpu.dot_dimension_numbers<[1], [0], [0], [1], [0, 0, 1, 1], [], []>} : vector<64x32xbf16>, vector<32x256xbf16>, vector<64x256xf32> -> vector<64x256xf32>
    %33 = arith.truncf %4 : vector<64x256xf32> to vector<64x256xbf16>
    %34 = arith.truncf %1 : vector<64x1024xf32> to vector<64x1024xbf16>
    %cst_17 = arith.constant dense<0.000000e+00> : vector<256x1024xf32>
    %35 = tpu.matmul %33, %34, %cst_17 {dimension_numbers = #tpu.dot_dimension_numbers<[0], [0], [1], [1], [0, 1, 1, 1], [], []>} : vector<64x256xbf16>, vector<64x1024xbf16>, vector<256x1024xf32> -> vector<256x1024xf32>
    %cst_18 = arith.constant dense<0xFF800000> : vector<1024xf32>
    %36 = vector.multi_reduction <maximumf>, %35, %cst_18 [0] : vector<256x1024xf32> to vector<1024xf32>
    %37 = vector.shape_cast %36 : vector<1024xf32> to vector<1x1024xf32>
    %38 = vector.broadcast %37 : vector<1x1024xf32> to vector<256x1024xf32>
    %39 = arith.subf %35, %38 : vector<256x1024xf32>
    %40 = math.exp %39 : vector<256x1024xf32>
    %cst_19 = arith.constant dense<0.000000e+00> : vector<1024xf32>
    %41 = vector.multi_reduction <add>, %40, %cst_19 [0] : vector<256x1024xf32> to vector<1024xf32>
    %42 = vector.shape_cast %41 : vector<1024xf32> to vector<1x1024xf32>
    %43 = arith.truncf %32 : vector<64x256xf32> to vector<64x256xbf16>
    %44 = arith.truncf %40 : vector<256x1024xf32> to vector<256x1024xbf16>
    %cst_20 = arith.constant dense<0.000000e+00> : vector<64x1024xf32>
    %45 = tpu.matmul %43, %44, %cst_20 {dimension_numbers = #tpu.dot_dimension_numbers<[1], [0], [0], [1], [0, 0, 1, 1], [], []>} : vector<64x256xbf16>, vector<256x1024xbf16>, vector<64x1024xf32> -> vector<64x1024xf32>
    %46 = tpu.reciprocal %42 {approx = true} : vector<1x1024xf32> -> vector<1x1024xf32>
    %47 = vector.broadcast %46 : vector<1x1024xf32> to vector<64x1024xf32>
    %48 = arith.mulf %45, %47 : vector<64x1024xf32>
    %c0_21 = arith.constant 0 : index
    %c0_22 = arith.constant 0 : index
    %49 = vector.load %arg7[%c0_21, %c0_22] : memref<64x1xf32, #tpu.memory_space<vmem>>, vector<64x1xf32>
    %50 = vector.broadcast %49 : vector<64x1xf32> to vector<64x1024xf32>
    %51 = arith.addf %48, %50 : vector<64x1024xf32>
    %52 = arith.addf %51, %1 : vector<64x1024xf32>
    %c0_23 = arith.constant 0 : index
    %c0_24 = arith.constant 0 : index
    %c0_25 = arith.constant 0 : index
    %53 = vector.load %arg8[%c0_23, %c0_24, %c0_25] : memref<1x64x1024xf32, #tpu.memory_space<vmem>>, vector<1x64x1024xf32>
    %54 = vector.shape_cast %53 : vector<1x64x1024xf32> to vector<64x1024xf32>
    %55 = vector.shape_cast %52 : vector<64x1024xf32> to vector<1x64x1024xf32>
    tpu.vector_store %arg8[%c0_23, %c0_24, %c0_25], %55 {strides = array<i32>} : memref<1x64x1024xf32, #tpu.memory_space<vmem>>, vector<1x64x1024xf32>,
    return
  }
  func.func @transform_0(%arg0: i32, %arg1: i32) -> (i32, i32, i32) {
    %c0_i32 = arith.constant 0 : i32
    %c0_i32_0 = arith.constant 0 : i32
    return %arg0, %c0_i32, %arg1 : i32, i32, i32
  }
  func.func @transform_1(%arg0: i32, %arg1: i32) -> (i32, i32, i32, i32) {
    %c0_i32 = arith.constant 0 : i32
    %c0_i32_0 = arith.constant 0 : i32
    %c0_i32_1 = arith.constant 0 : i32
    %c0_i32_2 = arith.constant 0 : i32
    return %arg0, %c0_i32, %c0_i32_0, %c0_i32_1 : i32, i32, i32, i32
  }
  func.func @transform_2(%arg0: i32, %arg1: i32) -> (i32, i32) {
    %c0_i32 = arith.constant 0 : i32
    %c0_i32_0 = arith.constant 0 : i32
    %c0_i32_1 = arith.constant 0 : i32
    return %c0_i32, %c0_i32_0 : i32, i32
  }
  func.func @transform_3(%arg0: i32, %arg1: i32) -> (i32, i32) {
    %c0_i32 = arith.constant 0 : i32
    %c0_i32_0 = arith.constant 0 : i32
    %c0_i32_1 = arith.constant 0 : i32
    return %c0_i32, %c0_i32_0 : i32, i32
  }
  func.func @transform_4(%arg0: i32, %arg1: i32) -> (i32, i32) {
    %c0_i32 = arith.constant 0 : i32
    %c0_i32_0 = arith.constant 0 : i32
    %c0_i32_1 = arith.constant 0 : i32
    return %c0_i32, %c0_i32_0 : i32, i32
  }
  func.func @transform_5(%arg0: i32, %arg1: i32) -> (i32, i32) {
    %c0_i32 = arith.constant 0 : i32
    %c0_i32_0 = arith.constant 0 : i32
    %c0_i32_1 = arith.constant 0 : i32
    return %c0_i32, %c0_i32_0 : i32, i32
  }
  func.func @transform_6(%arg0: i32, %arg1: i32) -> (i32, i32, i32) {
    %c0_i32 = arith.constant 0 : i32
    %c0_i32_0 = arith.constant 0 : i32
    return %arg0, %c0_i32, %arg1 : i32, i32, i32
  }
}

</mosaic_0001>

<llo_original>
// kernel: nonlocal_block_forward.1
$region0: #{nonlocal_block_forward.1}
  #allocation0 [shape = 'u32[]', space=smem, size = 0x4, offset = 0x4, fixed_abs, tag = 'smem constant byte address 0x4 - core index']
  #allocation1 [shape = 'u32[144,128]{1,0:T(1,128)}', space=vmem, size = 0x12000, scoped, tag = 'internal scratch']
  %s0 = inlined_call_operand.vmem [shape: f32[2,64,1024], index: 0, kind: input, shape index: {}]
  %s1 = inlined_call_operand.vmem [shape: f32[2,4,64,256], index: 1, kind: input, shape index: {}]
  %s2 = inlined_call_operand.vmem [shape: f32[32,64], index: 2, kind: input, shape index: {}]
  %s3 = inlined_call_operand.vmem [shape: f32[32,1], index: 3, kind: input, shape index: {}]
  %s4 = inlined_call_operand.vmem [shape: f32[64,32], index: 4, kind: input, shape index: {}]
  %s5 = inlined_call_operand.vmem [shape: f32[64,1], index: 5, kind: input, shape index: {}]
  %s6 = inlined_call_operand.vmem [shape: f32[2,64,1024], index: 6, kind: output, shape index: {}]
  %s7 = sld [smem:[#allocation0]]
  $region57: #{nonlocal_block_forward.1} parent=0
    _
  %s9 = ssub.s32 1, %s7
  %s10 = scalar_select 0, %s9, %s7
  loop: start=0, step=1, limit=4
  $region2: #{nonlocal_block_forward.1} parent=0 // loop_pre_header
    _
  $region3: #{nonlocal_block_forward.1} parent=0 // loop_header
    %s12 = sphi 0, %s16
    %p13 = scmp.ge.s32.totalorder %s12, 4
    %s19 = sphi 0, %s31
    %s20 = sphi 0, %s27
    %s21 = sphi 0, %s19
    %s22 = sphi 0, %s20
    %s23 = sphi 0, %s21
    %s24 = sphi 0, %s22
    %s36 = sphi 0, %s38
    %s39 = sphi 0, %s36
    %s40 = sphi 0, %s39
    %s56 = sphi 0, %s40
    %s62 = sphi 0, %s64
    %s65 = sphi 0, %s62
    %s66 = sphi 0, %s65
    %s82 = sphi 0, %s66
    %s86 = sphi 0, %s86
    %s88 = sphi 0, %s86
    %s89 = sphi 0, %s88
    %s103 = sphi 0, %s89
    %s107 = sphi 0, %s107
    %s109 = sphi 0, %s107
    %s110 = sphi 0, %s109
    %s124 = sphi 0, %s110
    %s128 = sphi 0, %s128
    %s130 = sphi 0, %s128
    %s131 = sphi 0, %s130
    %s145 = sphi 0, %s131
    %s149 = sphi 0, %s149
    %s151 = sphi 0, %s149
    %s152 = sphi 0, %s151
    %s166 = sphi 0, %s152
    %s174 = sphi 0, %s176
    %s177 = sphi 0, %s174
    %s178 = sphi 0, %s177
    %s194 = sphi 0, %s178
  $region4: #{nonlocal_block_forward.1} parent=0 // loop_header_branch
    %15 = sbr.rel (%p13) target = $region8
  $region5: #{nonlocal_block_forward.1} parent=0 // loop_body
    %s17 = ssub.s32 %s12, 1
    %s18 = ssub.s32 %s12, 2
    %s25 = sadd.s32 1, %s20
    %p26 = scmp.ge.s32.totalorder %s25, 1
    %s27 = scalar_select %p26, 0, %s25
    %s28 = sadd.s32 1, %s19
    %s29 = scalar_select %p26, %s28, %s19
    %p30 = scmp.ge.s32.totalorder %s29, 2
    %s31 = scalar_select %p30, 0, %s29
    %s32 = ssub.s32 %s19, %s31
    %s33 = ssub.s32 %s20, %s27
    %s34 = sor.u32 %s32, %s33
    %p35 = scmp.eq.s32.totalorder %s34, 0
    %s37 = sadd.s32 %s36, 1
    %s38 = scalar_select %p35, %s36, %s37
    %p41 = pneg %p35
    %p42 = scmp.eq.s32.totalorder %s12, 1
    %p43 = por %p41, %p42
    %p44 = scmp.ne.s32.totalorder %s36, %s39
    %p45 = scmp.eq.s32.totalorder %s12, 0
    %p46 = por %p44, %p45
    %p47 = scmp.ne.s32.totalorder %s36, %s39
    %p48 = scmp.eq.s32.totalorder %s17, 1
    %p49 = por %p47, %p48
    %p50 = scmp.ne.s32.totalorder %s39, %s40
    %p51 = scmp.eq.s32.totalorder %s17, 0
    %p52 = por %p50, %p51
    %p53 = scmp.ne.s32.totalorder %s39, %s40
    %p54 = scmp.eq.s32.totalorder %s18, 1
    %p55 = por %p53, %p54
    %p57 = scmp.ne.s32.totalorder %s40, %s56
    %p58 = scmp.eq.s32.totalorder %s18, 0
    %p59 = por %p57, %p58
    %s60 = ssub.s32 %s19, %s31
    %p61 = scmp.eq.s32.totalorder %s60, 0
    %s63 = sadd.s32 %s62, 1
    %s64 = scalar_select %p61, %s62, %s63
    %p67 = pneg %p61
    %p68 = scmp.eq.s32.totalorder %s12, 1
    %p69 = por %p67, %p68
    %p70 = scmp.ne.s32.totalorder %s62, %s65
    %p71 = scmp.eq.s32.totalorder %s12, 0
    %p72 = por %p70, %p71
    %p73 = scmp.ne.s32.totalorder %s62, %s65
    %p74 = scmp.eq.s32.totalorder %s17, 1
    %p75 = por %p73, %p74
    %p76 = scmp.ne.s32.totalorder %s65, %s66
    %p77 = scmp.eq.s32.totalorder %s17, 0
    %p78 = por %p76, %p77
    %p79 = scmp.ne.s32.totalorder %s65, %s66
    %p80 = scmp.eq.s32.totalorder %s18, 1
    %p81 = por %p79, %p80
    %p83 = scmp.ne.s32.totalorder %s66, %s82
    %p84 = scmp.eq.s32.totalorder %s18, 0
    %p85 = por %p83, %p84
    %s87 = sadd.s32 %s86, 1
    %p90 = scmp.eq.s32.totalorder %s12, 1
    %p91 = scmp.ne.s32.totalorder %s86, %s88
    %p92 = scmp.eq.s32.totalorder %s12, 0
    %p93 = por %p91, %p92
    %p94 = scmp.ne.s32.totalorder %s86, %s88
    %p95 = scmp.eq.s32.totalorder %s17, 1
    %p96 = por %p94, %p95
    %p97 = scmp.ne.s32.totalorder %s88, %s89
    %p98 = scmp.eq.s32.totalorder %s17, 0
    %p99 = por %p97, %p98
    %p100 = scmp.ne.s32.totalorder %s88, %s89
    %p101 = scmp.eq.s32.totalorder %s18, 1
    %p102 = por %p100, %p101
    %p104 = scmp.ne.s32.totalorder %s89, %s103
    %p105 = scmp.eq.s32.totalorder %s18, 0
    %p106 = por %p104, %p105
    %s108 = sadd.s32 %s107, 1
    %p111 = scmp.eq.s32.totalorder %s12, 1
    %p112 = scmp.ne.s32.totalorder %s107, %s109
    %p113 = scmp.eq.s32.totalorder %s12, 0
    %p114 = por %p112, %p113
    %p115 = scmp.ne.s32.totalorder %s107, %s109
    %p116 = scmp.eq.s32.totalorder %s17, 1
    %p117 = por %p115, %p116
    %p118 = scmp.ne.s32.totalorder %s109, %s110
    %p119 = scmp.eq.s32.totalorder %s17, 0
    %p120 = por %p118, %p119
    %p121 = scmp.ne.s32.totalorder %s109, %s110
    %p122 = scmp.eq.s32.totalorder %s18, 1
    %p123 = por %p121, %p122
    %p125 = scmp.ne.s32.totalorder %s110, %s124
    %p126 = scmp.eq.s32.totalorder %s18, 0
    %p127 = por %p125, %p126
    %s129 = sadd.s32 %s128, 1
    %p132 = scmp.eq.s32.totalorder %s12, 1
    %p133 = scmp.ne.s32.totalorder %s128, %s130
    %p134 = scmp.eq.s32.totalorder %s12, 0
    %p135 = por %p133, %p134
    %p136 = scmp.ne.s32.totalorder %s128, %s130
    %p137 = scmp.eq.s32.totalorder %s17, 1
    %p138 = por %p136, %p137
    %p139 = scmp.ne.s32.totalorder %s130, %s131
    %p140 = scmp.eq.s32.totalorder %s17, 0
    %p141 = por %p139, %p140
    %p142 = scmp.ne.s32.totalorder %s130, %s131
    %p143 = scmp.eq.s32.totalorder %s18, 1
    %p144 = por %p142, %p143
    %p146 = scmp.ne.s32.totalorder %s131, %s145
    %p147 = scmp.eq.s32.totalorder %s18, 0
    %p148 = por %p146, %p147
    %s150 = sadd.s32 %s149, 1
    %p153 = scmp.eq.s32.totalorder %s12, 1
    %p154 = scmp.ne.s32.totalorder %s149, %s151
    %p155 = scmp.eq.s32.totalorder %s12, 0
    %p156 = por %p154, %p155
    %p157 = scmp.ne.s32.totalorder %s149, %s151
    %p158 = scmp.eq.s32.totalorder %s17, 1
    %p159 = por %p157, %p158
    %p160 = scmp.ne.s32.totalorder %s151, %s152
    %p161 = scmp.eq.s32.totalorder %s17, 0
    %p162 = por %p160, %p161
    %p163 = scmp.ne.s32.totalorder %s151, %s152
    %p164 = scmp.eq.s32.totalorder %s18, 1
    %p165 = por %p163, %p164
    %p167 = scmp.ne.s32.totalorder %s152, %s166
    %p168 = scmp.eq.s32.totalorder %s18, 0
    %p169 = por %p167, %p168
    %s170 = ssub.s32 %s19, %s31
    %s171 = ssub.s32 %s20, %s27
    %s172 = sor.u32 %s170, %s171
    %p173 = scmp.eq.s32.totalorder %s172, 0
    %s175 = sadd.s32 %s174, 1
    %s176 = scalar_select %p173, %s174, %s175
    %p179 = pneg %p173
    %p180 = scmp.eq.s32.totalorder %s12, 1
    %p181 = por %p179, %p180
    %p182 = scmp.ne.s32.totalorder %s174, %s177
    %p183 = scmp.eq.s32.totalorder %s12, 0
    %p184 = por %p182, %p183
    %p185 = scmp.ne.s32.totalorder %s174, %s177
    %p186 = scmp.eq.s32.totalorder %s17, 1
    %p187 = por %p185, %p186
    %p188 = scmp.ne.s32.totalorder %s177, %s178
    %p189 = scmp.eq.s32.totalorder %s17, 0
    %p190 = por %p188, %p189
    %p191 = scmp.ne.s32.totalorder %s177, %s178
    %p192 = scmp.eq.s32.totalorder %s18, 1
    %p193 = por %p191, %p192
    %p195 = scmp.ne.s32.totalorder %s178, %s194
    %p196 = scmp.eq.s32.totalorder %s18, 0
    %p197 = por %p195, %p196
    %p198 = scmp.le.s32.totalorder 1, %s12
    %p199 = scmp.lt.s32.totalorder %s12, 3
    %p200 = pnand %p198, %p199
    %p201 = pneg %p200
    // Predicated region
    $region9: #{nonlocal_block_forward.1} parent=5 // pred_check
      _
    $region10: #{nonlocal_block_forward.1} parent=5 // pred_check_branch
      %203 = sbr.rel (%p200) target = $region12
    $region11: #{nonlocal_block_forward.1} parent=5 // pred_region
      %s204 = ssub.s32 %s12, 1
      // Predicated region
      $region13: #{nonlocal_block_forward.1} parent=11 // pred_check
        %p205 = pneg %p99
      $region14: #{nonlocal_block_forward.1} parent=11 // pred_check_branch
        %207 = sbr.rel (%p205) target = $region16
      $region15: #{nonlocal_block_forward.1} parent=11 // pred_region
        _
      $region16: #{nonlocal_block_forward.1} parent=11 // pred_fallthru
        _
      // Predicated region
      $region17: #{nonlocal_block_forward.1} parent=11 // pred_check
        %p208 = pneg %p120
      $region18: #{nonlocal_block_forward.1} parent=11 // pred_check_branch
        %210 = sbr.rel (%p208) target = $region20
      $region19: #{nonlocal_block_forward.1} parent=11 // pred_region
        _
      $region20: #{nonlocal_block_forward.1} parent=11 // pred_fallthru
        _
      // Predicated region
      $region21: #{nonlocal_block_forward.1} parent=11 // pred_check
        %p211 = pneg %p141
      $region22: #{nonlocal_block_forward.1} parent=11 // pred_check_branch
        %213 = sbr.rel (%p211) target = $region24
      $region23: #{nonlocal_block_forward.1} parent=11 // pred_region
        _
      $region24: #{nonlocal_block_forward.1} parent=11 // pred_fallthru
        _
      // Predicated region
      $region25: #{nonlocal_block_forward.1} parent=11 // pred_check
        %p214 = pneg %p162
      $region26: #{nonlocal_block_forward.1} parent=11 // pred_check_branch
        %216 = sbr.rel (%p214) target = $region28
      $region27: #{nonlocal_block_forward.1} parent=11 // pred_region
        _
      $region28: #{nonlocal_block_forward.1} parent=11 // pred_fallthru
        _
    $region12: #{nonlocal_block_forward.1} parent=5 // pred_fallthru
      _
    %p217 = scmp.lt.s32.totalorder %s12, 2
    // Predicated region
    $region29: #{nonlocal_block_forward.1} parent=5 // pred_check
      %p218 = pneg %p217
    $region30: #{nonlocal_block_forward.1} parent=5 // pred_check_branch
      %220 = sbr.rel (%p218) target = $region32
    $region31: #{nonlocal_block_forward.1} parent=5 // pred_region
      // Predicated region
      $region33: #{nonlocal_block_forward.1} parent=31 // pred_check
        %p221 = pneg %p46
      $region34: #{nonlocal_block_forward.1} parent=31 // pred_check_branch
        %223 = sbr.rel (%p221) target = $region36
      $region35: #{nonlocal_block_forward.1} parent=31 // pred_region
        %s224 = smul.u32 8, %s20
        %p225 = scmp.lt.s32.totalorder %s19, 1
        %s226 = scalar_select %p225, %s19, 1
        %p227 = scmp.lt.s32.totalorder %s224, 7
        %s228 = scalar_select %p227, %s224, 7
        %s229 = smul.addr %s226, 64
        %s230 = sadd.s32 %s228, %s229
        %s231 = smul.addr %s230, 8
        %s232 = scalar_lea.vmem %s0, %s231
        %s233 = smul.u32 8, %s20
      $region36: #{nonlocal_block_forward.1} parent=31 // pred_fallthru
        _
      // Predicated region
      $region37: #{nonlocal_block_forward.1} parent=31 // pred_check
        %p234 = pneg %p72
      $region38: #{nonlocal_block_forward.1} parent=31 // pred_check_branch
        %236 = sbr.rel (%p234) target = $region40
      $region39: #{nonlocal_block_forward.1} parent=31 // pred_region
        %p237 = scmp.lt.s32.totalorder %s19, 1
        %s238 = scalar_select %p237, %s19, 1
        %s239 = smul.addr %s238, 64
        %s240 = smul.addr %s239, 8
        %s241 = scalar_lea.vmem %s1, %s240
      $region40: #{nonlocal_block_forward.1} parent=31 // pred_fallthru
        _
    $region32: #{nonlocal_block_forward.1} parent=5 // pred_fallthru
      _
    %p242 = scmp.le.s32.totalorder 1, %s12
    %p243 = scmp.lt.s32.totalorder %s12, 3
    %p244 = pnand %p242, %p243
    %p245 = pneg %p244
    // Predicated region
    $region41: #{nonlocal_block_forward.1} parent=5 // pred_check
      _
    $region42: #{nonlocal_block_forward.1} parent=5 // pred_check_branch
      %247 = sbr.rel (%p244) target = $region44
    $region43: #{nonlocal_block_forward.1} parent=5 // pred_region
      %s248 = ssub.s32 %s12, 1
      %s249 = smul.u32 8, %s22
      %p250 = scmp.lt.s32.totalorder %s21, 1
      %s251 = scalar_select %p250, %s21, 1
      %p252 = scmp.lt.s32.totalorder %s249, 7
      %s253 = scalar_select %p252, %s249, 7
      %s254 = smul.addr %s251, 64
      %s255 = sadd.s32 %s253, %s254
      %s256 = smul.addr %s255, 8
      %s257 = scalar_lea.vmem %s0, %s256
      %p258 = pneg %p52
      %p259 = pneg %p49
      %p260 = scmp.lt.s32.totalorder %s21, 1
      %s261 = scalar_select %p260, %s21, 1
      %s262 = smul.addr %s261, 64
      %s263 = smul.addr %s262, 8
      %s264 = scalar_lea.vmem %s1, %s263
      %p265 = pneg %p78
      %p266 = pneg %p75
      %p267 = pneg %p99
      %p268 = pneg %p96
      %p269 = pneg %p120
      %p270 = pneg %p117
      %p271 = pneg %p141
      %p272 = pneg %p138
      %p273 = pneg %p162
      %p274 = pneg %p159
      %p275 = pneg %p190
      %p276 = pneg %p187
      %s277 = smul.u32 8, %s22
      %p278 = scmp.lt.s32.totalorder %s21, 1
      %s279 = scalar_select %p278, %s21, 1
      %p280 = scmp.lt.s32.totalorder %s277, 7
      %s281 = scalar_select %p280, %s277, 7
      %s282 = smul.addr %s279, 64
      %s283 = sadd.s32 %s281, %s282
      %s284 = smul.addr %s283, 8
      %s285 = scalar_lea.vmem %s6, %s284
      %s286 = smul.u32 8, %s22
      %p287 = scmp.lt.s32.totalorder %s21, 1
      %s288 = scalar_select %p287, %s21, 1
      %p289 = scmp.lt.s32.totalorder %s286, 7
      %s290 = scalar_select %p289, %s286, 7
      %s291 = smul.addr %s288, 64
      %s292 = sadd.s32 %s290, %s291
      %s293 = smul.addr %s292, 8
      %s294 = scalar_lea.vmem %s0, %s293
      %s295 = smul.u32 8, %s22
      %p296 = scmp.lt.s32.totalorder %s21, 1
      %s297 = scalar_select %p296, %s21, 1
      %s298 = smul.addr %s297, 64
      %s299 = smul.addr %s298, 8
      %s300 = scalar_lea.vmem %s1, %s299
      %s301 = smul.u32 8, %s22
      %p302 = scmp.lt.s32.totalorder %s21, 1
      %s303 = scalar_select %p302, %s21, 1
      %p304 = scmp.lt.s32.totalorder %s301, 7
      %s305 = scalar_select %p304, %s301, 7
      %s306 = smul.addr %s303, 64
      %s307 = sadd.s32 %s305, %s306
      %s308 = smul.addr %s307, 8
      %s309 = scalar_lea.vmem %s6, %s308
      %s310 = smul.u32 8, %s22
      %v312 = vld [vmem:[%s294] sm:$0xff]
      %v313 = vld [vmem:[%s294 + $0x8] sm:$0xff]
      %v314 = vld [vmem:[%s294 + $0x10] sm:$0xff]
      %v315 = vld [vmem:[%s294 + $0x18] sm:$0xff]
      %v316 = vld [vmem:[%s294 + $0x20] sm:$0xff]
      %v317 = vld [vmem:[%s294 + $0x28] sm:$0xff]
      %v318 = vld [vmem:[%s294 + $0x30] sm:$0xff]
      %v319 = vld [vmem:[%s294 + $0x38] sm:$0xff]
      %v320 = vld [vmem:[%s294 + $0x40] sm:$0xff]
      %v321 = vld [vmem:[%s294 + $0x48] sm:$0xff]
      %v322 = vld [vmem:[%s294 + $0x50] sm:$0xff]
      %v323 = vld [vmem:[%s294 + $0x58] sm:$0xff]
      %v324 = vld [vmem:[%s294 + $0x60] sm:$0xff]
      %v325 = vld [vmem:[%s294 + $0x68] sm:$0xff]
      %v326 = vld [vmem:[%s294 + $0x70] sm:$0xff]
      %v327 = vld [vmem:[%s294 + $0x78] sm:$0xff]
      %v328 = vld [vmem:[%s294 + $0x80] sm:$0xff]
      %v329 = vld [vmem:[%s294 + $0x88] sm:$0xff]
      %v330 = vld [vmem:[%s294 + $0x90] sm:$0xff]
      %v331 = vld [vmem:[%s294 + $0x98] sm:$0xff]
      %v332 = vld [vmem:[%s294 + $0xa0] sm:$0xff]
      %v333 = vld [vmem:[%s294 + $0xa8] sm:$0xff]
      %v334 = vld [vmem:[%s294 + $0xb0] sm:$0xff]
      %v335 = vld [vmem:[%s294 + $0xb8] sm:$0xff]
      %v336 = vld [vmem:[%s294 + $0xc0] sm:$0xff]
      %v337 = vld [vmem:[%s294 + $0xc8] sm:$0xff]
      %v338 = vld [vmem:[%s294 + $0xd0] sm:$0xff]
      %v339 = vld [vmem:[%s294 + $0xd8] sm:$0xff]
      %v340 = vld [vmem:[%s294 + $0xe0] sm:$0xff]
      %v341 = vld [vmem:[%s294 + $0xe8] sm:$0xff]
      %v342 = vld [vmem:[%s294 + $0xf0] sm:$0xff]
      %v343 = vld [vmem:[%s294 + $0xf8] sm:$0xff]
      %v344 = vld [vmem:[%s294 + $0x100] sm:$0xff]
      %v345 = vld [vmem:[%s294 + $0x108] sm:$0xff]
      %v346 = vld [vmem:[%s294 + $0x110] sm:$0xff]
      %v347 = vld [vmem:[%s294 + $0x118] sm:$0xff]
      %v348 = vld [vmem:[%s294 + $0x120] sm:$0xff]
      %v349 = vld [vmem:[%s294 + $0x128] sm:$0xff]
      %v350 = vld [vmem:[%s294 + $0x130] sm:$0xff]
      %v351 = vld [vmem:[%s294 + $0x138] sm:$0xff]
      %v352 = vld [vmem:[%s294 + $0x140] sm:$0xff]
      %v353 = vld [vmem:[%s294 + $0x148] sm:$0xff]
      %v354 = vld [vmem:[%s294 + $0x150] sm:$0xff]
      %v355 = vld [vmem:[%s294 + $0x158] sm:$0xff]
      %v356 = vld [vmem:[%s294 + $0x160] sm:$0xff]
      %v357 = vld [vmem:[%s294 + $0x168] sm:$0xff]
      %v358 = vld [vmem:[%s294 + $0x170] sm:$0xff]
      %v359 = vld [vmem:[%s294 + $0x178] sm:$0xff]
      %v360 = vld [vmem:[%s294 + $0x180] sm:$0xff]
      %v361 = vld [vmem:[%s294 + $0x188] sm:$0xff]
      %v362 = vld [vmem:[%s294 + $0x190] sm:$0xff]
      %v363 = vld [vmem:[%s294 + $0x198] sm:$0xff]
      %v364 = vld [vmem:[%s294 + $0x1a0] sm:$0xff]
      %v365 = vld [vmem:[%s294 + $0x1a8] sm:$0xff]
      %v366 = vld [vmem:[%s294 + $0x1b0] sm:$0xff]
      %v367 = vld [vmem:[%s294 + $0x1b8] sm:$0xff]
      %v368 = vld [vmem:[%s294 + $0x1c0] sm:$0xff]
      %v369 = vld [vmem:[%s294 + $0x1c8] sm:$0xff]
      %v370 = vld [vmem:[%s294 + $0x1d0] sm:$0xff]
      %v371 = vld [vmem:[%s294 + $0x1d8] sm:$0xff]
      %v372 = vld [vmem:[%s294 + $0x1e0] sm:$0xff]
      %v373 = vld [vmem:[%s294 + $0x1e8] sm:$0xff]
      %v374 = vld [vmem:[%s294 + $0x1f0] sm:$0xff]
      %v375 = vld [vmem:[%s294 + $0x1f8] sm:$0xff]
      %v376 = vld [vmem:[%s300] sm:$0xff]
      %v377 = vld [vmem:[%s300 + $0x8] sm:$0xff]
      %v378 = vld [vmem:[%s300 + $0x10] sm:$0xff]
      %v379 = vld [vmem:[%s300 + $0x18] sm:$0xff]
      %v380 = vld [vmem:[%s300 + $0x20] sm:$0xff]
      %v381 = vld [vmem:[%s300 + $0x28] sm:$0xff]
      %v382 = vld [vmem:[%s300 + $0x30] sm:$0xff]
      %v383 = vld [vmem:[%s300 + $0x38] sm:$0xff]
      %v384 = vld [vmem:[%s300 + $0x40] sm:$0xff]
      %v385 = vld [vmem:[%s300 + $0x48] sm:$0xff]
      %v386 = vld [vmem:[%s300 + $0x50] sm:$0xff]
      %v387 = vld [vmem:[%s300 + $0x58] sm:$0xff]
      %v388 = vld [vmem:[%s300 + $0x60] sm:$0xff]
      %v389 = vld [vmem:[%s300 + $0x68] sm:$0xff]
      %v390 = vld [vmem:[%s300 + $0x70] sm:$0xff]
      %v391 = vld [vmem:[%s300 + $0x78] sm:$0xff]
      %v392 = vld [vmem:[%s300 + $0x80] sm:$0xff]
      %v393 = vld [vmem:[%s300 + $0x88] sm:$0xff]
      %v394 = vld [vmem:[%s300 + $0x90] sm:$0xff]
      %v395 = vld [vmem:[%s300 + $0x98] sm:$0xff]
      %v396 = vld [vmem:[%s300 + $0xa0] sm:$0xff]
      %v397 = vld [vmem:[%s300 + $0xa8] sm:$0xff]
      %v398 = vld [vmem:[%s300 + $0xb0] sm:$0xff]
      %v399 = vld [vmem:[%s300 + $0xb8] sm:$0xff]
      %v400 = vld [vmem:[%s300 + $0xc0] sm:$0xff]
      %v401 = vld [vmem:[%s300 + $0xc8] sm:$0xff]
      %v402 = vld [vmem:[%s300 + $0xd0] sm:$0xff]
      %v403 = vld [vmem:[%s300 + $0xd8] sm:$0xff]
      %v404 = vld [vmem:[%s300 + $0xe0] sm:$0xff]
      %v405 = vld [vmem:[%s300 + $0xe8] sm:$0xff]
      %v406 = vld [vmem:[%s300 + $0xf0] sm:$0xff]
      %v407 = vld [vmem:[%s300 + $0xf8] sm:$0xff]
      %v408 = vld [vmem:[%s300 + $0x100] sm:$0xff]
      %v409 = vld [vmem:[%s300 + $0x108] sm:$0xff]
      %v410 = vld [vmem:[%s300 + $0x110] sm:$0xff]
      %v411 = vld [vmem:[%s300 + $0x118] sm:$0xff]
      %v412 = vld [vmem:[%s300 + $0x120] sm:$0xff]
      %v413 = vld [vmem:[%s300 + $0x128] sm:$0xff]
      %v414 = vld [vmem:[%s300 + $0x130] sm:$0xff]
      %v415 = vld [vmem:[%s300 + $0x138] sm:$0xff]
      %v416 = vld [vmem:[%s300 + $0x140] sm:$0xff]
      %v417 = vld [vmem:[%s300 + $0x148] sm:$0xff]
      %v418 = vld [vmem:[%s300 + $0x150] sm:$0xff]
      %v419 = vld [vmem:[%s300 + $0x158] sm:$0xff]
      %v420 = vld [vmem:[%s300 + $0x160] sm:$0xff]
      %v421 = vld [vmem:[%s300 + $0x168] sm:$0xff]
      %v422 = vld [vmem:[%s300 + $0x170] sm:$0xff]
      %v423 = vld [vmem:[%s300 + $0x178] sm:$0xff]
      %v424 = vld [vmem:[%s300 + $0x180] sm:$0xff]
      %v425 = vld [vmem:[%s300 + $0x188] sm:$0xff]
      %v426 = vld [vmem:[%s300 + $0x190] sm:$0xff]
      %v427 = vld [vmem:[%s300 + $0x198] sm:$0xff]
      %v428 = vld [vmem:[%s300 + $0x1a0] sm:$0xff]
      %v429 = vld [vmem:[%s300 + $0x1a8] sm:$0xff]
      %v430 = vld [vmem:[%s300 + $0x1b0] sm:$0xff]
      %v431 = vld [vmem:[%s300 + $0x1b8] sm:$0xff]
      %v432 = vld [vmem:[%s300 + $0x1c0] sm:$0xff]
      %v433 = vld [vmem:[%s300 + $0x1c8] sm:$0xff]
      %v434 = vld [vmem:[%s300 + $0x1d0] sm:$0xff]
      %v435 = vld [vmem:[%s300 + $0x1d8] sm:$0xff]
      %v436 = vld [vmem:[%s300 + $0x1e0] sm:$0xff]
      %v437 = vld [vmem:[%s300 + $0x1e8] sm:$0xff]
      %v438 = vld [vmem:[%s300 + $0x1f0] sm:$0xff]
      %v439 = vld [vmem:[%s300 + $0x1f8] sm:$0xff]
      %v440 = vmax.f32 %v376, %v392
      %v441 = vmax.f32 %v440, %v408
      %v442 = vmax.f32 %v441, %v424
      %v443 = vmax.f32 %v377, %v393
      %v444 = vmax.f32 %v443, %v409
      %v445 = vmax.f32 %v444, %v425
      %v446 = vmax.f32 %v378, %v394
      %v447 = vmax.f32 %v446, %v410
      %v448 = vmax.f32 %v447, %v426
      %v449 = vmax.f32 %v379, %v395
      %v450 = vmax.f32 %v449, %v411
      %v451 = vmax.f32 %v450, %v427
      %v452 = vmax.f32 %v380, %v396
      %v453 = vmax.f32 %v452, %v412
      %v454 = vmax.f32 %v453, %v428
      %v455 = vmax.f32 %v381, %v397
      %v456 = vmax.f32 %v455, %v413
      %v457 = vmax.f32 %v456, %v429
      %v458 = vmax.f32 %v382, %v398
      %v459 = vmax.f32 %v458, %v414
      %v460 = vmax.f32 %v459, %v430
      %v461 = vmax.f32 %v383, %v399
      %v462 = vmax.f32 %v461, %v415
      %v463 = vmax.f32 %v462, %v431
      %v464 = vmax.f32 %v384, %v400
      %v465 = vmax.f32 %v464, %v416
      %v466 = vmax.f32 %v465, %v432
      %v467 = vmax.f32 %v385, %v401
      %v468 = vmax.f32 %v467, %v417
      %v469 = vmax.f32 %v468, %v433
      %v470 = vmax.f32 %v386, %v402
      %v471 = vmax.f32 %v470, %v418
      %v472 = vmax.f32 %v471, %v434
      %v473 = vmax.f32 %v387, %v403
      %v474 = vmax.f32 %v473, %v419
      %v475 = vmax.f32 %v474, %v435
      %v476 = vmax.f32 %v388, %v404
      %v477 = vmax.f32 %v476, %v420
      %v478 = vmax.f32 %v477, %v436
      %v479 = vmax.f32 %v389, %v405
      %v480 = vmax.f32 %v479, %v421
      %v481 = vmax.f32 %v480, %v437
      %v482 = vmax.f32 %v390, %v406
      %v483 = vmax.f32 %v482, %v422
      %v484 = vmax.f32 %v483, %v438
      %v485 = vmax.f32 %v391, %v407
      %v486 = vmax.f32 %v485, %v423
      %v487 = vmax.f32 %v486, %v439
      %v488 = vld [vmem:[%s2] sm:$0xff]
      %v489 = vld [vmem:[%s2 + $0x8] sm:$0xff]
      %v490 = vld [vmem:[%s2 + $0x10] sm:$0xff]
      %v491 = vld [vmem:[%s2 + $0x18] sm:$0xff]
      %v492 = vpack.c.bf16 %v489, %v488
      %v493 = vpack.c.bf16 %v491, %v490
      %v494 = vpack.c.bf16 %v378, %v376
      %v495 = vpack.c.bf16 %v379, %v377
      %v496 = vpack.c.bf16 %v382, %v380
      %v497 = vpack.c.bf16 %v383, %v381
      %v498 = vpack.c.bf16 %v386, %v384
      %v499 = vpack.c.bf16 %v387, %v385
      %v500 = vpack.c.bf16 %v390, %v388
      %v501 = vpack.c.bf16 %v391, %v389
      %vm502 = vcmask 523264
      %v504 = vsel %vm502, %v492, 0
      %v507 = vsel %vm502, %v493, 0
      %509 = vmatprep.subr.bf16.mxu0 %v495
      %510 = vmatpush1.bf16.msra.mxu0 %v494
      %511 = vmatprep.subr.bf16.mxu0 %v497
      %512 = vmatpush1.bf16.msra.mxu0 %v496
      %513 = vmatprep.subr.bf16.mxu0 %v499
      %514 = vmatpush1.bf16.msra.mxu0 %v498
      %515 = vmatprep.subr.bf16.mxu0 %v501
      %516 = vmatpush1.bf16.msra.mxu0 %v500
      %517 = vmatprep.subr.bf16.mxu0 0
      %518 = vmatpush1.bf16.msra.mxu0 0
      %519 = vmatprep.subr.bf16.mxu0 0
      %520 = vmatpush1.bf16.msra.mxu0 0
      %521 = vmatprep.subr.bf16.mxu0 0
      %522 = vmatpush1.bf16.msra.mxu0 0
      %523 = vmatprep.subr.bf16.mxu0 0
      %524 = vmatpush1.bf16.msra.mxu0 0
      %525 = vmatprep.subr.bf16.mxu0 0
      %526 = vmatpush1.bf16.msra.mxu0 0
      %527 = vmatprep.subr.bf16.mxu0 0
      %528 = vmatpush1.bf16.msra.mxu0 0
      %529 = vmatprep.subr.bf16.mxu0 0
      %530 = vmatpush1.bf16.msra.mxu0 0
      %531 = vmatprep.subr.bf16.mxu0 0
      %532 = vmatpush1.bf16.msra.mxu0 0
      %533 = vmatprep.subr.bf16.mxu0 0
      %534 = vmatpush1.bf16.msra.mxu0 0
      %535 = vmatprep.subr.bf16.mxu0 0
      %536 = vmatpush1.bf16.msra.mxu0 0
      %537 = vmatprep.subr.bf16.mxu0 0
      %538 = vmatpush1.bf16.msra.mxu0 0
      %539 = vmatprep.subr.bf16.mxu0 0
      %540 = vmatpush1.bf16.msra.mxu0 0
      %541 = vmatprep.mubr.bf16.mxu0 0
      %542 = vmatmul.mubr.bf16.gmra.mrb[0].mxu0 %v504
      %v543 = vpop.f32.mrb[0].mxu0
      %v544 = vadd.f32 0.0, %v543
      %v545 = vpop.f32.mrb[0].mxu0
      %v546 = vadd.f32 0.0, %v545
      %v547 = vpop.f32.mrb[0].mxu0
      %v548 = vadd.f32 0.0, %v547
      %v549 = vpop.f32.mrb[0].mxu0
      %v550 = vadd.f32 0.0, %v549
      %551 = vmatprep.mubr.bf16.mxu0 0
      %552 = vmatmul.mubr.bf16.gmra.mrb[0].mxu0 %v507
      %v553 = vpop.f32.mrb[0].mxu0
      %v554 = vadd.f32 0.0, %v553
      %v555 = vpop.f32.mrb[0].mxu0
      %v556 = vadd.f32 0.0, %v555
      %v557 = vpop.f32.mrb[0].mxu0
      %v558 = vadd.f32 0.0, %v557
      %v559 = vpop.f32.mrb[0].mxu0
      %v560 = vadd.f32 0.0, %v559
      %561 = vdwg.mxu0
      %v562 = vpack.c.bf16 %v394, %v392
      %v563 = vpack.c.bf16 %v395, %v393
      %v564 = vpack.c.bf16 %v398, %v396
      %v565 = vpack.c.bf16 %v399, %v397
      %v566 = vpack.c.bf16 %v402, %v400
      %v567 = vpack.c.bf16 %v403, %v401
      %v568 = vpack.c.bf16 %v406, %v404
      %v569 = vpack.c.bf16 %v407, %v405
      %570 = vmatprep.subr.bf16.mxu0 %v563
      %571 = vmatpush1.bf16.msra.mxu0 %v562
      %572 = vmatprep.subr.bf16.mxu0 %v565
      %573 = vmatpush1.bf16.msra.mxu0 %v564
      %574 = vmatprep.subr.bf16.mxu0 %v567
      %575 = vmatpush1.bf16.msra.mxu0 %v566
      %576 = vmatprep.subr.bf16.mxu0 %v569
      %577 = vmatpush1.bf16.msra.mxu0 %v568
      %578 = vmatprep.subr.bf16.mxu0 0
      %579 = vmatpush1.bf16.msra.mxu0 0
      %580 = vmatprep.subr.bf16.mxu0 0
      %581 = vmatpush1.bf16.msra.mxu0 0
      %582 = vmatprep.subr.bf16.mxu0 0
      %583 = vmatpush1.bf16.msra.mxu0 0
      %584 = vmatprep.subr.bf16.mxu0 0
      %585 = vmatpush1.bf16.msra.mxu0 0
      %586 = vmatprep.subr.bf16.mxu0 0
      %587 = vmatpush1.bf16.msra.mxu0 0
      %588 = vmatprep.subr.bf16.mxu0 0
      %589 = vmatpush1.bf16.msra.mxu0 0
      %590 = vmatprep.subr.bf16.mxu0 0
      %591 = vmatpush1.bf16.msra.mxu0 0
      %592 = vmatprep.subr.bf16.mxu0 0
      %593 = vmatpush1.bf16.msra.mxu0 0
      %594 = vmatprep.subr.bf16.mxu0 0
      %595 = vmatpush1.bf16.msra.mxu0 0
      %596 = vmatprep.subr.bf16.mxu0 0
      %597 = vmatpush1.bf16.msra.mxu0 0
      %598 = vmatprep.subr.bf16.mxu0 0
      %599 = vmatpush1.bf16.msra.mxu0 0
      %600 = vmatprep.subr.bf16.mxu0 0
      %601 = vmatpush1.bf16.msra.mxu0 0
      %602 = vmatprep.mubr.bf16.mxu0 0
      %603 = vmatmul.mubr.bf16.gmra.mrb[0].mxu0 %v504
      %v604 = vpop.f32.mrb[0].mxu0
      %v605 = vadd.f32 0.0, %v604
      %v606 = vpop.f32.mrb[0].mxu0
      %v607 = vadd.f32 0.0, %v606
      %v608 = vpop.f32.mrb[0].mxu0
      %v609 = vadd.f32 0.0, %v608
      %v610 = vpop.f32.mrb[0].mxu0
      %v611 = vadd.f32 0.0, %v610
      %612 = vmatprep.mubr.bf16.mxu0 0
      %613 = vmatmul.mubr.bf16.gmra.mrb[0].mxu0 %v507
      %v614 = vpop.f32.mrb[0].mxu0
      %v615 = vadd.f32 0.0, %v614
      %v616 = vpop.f32.mrb[0].mxu0
      %v617 = vadd.f32 0.0, %v616
      %v618 = vpop.f32.mrb[0].mxu0
      %v619 = vadd.f32 0.0, %v618
      %v620 = vpop.f32.mrb[0].mxu0
      %v621 = vadd.f32 0.0, %v620
      %622 = vdwg.mxu0
      %v623 = vmax.f32 %v544, %v605
      %v624 = vmax.f32 %v546, %v607
      %v625 = vmax.f32 %v548, %v609
      %v626 = vmax.f32 %v550, %v611
      %v627 = vmax.f32 %v554, %v615
      %v628 = vmax.f32 %v556, %v617
      %v629 = vmax.f32 %v558, %v619
      %v630 = vmax.f32 %v560, %v621
      %v631 = vpack.c.bf16 %v410, %v408
      %v632 = vpack.c.bf16 %v411, %v409
      %v633 = vpack.c.bf16 %v414, %v412
      %v634 = vpack.c.bf16 %v415, %v413
      %v635 = vpack.c.bf16 %v418, %v416
      %v636 = vpack.c.bf16 %v419, %v417
      %v637 = vpack.c.bf16 %v422, %v420
      %v638 = vpack.c.bf16 %v423, %v421
      %639 = vmatprep.subr.bf16.mxu0 %v632
      %640 = vmatpush1.bf16.msra.mxu0 %v631
      %641 = vmatprep.subr.bf16.mxu0 %v634
      %642 = vmatpush1.bf16.msra.mxu0 %v633
      %643 = vmatprep.subr.bf16.mxu0 %v636
      %644 = vmatpush1.bf16.msra.mxu0 %v635
      %645 = vmatprep.subr.bf16.mxu0 %v638
      %646 = vmatpush1.bf16.msra.mxu0 %v637
      %647 = vmatprep.subr.bf16.mxu0 0
      %648 = vmatpush1.bf16.msra.mxu0 0
      %649 = vmatprep.subr.bf16.mxu0 0
      %650 = vmatpush1.bf16.msra.mxu0 0
      %651 = vmatprep.subr.bf16.mxu0 0
      %652 = vmatpush1.bf16.msra.mxu0 0
      %653 = vmatprep.subr.bf16.mxu0 0
      %654 = vmatpush1.bf16.msra.mxu0 0
      %655 = vmatprep.subr.bf16.mxu0 0
      %656 = vmatpush1.bf16.msra.mxu0 0
      %657 = vmatprep.subr.bf16.mxu0 0
      %658 = vmatpush1.bf16.msra.mxu0 0
      %659 = vmatprep.subr.bf16.mxu0 0
      %660 = vmatpush1.bf16.msra.mxu0 0
      %661 = vmatprep.subr.bf16.mxu0 0
      %662 = vmatpush1.bf16.msra.mxu0 0
      %663 = vmatprep.subr.bf16.mxu0 0
      %664 = vmatpush1.bf16.msra.mxu0 0
      %665 = vmatprep.subr.bf16.mxu0 0
      %666 = vmatpush1.bf16.msra.mxu0 0
      %667 = vmatprep.subr.bf16.mxu0 0
      %668 = vmatpush1.bf16.msra.mxu0 0
      %669 = vmatprep.subr.bf16.mxu0 0
      %670 = vmatpush1.bf16.msra.mxu0 0
      %671 = vmatprep.mubr.bf16.mxu0 0
      %672 = vmatmul.mubr.bf16.gmra.mrb[0].mxu0 %v504
      %v673 = vpop.f32.mrb[0].mxu0
      %v674 = vadd.f32 0.0, %v673
      %v675 = vpop.f32.mrb[0].mxu0
      %v676 = vadd.f32 0.0, %v675
      %v677 = vpop.f32.mrb[0].mxu0
      %v678 = vadd.f32 0.0, %v677
      %v679 = vpop.f32.mrb[0].mxu0
      %v680 = vadd.f32 0.0, %v679
      %681 = vmatprep.mubr.bf16.mxu0 0
      %682 = vmatmul.mubr.bf16.gmra.mrb[0].mxu0 %v507
      %v683 = vpop.f32.mrb[0].mxu0
      %v684 = vadd.f32 0.0, %v683
      %v685 = vpop.f32.mrb[0].mxu0
      %v686 = vadd.f32 0.0, %v685
      %v687 = vpop.f32.mrb[0].mxu0
      %v688 = vadd.f32 0.0, %v687
      %v689 = vpop.f32.mrb[0].mxu0
      %v690 = vadd.f32 0.0, %v689
      %691 = vdwg.mxu0
      %v692 = vmax.f32 %v623, %v674
      %v693 = vmax.f32 %v624, %v676
      %v694 = vmax.f32 %v625, %v678
      %v695 = vmax.f32 %v626, %v680
      %v696 = vmax.f32 %v627, %v684
      %v697 = vmax.f32 %v628, %v686
      %v698 = vmax.f32 %v629, %v688
      %v699 = vmax.f32 %v630, %v690
      %v700 = vpack.c.bf16 %v426, %v424
      %v701 = vpack.c.bf16 %v427, %v425
      %v702 = vpack.c.bf16 %v430, %v428
      %v703 = vpack.c.bf16 %v431, %v429
      %v704 = vpack.c.bf16 %v434, %v432
      %v705 = vpack.c.bf16 %v435, %v433
      %v706 = vpack.c.bf16 %v438, %v436
      %v707 = vpack.c.bf16 %v439, %v437
      %708 = vmatprep.subr.bf16.mxu0 %v701
      %709 = vmatpush1.bf16.msra.mxu0 %v700
      %710 = vmatprep.subr.bf16.mxu0 %v703
      %711 = vmatpush1.bf16.msra.mxu0 %v702
      %712 = vmatprep.subr.bf16.mxu0 %v705
      %713 = vmatpush1.bf16.msra.mxu0 %v704
      %714 = vmatprep.subr.bf16.mxu0 %v707
      %715 = vmatpush1.bf16.msra.mxu0 %v706
      %716 = vmatprep.subr.bf16.mxu0 0
      %717 = vmatpush1.bf16.msra.mxu0 0
      %718 = vmatprep.subr.bf16.mxu0 0
      %719 = vmatpush1.bf16.msra.mxu0 0
      %720 = vmatprep.subr.bf16.mxu0 0
      %721 = vmatpush1.bf16.msra.mxu0 0
      %722 = vmatprep.subr.bf16.mxu0 0
      %723 = vmatpush1.bf16.msra.mxu0 0
      %724 = vmatprep.subr.bf16.mxu0 0
      %725 = vmatpush1.bf16.msra.mxu0 0
      %726 = vmatprep.subr.bf16.mxu0 0
      %727 = vmatpush1.bf16.msra.mxu0 0
      %728 = vmatprep.subr.bf16.mxu0 0
      %729 = vmatpush1.bf16.msra.mxu0 0
      %730 = vmatprep.subr.bf16.mxu0 0
      %731 = vmatpush1.bf16.msra.mxu0 0
      %732 = vmatprep.subr.bf16.mxu0 0
      %733 = vmatpush1.bf16.msra.mxu0 0
      %734 = vmatprep.subr.bf16.mxu0 0
      %735 = vmatpush1.bf16.msra.mxu0 0
      %736 = vmatprep.subr.bf16.mxu0 0
      %737 = vmatpush1.bf16.msra.mxu0 0
      %738 = vmatprep.subr.bf16.mxu0 0
      %739 = vmatpush1.bf16.msra.mxu0 0
      %740 = vmatprep.mubr.bf16.mxu0 0
      %741 = vmatmul.mubr.bf16.gmra.mrb[0].mxu0 %v504
      %v742 = vpop.f32.mrb[0].mxu0
      %v743 = vadd.f32 0.0, %v742
      %v744 = vpop.f32.mrb[0].mxu0
      %v745 = vadd.f32 0.0, %v744
      %v746 = vpop.f32.mrb[0].mxu0
      %v747 = vadd.f32 0.0, %v746
      %v748 = vpop.f32.mrb[0].mxu0
      %v749 = vadd.f32 0.0, %v748
      %750 = vmatprep.mubr.bf16.mxu0 0
      %751 = vmatmul.mubr.bf16.gmra.mrb[0].mxu0 %v507
      %v752 = vpop.f32.mrb[0].mxu0
      %v753 = vadd.f32 0.0, %v752
      %v754 = vpop.f32.mrb[0].mxu0
      %v755 = vadd.f32 0.0, %v754
      %v756 = vpop.f32.mrb[0].mxu0
      %v757 = vadd.f32 0.0, %v756
      %v758 = vpop.f32.mrb[0].mxu0
      %v759 = vadd.f32 0.0, %v758
      %760 = vdwg.mxu0
      %v761 = vmax.f32 %v692, %v743
      %v762 = vmax.f32 %v693, %v745
      %v763 = vmax.f32 %v694, %v747
      %v764 = vmax.f32 %v695, %v749
      %v765 = vmax.f32 %v696, %v753
      %v766 = vmax.f32 %v697, %v755
      %v767 = vmax.f32 %v698, %v757
      %v768 = vmax.f32 %v699, %v759
      %v769 = vld [vmem:[%s3] sm:$0xff]
      %v770 = vld [vmem:[%s3 + $0x8] sm:$0xff]
      %v771 = vld [vmem:[%s3 + $0x10] sm:$0xff]
      %v772 = vld [vmem:[%s3 + $0x18] sm:$0xff]
      %774 = vset.pattern.permute.xlu0 0
      %775 = vperm.xlu0 %774, %v769
      %v776 = vpop.permute.xlu0 %775
      %779 = vset.pattern.permute.xlu0 0
      %780 = vperm.xlu0 %779, %v770
      %v781 = vpop.permute.xlu0 %780
      %784 = vset.pattern.permute.xlu0 0
      %785 = vperm.xlu0 %784, %v771
      %v786 = vpop.permute.xlu0 %785
      %789 = vset.pattern.permute.xlu0 0
      %790 = vperm.xlu0 %789, %v772
      %v791 = vpop.permute.xlu0 %790
      %v793 = vadd.f32 %v761, %v776
      %v794 = vadd.f32 %v762, %v776
      %v795 = vadd.f32 %v763, %v781
      %v796 = vadd.f32 %v764, %v781
      %v797 = vadd.f32 %v765, %v786
      %v798 = vadd.f32 %v766, %v786
      %v799 = vadd.f32 %v767, %v791
      %v800 = vadd.f32 %v768, %v791
      %v801 = vld [vmem:[%s4] sm:$0xff]
      %v802 = vld [vmem:[%s4 + $0x8] sm:$0xff]
      %v803 = vld [vmem:[%s4 + $0x10] sm:$0xff]
      %v804 = vld [vmem:[%s4 + $0x18] sm:$0xff]
      %v805 = vld [vmem:[%s4 + $0x20] sm:$0xff]
      %v806 = vld [vmem:[%s4 + $0x28] sm:$0xff]
      %v807 = vld [vmem:[%s4 + $0x30] sm:$0xff]
      %v808 = vld [vmem:[%s4 + $0x38] sm:$0xff]
      %v809 = vpack.c.bf16 %v802, %v801
      %v810 = vpack.c.bf16 %v804, %v803
      %v811 = vpack.c.bf16 %v806, %v805
      %v812 = vpack.c.bf16 %v808, %v807
      %v813 = vpack.c.bf16 %v795, %v793
      %v814 = vpack.c.bf16 %v796, %v794
      %v815 = vpack.c.bf16 %v799, %v797
      %v816 = vpack.c.bf16 %v800, %v798
      %vm817 = vcmask 261120
      %v819 = vsel %vm817, %v809, 0
      %v822 = vsel %vm817, %v810, 0
      %v825 = vsel %vm817, %v811, 0
      %v828 = vsel %vm817, %v812, 0
      %830 = vmatprep.subr.bf16.mxu0 %v814
      %831 = vmatpush1.bf16.msra.mxu0 %v813
      %832 = vmatprep.subr.bf16.mxu0 %v816
      %833 = vmatpush1.bf16.msra.mxu0 %v815
      %834 = vmatprep.subr.bf16.mxu0 0
      %835 = vmatpush1.bf16.msra.mxu0 0
      %836 = vmatprep.subr.bf16.mxu0 0
      %837 = vmatpush1.bf16.msra.mxu0 0
      %838 = vmatprep.subr.bf16.mxu0 0
      %839 = vmatpush1.bf16.msra.mxu0 0
      %840 = vmatprep.subr.bf16.mxu0 0
      %841 = vmatpush1.bf16.msra.mxu0 0
      %842 = vmatprep.subr.bf16.mxu0 0
      %843 = vmatpush1.bf16.msra.mxu0 0
      %844 = vmatprep.subr.bf16.mxu0 0
      %845 = vmatpush1.bf16.msra.mxu0 0
      %846 = vmatprep.subr.bf16.mxu0 0
      %847 = vmatpush1.bf16.msra.mxu0 0
      %848 = vmatprep.subr.bf16.mxu0 0
      %849 = vmatpush1.bf16.msra.mxu0 0
      %850 = vmatprep.subr.bf16.mxu0 0
      %851 = vmatpush1.bf16.msra.mxu0 0
      %852 = vmatprep.subr.bf16.mxu0 0
      %853 = vmatpush1.bf16.msra.mxu0 0
      %854 = vmatprep.subr.bf16.mxu0 0
      %855 = vmatpush1.bf16.msra.mxu0 0
      %856 = vmatprep.subr.bf16.mxu0 0
      %857 = vmatpush1.bf16.msra.mxu0 0
      %858 = vmatprep.subr.bf16.mxu0 0
      %859 = vmatpush1.bf16.msra.mxu0 0
      %860 = vmatprep.subr.bf16.mxu0 0
      %861 = vmatpush1.bf16.msra.mxu0 0
      %862 = vmatprep.mubr.bf16.mxu0 0
      %863 = vmatmul.mubr.bf16.gmra.mrb[0].mxu0 %v819
      %v864 = vpop.f32.mrb[0].mxu0
      %v865 = vadd.f32 0.0, %v864
      %v866 = vpop.f32.mrb[0].mxu0
      %v867 = vadd.f32 0.0, %v866
      %v868 = vpop.f32.mrb[0].mxu0
      %v869 = vadd.f32 0.0, %v868
      %v870 = vpop.f32.mrb[0].mxu0
      %v871 = vadd.f32 0.0, %v870
      %872 = vmatprep.mubr.bf16.mxu0 0
      %873 = vmatmul.mubr.bf16.gmra.mrb[0].mxu0 %v822
      %v874 = vpop.f32.mrb[0].mxu0
      %v875 = vadd.f32 0.0, %v874
      %v876 = vpop.f32.mrb[0].mxu0
      %v877 = vadd.f32 0.0, %v876
      %v878 = vpop.f32.mrb[0].mxu0
      %v879 = vadd.f32 0.0, %v878
      %v880 = vpop.f32.mrb[0].mxu0
      %v881 = vadd.f32 0.0, %v880
      %882 = vmatprep.mubr.bf16.mxu0 0
      %883 = vmatmul.mubr.bf16.gmra.mrb[0].mxu0 %v825
      %v884 = vpop.f32.mrb[0].mxu0
      %v885 = vadd.f32 0.0, %v884
      %v886 = vpop.f32.mrb[0].mxu0
      %v887 = vadd.f32 0.0, %v886
      %v888 = vpop.f32.mrb[0].mxu0
      %v889 = vadd.f32 0.0, %v888
      %v890 = vpop.f32.mrb[0].mxu0
      %v891 = vadd.f32 0.0, %v890
      %892 = vmatprep.mubr.bf16.mxu0 0
      %893 = vmatmul.mubr.bf16.gmra.mrb[0].mxu0 %v828
      %v894 = vpop.f32.mrb[0].mxu0
      %v895 = vadd.f32 0.0, %v894
      %v896 = vpop.f32.mrb[0].mxu0
      %v897 = vadd.f32 0.0, %v896
      %v898 = vpop.f32.mrb[0].mxu0
      %v899 = vadd.f32 0.0, %v898
      %v900 = vpop.f32.mrb[0].mxu0
      %v901 = vadd.f32 0.0, %v900
      %902 = vdwg.mxu0
      %v903 = vpack.c.bf16 %v448, %v442
      %v904 = vpack.c.bf16 %v451, %v445
      %v905 = vpack.c.bf16 %v460, %v454
      %v906 = vpack.c.bf16 %v463, %v457
      %v907 = vpack.c.bf16 %v472, %v466
      %v908 = vpack.c.bf16 %v475, %v469
      %v909 = vpack.c.bf16 %v484, %v478
      %v910 = vpack.c.bf16 %v487, %v481
      %v911 = vpack.c.bf16 %v320, %v312
      %v912 = vpack.c.bf16 %v321, %v313
      %v913 = vpack.c.bf16 %v322, %v314
      %v914 = vpack.c.bf16 %v323, %v315
      %v915 = vpack.c.bf16 %v324, %v316
      %v916 = vpack.c.bf16 %v325, %v317
      %v917 = vpack.c.bf16 %v326, %v318
      %v918 = vpack.c.bf16 %v327, %v319
      %v919 = vpack.c.bf16 %v336, %v328
      %v920 = vpack.c.bf16 %v337, %v329
      %v921 = vpack.c.bf16 %v338, %v330
      %v922 = vpack.c.bf16 %v339, %v331
      %v923 = vpack.c.bf16 %v340, %v332
      %v924 = vpack.c.bf16 %v341, %v333
      %v925 = vpack.c.bf16 %v342, %v334
      %v926 = vpack.c.bf16 %v343, %v335
      %v927 = vpack.c.bf16 %v352, %v344
      %v928 = vpack.c.bf16 %v353, %v345
      %v929 = vpack.c.bf16 %v354, %v346
      %v930 = vpack.c.bf16 %v355, %v347
      %v931 = vpack.c.bf16 %v356, %v348
      %v932 = vpack.c.bf16 %v357, %v349
      %v933 = vpack.c.bf16 %v358, %v350
      %v934 = vpack.c.bf16 %v359, %v351
      %v935 = vpack.c.bf16 %v368, %v360
      %v936 = vpack.c.bf16 %v369, %v361
      %v937 = vpack.c.bf16 %v370, %v362
      %v938 = vpack.c.bf16 %v371, %v363
      %v939 = vpack.c.bf16 %v372, %v364
      %v940 = vpack.c.bf16 %v373, %v365
      %v941 = vpack.c.bf16 %v374, %v366
      %v942 = vpack.c.bf16 %v375, %v367
      %943 = vxpose.xlu0.c.b16.start [1/8] %v903, 128
      %944 = vxpose.xlu0.c.b16.cont [2/8] %v905, 128
      %945 = vxpose.xlu0.c.b16.cont [3/8] %v907, 128
      %946 = vxpose.xlu0.c.b16.cont [4/8] %v909, 128
      %947 = vxpose.xlu0.c.b16.cont [5/8] 0, 128
      %948 = vxpose.xlu0.c.b16.cont [6/8] 0, 128
      %949 = vxpose.xlu0.c.b16.cont [7/8] 0, 128
      %950 = vxpose.xlu0.c.b16.end [8/8] 0, 128
      %v951 = vpop.trf.xlu0
      %v952 = vpop.trf.xlu0
      %v953 = vpop.trf.xlu0
      %v954 = vpop.trf.xlu0
      %v955 = vpop.trf.xlu0
      %v956 = vpop.trf.xlu0
      %v957 = vpop.trf.xlu0
      %v958 = vpop.trf.xlu0
      %959 = vxpose.xlu0.c.b16.start [1/8] %v904, 128
      %960 = vxpose.xlu0.c.b16.cont [2/8] %v906, 128
      %961 = vxpose.xlu0.c.b16.cont [3/8] %v908, 128
      %962 = vxpose.xlu0.c.b16.cont [4/8] %v910, 128
      %963 = vxpose.xlu0.c.b16.cont [5/8] 0, 128
      %964 = vxpose.xlu0.c.b16.cont [6/8] 0, 128
      %965 = vxpose.xlu0.c.b16.cont [7/8] 0, 128
      %966 = vxpose.xlu0.c.b16.end [8/8] 0, 128
      %v967 = vpop.trf.xlu0
      %v968 = vpop.trf.xlu0
      %v969 = vpop.trf.xlu0
      %v970 = vpop.trf.xlu0
      %v971 = vpop.trf.xlu0
      %v972 = vpop.trf.xlu0
      %v973 = vpop.trf.xlu0
      %v974 = vpop.trf.xlu0
      %v976 = vsel %vm502, %v951, 0
      %v979 = vsel %vm502, %v952, 0
      %v982 = vsel %vm502, %v953, 0
      %v985 = vsel %vm502, %v954, 0
      %v988 = vsel %vm502, %v955, 0
      %v991 = vsel %vm502, %v956, 0
      %v994 = vsel %vm502, %v957, 0
      %v997 = vsel %vm502, %v958, 0
      %v1000 = vsel %vm502, %v967, 0
      %v1003 = vsel %vm502, %v968, 0
      %v1006 = vsel %vm502, %v969, 0
      %v1009 = vsel %vm502, %v970, 0
      %v1012 = vsel %vm502, %v971, 0
      %v1015 = vsel %vm502, %v972, 0
      %v1018 = vsel %vm502, %v973, 0
      %v1021 = vsel %vm502, %v974, 0
      %1023 = vmatprep.subr.bf16.mxu0 %v912
      %1024 = vmatpush1.bf16.msra.mxu0 %v911
      %1025 = vmatprep.subr.bf16.mxu0 %v920
      %1026 = vmatpush1.bf16.msra.mxu0 %v919
      %1027 = vmatprep.subr.bf16.mxu0 %v928
      %1028 = vmatpush1.bf16.msra.mxu0 %v927
      %1029 = vmatprep.subr.bf16.mxu0 %v936
      %1030 = vmatpush1.bf16.msra.mxu0 %v935
      %1031 = vmatprep.subr.bf16.mxu0 0
      %1032 = vmatpush1.bf16.msra.mxu0 0
      %1033 = vmatprep.subr.bf16.mxu0 0
      %1034 = vmatpush1.bf16.msra.mxu0 0
      %1035 = vmatprep.subr.bf16.mxu0 0
      %1036 = vmatpush1.bf16.msra.mxu0 0
      %1037 = vmatprep.subr.bf16.mxu0 0
      %1038 = vmatpush1.bf16.msra.mxu0 0
      %1039 = vmatprep.subr.bf16.mxu0 0
      %1040 = vmatpush1.bf16.msra.mxu0 0
      %1041 = vmatprep.subr.bf16.mxu0 0
      %1042 = vmatpush1.bf16.msra.mxu0 0
      %1043 = vmatprep.subr.bf16.mxu0 0
      %1044 = vmatpush1.bf16.msra.mxu0 0
      %1045 = vmatprep.subr.bf16.mxu0 0
      %1046 = vmatpush1.bf16.msra.mxu0 0
      %1047 = vmatprep.subr.bf16.mxu0 0
      %1048 = vmatpush1.bf16.msra.mxu0 0
      %1049 = vmatprep.subr.bf16.mxu0 0
      %1050 = vmatpush1.bf16.msra.mxu0 0
      %1051 = vmatprep.subr.bf16.mxu0 0
      %1052 = vmatpush1.bf16.msra.mxu0 0
      %1053 = vmatprep.subr.bf16.mxu0 0
      %1054 = vmatpush1.bf16.msra.mxu0 0
      %1055 = vmatprep.mubr.bf16.mxu0 0
      %1056 = vmatmul.mubr.bf16.gmra.mrb[0].mxu0 %v976
      %v1057 = vpop.f32.mrb[0].mxu0
      %v1058 = vadd.f32 0.0, %v1057
      %v1059 = vpop.f32.mrb[0].mxu0
      %v1060 = vadd.f32 0.0, %v1059
      %v1061 = vpop.f32.mrb[0].mxu0
      %v1062 = vadd.f32 0.0, %v1061
      %v1063 = vpop.f32.mrb[0].mxu0
      %v1064 = vadd.f32 0.0, %v1063
      %1065 = vmatprep.mubr.bf16.mxu0 0
      %1066 = vmatmul.mubr.bf16.gmra.mrb[0].mxu0 %v979
      %v1067 = vpop.f32.mrb[0].mxu0
      %v1068 = vadd.f32 0.0, %v1067
      %v1069 = vpop.f32.mrb[0].mxu0
      %v1070 = vadd.f32 0.0, %v1069
      %v1071 = vpop.f32.mrb[0].mxu0
      %v1072 = vadd.f32 0.0, %v1071
      %v1073 = vpop.f32.mrb[0].mxu0
      %v1074 = vadd.f32 0.0, %v1073
      %1075 = vmatprep.mubr.bf16.mxu0 0
      %1076 = vmatmul.mubr.bf16.gmra.mrb[0].mxu0 %v982
      %v1077 = vpop.f32.mrb[0].mxu0
      %v1078 = vadd.f32 0.0, %v1077
      %v1079 = vpop.f32.mrb[0].mxu0
      %v1080 = vadd.f32 0.0, %v1079
      %v1081 = vpop.f32.mrb[0].mxu0
      %v1082 = vadd.f32 0.0, %v1081
      %v1083 = vpop.f32.mrb[0].mxu0
      %v1084 = vadd.f32 0.0, %v1083
      %1085 = vmatprep.mubr.bf16.mxu0 0
      %1086 = vmatmul.mubr.bf16.gmra.mrb[0].mxu0 %v985
      %v1087 = vpop.f32.mrb[0].mxu0
      %v1088 = vadd.f32 0.0, %v1087
      %v1089 = vpop.f32.mrb[0].mxu0
      %v1090 = vadd.f32 0.0, %v1089
      %v1091 = vpop.f32.mrb[0].mxu0
      %v1092 = vadd.f32 0.0, %v1091
      %v1093 = vpop.f32.mrb[0].mxu0
      %v1094 = vadd.f32 0.0, %v1093
      %1095 = vmatprep.mubr.bf16.mxu0 0
      %1096 = vmatmul.mubr.bf16.gmra.mrb[0].mxu0 %v988
      %v1097 = vpop.f32.mrb[0].mxu0
      %v1098 = vadd.f32 0.0, %v1097
      %v1099 = vpop.f32.mrb[0].mxu0
      %v1100 = vadd.f32 0.0, %v1099
      %v1101 = vpop.f32.mrb[0].mxu0
      %v1102 = vadd.f32 0.0, %v1101
      %v1103 = vpop.f32.mrb[0].mxu0
      %v1104 = vadd.f32 0.0, %v1103
      %1105 = vmatprep.mubr.bf16.mxu0 0
      %1106 = vmatmul.mubr.bf16.gmra.mrb[0].mxu0 %v991
      %v1107 = vpop.f32.mrb[0].mxu0
      %v1108 = vadd.f32 0.0, %v1107
      %v1109 = vpop.f32.mrb[0].mxu0
      %v1110 = vadd.f32 0.0, %v1109
      %v1111 = vpop.f32.mrb[0].mxu0
      %v1112 = vadd.f32 0.0, %v1111
      %v1113 = vpop.f32.mrb[0].mxu0
      %v1114 = vadd.f32 0.0, %v1113
      %1115 = vmatprep.mubr.bf16.mxu0 0
      %1116 = vmatmul.mubr.bf16.gmra.mrb[0].mxu0 %v994
      %v1117 = vpop.f32.mrb[0].mxu0
      %v1118 = vadd.f32 0.0, %v1117
      %v1119 = vpop.f32.mrb[0].mxu0
      %v1120 = vadd.f32 0.0, %v1119
      %v1121 = vpop.f32.mrb[0].mxu0
      %v1122 = vadd.f32 0.0, %v1121
      %v1123 = vpop.f32.mrb[0].mxu0
      %v1124 = vadd.f32 0.0, %v1123
      %1125 = vmatprep.mubr.bf16.mxu0 0
      %1126 = vmatmul.mubr.bf16.gmra.mrb[0].mxu0 %v997
      %v1127 = vpop.f32.mrb[0].mxu0
      %v1128 = vadd.f32 0.0, %v1127
      %v1129 = vpop.f32.mrb[0].mxu0
      %v1130 = vadd.f32 0.0, %v1129
      %v1131 = vpop.f32.mrb[0].mxu0
      %v1132 = vadd.f32 0.0, %v1131
      %v1133 = vpop.f32.mrb[0].mxu0
      %v1134 = vadd.f32 0.0, %v1133
      %1135 = vmatprep.mubr.bf16.mxu0 0
      %1136 = vmatmul.mubr.bf16.gmra.mrb[0].mxu0 %v1000
      %v1137 = vpop.f32.mrb[0].mxu0
      %v1138 = vadd.f32 0.0, %v1137
      %v1139 = vpop.f32.mrb[0].mxu0
      %v1140 = vadd.f32 0.0, %v1139
      %v1141 = vpop.f32.mrb[0].mxu0
      %v1142 = vadd.f32 0.0, %v1141
      %v1143 = vpop.f32.mrb[0].mxu0
      %v1144 = vadd.f32 0.0, %v1143
      %1145 = vmatprep.mubr.bf16.mxu0 0
      %1146 = vmatmul.mubr.bf16.gmra.mrb[0].mxu0 %v1003
      %v1147 = vpop.f32.mrb[0].mxu0
      %v1148 = vadd.f32 0.0, %v1147
      %v1149 = vpop.f32.mrb[0].mxu0
      %v1150 = vadd.f32 0.0, %v1149
      %v1151 = vpop.f32.mrb[0].mxu0
      %v1152 = vadd.f32 0.0, %v1151
      %v1153 = vpop.f32.mrb[0].mxu0
      %v1154 = vadd.f32 0.0, %v1153
      %1155 = vmatprep.mubr.bf16.mxu0 0
      %1156 = vmatmul.mubr.bf16.gmra.mrb[0].mxu0 %v1006
      %v1157 = vpop.f32.mrb[0].mxu0
      %v1158 = vadd.f32 0.0, %v1157
      %v1159 = vpop.f32.mrb[0].mxu0
      %v1160 = vadd.f32 0.0, %v1159
      %v1161 = vpop.f32.mrb[0].mxu0
      %v1162 = vadd.f32 0.0, %v1161
      %v1163 = vpop.f32.mrb[0].mxu0
      %v1164 = vadd.f32 0.0, %v1163
      %1165 = vmatprep.mubr.bf16.mxu0 0
      %1166 = vmatmul.mubr.bf16.gmra.mrb[0].mxu0 %v1009
      %v1167 = vpop.f32.mrb[0].mxu0
      %v1168 = vadd.f32 0.0, %v1167
      %v1169 = vpop.f32.mrb[0].mxu0
      %v1170 = vadd.f32 0.0, %v1169
      %v1171 = vpop.f32.mrb[0].mxu0
      %v1172 = vadd.f32 0.0, %v1171
      %v1173 = vpop.f32.mrb[0].mxu0
      %v1174 = vadd.f32 0.0, %v1173
      %1175 = vmatprep.mubr.bf16.mxu0 0
      %1176 = vmatmul.mubr.bf16.gmra.mrb[0].mxu0 %v1012
      %v1177 = vpop.f32.mrb[0].mxu0
      %v1178 = vadd.f32 0.0, %v1177
      %v1179 = vpop.f32.mrb[0].mxu0
      %v1180 = vadd.f32 0.0, %v1179
      %v1181 = vpop.f32.mrb[0].mxu0
      %v1182 = vadd.f32 0.0, %v1181
      %v1183 = vpop.f32.mrb[0].mxu0
      %v1184 = vadd.f32 0.0, %v1183
      %1185 = vmatprep.mubr.bf16.mxu0 0
      %1186 = vmatmul.mubr.bf16.gmra.mrb[0].mxu0 %v1015
      %v1187 = vpop.f32.mrb[0].mxu0
      %v1188 = vadd.f32 0.0, %v1187
      %v1189 = vpop.f32.mrb[0].mxu0
      %v1190 = vadd.f32 0.0, %v1189
      %v1191 = vpop.f32.mrb[0].mxu0
      %v1192 = vadd.f32 0.0, %v1191
      %v1193 = vpop.f32.mrb[0].mxu0
      %v1194 = vadd.f32 0.0, %v1193
      %1195 = vmatprep.mubr.bf16.mxu0 0
      %1196 = vmatmul.mubr.bf16.gmra.mrb[0].mxu0 %v1018
      %v1197 = vpop.f32.mrb[0].mxu0
      %v1198 = vadd.f32 0.0, %v1197
      %v1199 = vpop.f32.mrb[0].mxu0
      %v1200 = vadd.f32 0.0, %v1199
      %v1201 = vpop.f32.mrb[0].mxu0
      %v1202 = vadd.f32 0.0, %v1201
      %v1203 = vpop.f32.mrb[0].mxu0
      %v1204 = vadd.f32 0.0, %v1203
      %1205 = vmatprep.mubr.bf16.mxu0 0
      %1206 = vmatmul.mubr.bf16.gmra.mrb[0].mxu0 %v1021
      %v1207 = vpop.f32.mrb[0].mxu0
      %v1208 = vadd.f32 0.0, %v1207
      %v1209 = vpop.f32.mrb[0].mxu0
      %v1210 = vadd.f32 0.0, %v1209
      %v1211 = vpop.f32.mrb[0].mxu0
      %v1212 = vadd.f32 0.0, %v1211
      %v1213 = vpop.f32.mrb[0].mxu0
      %v1214 = vadd.f32 0.0, %v1213
      %1215 = vdwg.mxu0
      %1216 = vmatprep.subr.bf16.mxu0 %v914
      %1217 = vmatpush1.bf16.msra.mxu0 %v913
      %1218 = vmatprep.subr.bf16.mxu0 %v922
      %1219 = vmatpush1.bf16.msra.mxu0 %v921
      %1220 = vmatprep.subr.bf16.mxu0 %v930
      %1221 = vmatpush1.bf16.msra.mxu0 %v929
      %1222 = vmatprep.subr.bf16.mxu0 %v938
      %1223 = vmatpush1.bf16.msra.mxu0 %v937
      %1224 = vmatprep.subr.bf16.mxu0 0
      %1225 = vmatpush1.bf16.msra.mxu0 0
      %1226 = vmatprep.subr.bf16.mxu0 0
      %1227 = vmatpush1.bf16.msra.mxu0 0
      %1228 = vmatprep.subr.bf16.mxu0 0
      %1229 = vmatpush1.bf16.msra.mxu0 0
      %1230 = vmatprep.subr.bf16.mxu0 0
      %1231 = vmatpush1.bf16.msra.mxu0 0
      %1232 = vmatprep.subr.bf16.mxu0 0
      %1233 = vmatpush1.bf16.msra.mxu0 0
      %1234 = vmatprep.subr.bf16.mxu0 0
      %1235 = vmatpush1.bf16.msra.mxu0 0
      %1236 = vmatprep.subr.bf16.mxu0 0
      %1237 = vmatpush1.bf16.msra.mxu0 0
      %1238 = vmatprep.subr.bf16.mxu0 0
      %1239 = vmatpush1.bf16.msra.mxu0 0
      %1240 = vmatprep.subr.bf16.mxu0 0
      %1241 = vmatpush1.bf16.msra.mxu0 0
      %1242 = vmatprep.subr.bf16.mxu0 0
      %1243 = vmatpush1.bf16.msra.mxu0 0
      %1244 = vmatprep.subr.bf16.mxu0 0
      %1245 = vmatpush1.bf16.msra.mxu0 0
      %1246 = vmatprep.subr.bf16.mxu0 0
      %1247 = vmatpush1.bf16.msra.mxu0 0
      %1248 = vmatprep.mubr.bf16.mxu0 0
      %1249 = vmatmul.mubr.bf16.gmra.mrb[0].mxu0 %v976
      %v1250 = vpop.f32.mrb[0].mxu0
      %v1251 = vadd.f32 0.0, %v1250
      %v1252 = vpop.f32.mrb[0].mxu0
      %v1253 = vadd.f32 0.0, %v1252
      %v1254 = vpop.f32.mrb[0].mxu0
      %v1255 = vadd.f32 0.0, %v1254
      %v1256 = vpop.f32.mrb[0].mxu0
      %v1257 = vadd.f32 0.0, %v1256
      %1258 = vmatprep.mubr.bf16.mxu0 0
      %1259 = vmatmul.mubr.bf16.gmra.mrb[0].mxu0 %v979
      %v1260 = vpop.f32.mrb[0].mxu0
      %v1261 = vadd.f32 0.0, %v1260
      %v1262 = vpop.f32.mrb[0].mxu0
      %v1263 = vadd.f32 0.0, %v1262
      %v1264 = vpop.f32.mrb[0].mxu0
      %v1265 = vadd.f32 0.0, %v1264
      %v1266 = vpop.f32.mrb[0].mxu0
      %v1267 = vadd.f32 0.0, %v1266
      %1268 = vmatprep.mubr.bf16.mxu0 0
      %1269 = vmatmul.mubr.bf16.gmra.mrb[0].mxu0 %v982
      %v1270 = vpop.f32.mrb[0].mxu0
      %v1271 = vadd.f32 0.0, %v1270
      %v1272 = vpop.f32.mrb[0].mxu0
      %v1273 = vadd.f32 0.0, %v1272
      %v1274 = vpop.f32.mrb[0].mxu0
      %v1275 = vadd.f32 0.0, %v1274
      %v1276 = vpop.f32.mrb[0].mxu0
      %v1277 = vadd.f32 0.0, %v1276
      %1278 = vmatprep.mubr.bf16.mxu0 0
      %1279 = vmatmul.mubr.bf16.gmra.mrb[0].mxu0 %v985
      %v1280 = vpop.f32.mrb[0].mxu0
      %v1281 = vadd.f32 0.0, %v1280
      %v1282 = vpop.f32.mrb[0].mxu0
      %v1283 = vadd.f32 0.0, %v1282
      %v1284 = vpop.f32.mrb[0].mxu0
      %v1285 = vadd.f32 0.0, %v1284
      %v1286 = vpop.f32.mrb[0].mxu0
      %v1287 = vadd.f32 0.0, %v1286
      %1288 = vmatprep.mubr.bf16.mxu0 0
      %1289 = vmatmul.mubr.bf16.gmra.mrb[0].mxu0 %v988
      %v1290 = vpop.f32.mrb[0].mxu0
      %v1291 = vadd.f32 0.0, %v1290
      %v1292 = vpop.f32.mrb[0].mxu0
      %v1293 = vadd.f32 0.0, %v1292
      %v1294 = vpop.f32.mrb[0].mxu0
      %v1295 = vadd.f32 0.0, %v1294
      %v1296 = vpop.f32.mrb[0].mxu0
      %v1297 = vadd.f32 0.0, %v1296
      %1298 = vmatprep.mubr.bf16.mxu0 0
      %1299 = vmatmul.mubr.bf16.gmra.mrb[0].mxu0 %v991
      %v1300 = vpop.f32.mrb[0].mxu0
      %v1301 = vadd.f32 0.0, %v1300
      %v1302 = vpop.f32.mrb[0].mxu0
      %v1303 = vadd.f32 0.0, %v1302
      %v1304 = vpop.f32.mrb[0].mxu0
      %v1305 = vadd.f32 0.0, %v1304
      %v1306 = vpop.f32.mrb[0].mxu0
      %v1307 = vadd.f32 0.0, %v1306
      %1308 = vmatprep.mubr.bf16.mxu0 0
      %1309 = vmatmul.mubr.bf16.gmra.mrb[0].mxu0 %v994
      %v1310 = vpop.f32.mrb[0].mxu0
      %v1311 = vadd.f32 0.0, %v1310
      %v1312 = vpop.f32.mrb[0].mxu0
      %v1313 = vadd.f32 0.0, %v1312
      %v1314 = vpop.f32.mrb[0].mxu0
      %v1315 = vadd.f32 0.0, %v1314
      %v1316 = vpop.f32.mrb[0].mxu0
      %v1317 = vadd.f32 0.0, %v1316
      %1318 = vmatprep.mubr.bf16.mxu0 0
      %1319 = vmatmul.mubr.bf16.gmra.mrb[0].mxu0 %v997
      %v1320 = vpop.f32.mrb[0].mxu0
      %v1321 = vadd.f32 0.0, %v1320
      %v1322 = vpop.f32.mrb[0].mxu0
      %v1323 = vadd.f32 0.0, %v1322
      %v1324 = vpop.f32.mrb[0].mxu0
      %v1325 = vadd.f32 0.0, %v1324
      %v1326 = vpop.f32.mrb[0].mxu0
      %v1327 = vadd.f32 0.0, %v1326
      %1328 = vmatprep.mubr.bf16.mxu0 0
      %1329 = vmatmul.mubr.bf16.gmra.mrb[0].mxu0 %v1000
      %v1330 = vpop.f32.mrb[0].mxu0
      %v1331 = vadd.f32 0.0, %v1330
      %v1332 = vpop.f32.mrb[0].mxu0
      %v1333 = vadd.f32 0.0, %v1332
      %v1334 = vpop.f32.mrb[0].mxu0
      %v1335 = vadd.f32 0.0, %v1334
      %v1336 = vpop.f32.mrb[0].mxu0
      %v1337 = vadd.f32 0.0, %v1336
      %1338 = vmatprep.mubr.bf16.mxu0 0
      %1339 = vmatmul.mubr.bf16.gmra.mrb[0].mxu0 %v1003
      %v1340 = vpop.f32.mrb[0].mxu0
      %v1341 = vadd.f32 0.0, %v1340
      %v1342 = vpop.f32.mrb[0].mxu0
      %v1343 = vadd.f32 0.0, %v1342
      %v1344 = vpop.f32.mrb[0].mxu0
      %v1345 = vadd.f32 0.0, %v1344
      %v1346 = vpop.f32.mrb[0].mxu0
      %v1347 = vadd.f32 0.0, %v1346
      %1348 = vmatprep.mubr.bf16.mxu0 0
      %1349 = vmatmul.mubr.bf16.gmra.mrb[0].mxu0 %v1006
      %v1350 = vpop.f32.mrb[0].mxu0
      %v1351 = vadd.f32 0.0, %v1350
      %v1352 = vpop.f32.mrb[0].mxu0
      %v1353 = vadd.f32 0.0, %v1352
      %v1354 = vpop.f32.mrb[0].mxu0
      %v1355 = vadd.f32 0.0, %v1354
      %v1356 = vpop.f32.mrb[0].mxu0
      %v1357 = vadd.f32 0.0, %v1356
      %1358 = vmatprep.mubr.bf16.mxu0 0
      %1359 = vmatmul.mubr.bf16.gmra.mrb[0].mxu0 %v1009
      %v1360 = vpop.f32.mrb[0].mxu0
      %v1361 = vadd.f32 0.0, %v1360
      %v1362 = vpop.f32.mrb[0].mxu0
      %v1363 = vadd.f32 0.0, %v1362
      %v1364 = vpop.f32.mrb[0].mxu0
      %v1365 = vadd.f32 0.0, %v1364
      %v1366 = vpop.f32.mrb[0].mxu0
      %v1367 = vadd.f32 0.0, %v1366
      %1368 = vmatprep.mubr.bf16.mxu0 0
      %1369 = vmatmul.mubr.bf16.gmra.mrb[0].mxu0 %v1012
      %v1370 = vpop.f32.mrb[0].mxu0
      %v1371 = vadd.f32 0.0, %v1370
      %v1372 = vpop.f32.mrb[0].mxu0
      %v1373 = vadd.f32 0.0, %v1372
      %v1374 = vpop.f32.mrb[0].mxu0
      %v1375 = vadd.f32 0.0, %v1374
      %v1376 = vpop.f32.mrb[0].mxu0
      %v1377 = vadd.f32 0.0, %v1376
      %1378 = vmatprep.mubr.bf16.mxu0 0
      %1379 = vmatmul.mubr.bf16.gmra.mrb[0].mxu0 %v1015
      %v1380 = vpop.f32.mrb[0].mxu0
      %v1381 = vadd.f32 0.0, %v1380
      %v1382 = vpop.f32.mrb[0].mxu0
      %v1383 = vadd.f32 0.0, %v1382
      %v1384 = vpop.f32.mrb[0].mxu0
      %v1385 = vadd.f32 0.0, %v1384
      %v1386 = vpop.f32.mrb[0].mxu0
      %v1387 = vadd.f32 0.0, %v1386
      %1388 = vmatprep.mubr.bf16.mxu0 0
      %1389 = vmatmul.mubr.bf16.gmra.mrb[0].mxu0 %v1018
      %v1390 = vpop.f32.mrb[0].mxu0
      %v1391 = vadd.f32 0.0, %v1390
      %v1392 = vpop.f32.mrb[0].mxu0
      %v1393 = vadd.f32 0.0, %v1392
      %v1394 = vpop.f32.mrb[0].mxu0
      %v1395 = vadd.f32 0.0, %v1394
      %v1396 = vpop.f32.mrb[0].mxu0
      %v1397 = vadd.f32 0.0, %v1396
      %1398 = vmatprep.mubr.bf16.mxu0 0
      %1399 = vmatmul.mubr.bf16.gmra.mrb[0].mxu0 %v1021
      %v1400 = vpop.f32.mrb[0].mxu0
      %v1401 = vadd.f32 0.0, %v1400
      %v1402 = vpop.f32.mrb[0].mxu0
      %v1403 = vadd.f32 0.0, %v1402
      %v1404 = vpop.f32.mrb[0].mxu0
      %v1405 = vadd.f32 0.0, %v1404
      %v1406 = vpop.f32.mrb[0].mxu0
      %v1407 = vadd.f32 0.0, %v1406
      %1408 = vdwg.mxu0
      %1409 = vmatprep.subr.bf16.mxu0 %v916
      %1410 = vmatpush1.bf16.msra.mxu0 %v915
      %1411 = vmatprep.subr.bf16.mxu0 %v924
      %1412 = vmatpush1.bf16.msra.mxu0 %v923
      %1413 = vmatprep.subr.bf16.mxu0 %v932
      %1414 = vmatpush1.bf16.msra.mxu0 %v931
      %1415 = vmatprep.subr.bf16.mxu0 %v940
      %1416 = vmatpush1.bf16.msra.mxu0 %v939
      %1417 = vmatprep.subr.bf16.mxu0 0
      %1418 = vmatpush1.bf16.msra.mxu0 0
      %1419 = vmatprep.subr.bf16.mxu0 0
      %1420 = vmatpush1.bf16.msra.mxu0 0
      %1421 = vmatprep.subr.bf16.mxu0 0
      %1422 = vmatpush1.bf16.msra.mxu0 0
      %1423 = vmatprep.subr.bf16.mxu0 0
      %1424 = vmatpush1.bf16.msra.mxu0 0
      %1425 = vmatprep.subr.bf16.mxu0 0
      %1426 = vmatpush1.bf16.msra.mxu0 0
      %1427 = vmatprep.subr.bf16.mxu0 0
      %1428 = vmatpush1.bf16.msra.mxu0 0
      %1429 = vmatprep.subr.bf16.mxu0 0
      %1430 = vmatpush1.bf16.msra.mxu0 0
      %1431 = vmatprep.subr.bf16.mxu0 0
      %1432 = vmatpush1.bf16.msra.mxu0 0
      %1433 = vmatprep.subr.bf16.mxu0 0
      %1434 = vmatpush1.bf16.msra.mxu0 0
      %1435 = vmatprep.subr.bf16.mxu0 0
      %1436 = vmatpush1.bf16.msra.mxu0 0
      %1437 = vmatprep.subr.bf16.mxu0 0
      %1438 = vmatpush1.bf16.msra.mxu0 0
      %1439 = vmatprep.subr.bf16.mxu0 0
      %1440 = vmatpush1.bf16.msra.mxu0 0
      %1441 = vmatprep.mubr.bf16.mxu0 0
      %1442 = vmatmul.mubr.bf16.gmra.mrb[0].mxu0 %v976
      %v1443 = vpop.f32.mrb[0].mxu0
      %v1444 = vadd.f32 0.0, %v1443
      %v1445 = vpop.f32.mrb[0].mxu0
      %v1446 = vadd.f32 0.0, %v1445
      %v1447 = vpop.f32.mrb[0].mxu0
      %v1448 = vadd.f32 0.0, %v1447
      %v1449 = vpop.f32.mrb[0].mxu0
      %v1450 = vadd.f32 0.0, %v1449
      %1451 = vmatprep.mubr.bf16.mxu0 0
      %1452 = vmatmul.mubr.bf16.gmra.mrb[0].mxu0 %v979
      %v1453 = vpop.f32.mrb[0].mxu0
      %v1454 = vadd.f32 0.0, %v1453
      %v1455 = vpop.f32.mrb[0].mxu0
      %v1456 = vadd.f32 0.0, %v1455
      %v1457 = vpop.f32.mrb[0].mxu0
      %v1458 = vadd.f32 0.0, %v1457
      %v1459 = vpop.f32.mrb[0].mxu0
      %v1460 = vadd.f32 0.0, %v1459
      %1461 = vmatprep.mubr.bf16.mxu0 0
      %1462 = vmatmul.mubr.bf16.gmra.mrb[0].mxu0 %v982
      %v1463 = vpop.f32.mrb[0].mxu0
      %v1464 = vadd.f32 0.0, %v1463
      %v1465 = vpop.f32.mrb[0].mxu0
      %v1466 = vadd.f32 0.0, %v1465
      %v1467 = vpop.f32.mrb[0].mxu0
      %v1468 = vadd.f32 0.0, %v1467
      %v1469 = vpop.f32.mrb[0].mxu0
      %v1470 = vadd.f32 0.0, %v1469
      %1471 = vmatprep.mubr.bf16.mxu0 0
      %1472 = vmatmul.mubr.bf16.gmra.mrb[0].mxu0 %v985
      %v1473 = vpop.f32.mrb[0].mxu0
      %v1474 = vadd.f32 0.0, %v1473
      %v1475 = vpop.f32.mrb[0].mxu0
      %v1476 = vadd.f32 0.0, %v1475
      %v1477 = vpop.f32.mrb[0].mxu0
      %v1478 = vadd.f32 0.0, %v1477
      %v1479 = vpop.f32.mrb[0].mxu0
      %v1480 = vadd.f32 0.0, %v1479
      %1481 = vmatprep.mubr.bf16.mxu0 0
      %1482 = vmatmul.mubr.bf16.gmra.mrb[0].mxu0 %v988
      %v1483 = vpop.f32.mrb[0].mxu0
      %v1484 = vadd.f32 0.0, %v1483
      %v1485 = vpop.f32.mrb[0].mxu0
      %v1486 = vadd.f32 0.0, %v1485
      %v1487 = vpop.f32.mrb[0].mxu0
      %v1488 = vadd.f32 0.0, %v1487
      %v1489 = vpop.f32.mrb[0].mxu0
      %v1490 = vadd.f32 0.0, %v1489
      %1491 = vmatprep.mubr.bf16.mxu0 0
      %1492 = vmatmul.mubr.bf16.gmra.mrb[0].mxu0 %v991
      %v1493 = vpop.f32.mrb[0].mxu0
      %v1494 = vadd.f32 0.0, %v1493
      %v1495 = vpop.f32.mrb[0].mxu0
      %v1496 = vadd.f32 0.0, %v1495
      %v1497 = vpop.f32.mrb[0].mxu0
      %v1498 = vadd.f32 0.0, %v1497
      %v1499 = vpop.f32.mrb[0].mxu0
      %v1500 = vadd.f32 0.0, %v1499
      %1501 = vmatprep.mubr.bf16.mxu0 0
      %1502 = vmatmul.mubr.bf16.gmra.mrb[0].mxu0 %v994
      %v1503 = vpop.f32.mrb[0].mxu0
      %v1504 = vadd.f32 0.0, %v1503
      %v1505 = vpop.f32.mrb[0].mxu0
      %v1506 = vadd.f32 0.0, %v1505
      %v1507 = vpop.f32.mrb[0].mxu0
      %v1508 = vadd.f32 0.0, %v1507
      %v1509 = vpop.f32.mrb[0].mxu0
      %v1510 = vadd.f32 0.0, %v1509
      %1511 = vmatprep.mubr.bf16.mxu0 0
      %1512 = vmatmul.mubr.bf16.gmra.mrb[0].mxu0 %v997
      %v1513 = vpop.f32.mrb[0].mxu0
      %v1514 = vadd.f32 0.0, %v1513
      %v1515 = vpop.f32.mrb[0].mxu0
      %v1516 = vadd.f32 0.0, %v1515
      %v1517 = vpop.f32.mrb[0].mxu0
      %v1518 = vadd.f32 0.0, %v1517
      %v1519 = vpop.f32.mrb[0].mxu0
      %v1520 = vadd.f32 0.0, %v1519
      %1521 = vmatprep.mubr.bf16.mxu0 0
      %1522 = vmatmul.mubr.bf16.gmra.mrb[0].mxu0 %v1000
      %v1523 = vpop.f32.mrb[0].mxu0
      %v1524 = vadd.f32 0.0, %v1523
      %v1525 = vpop.f32.mrb[0].mxu0
      %v1526 = vadd.f32 0.0, %v1525
      %v1527 = vpop.f32.mrb[0].mxu0
      %v1528 = vadd.f32 0.0, %v1527
      %v1529 = vpop.f32.mrb[0].mxu0
      %v1530 = vadd.f32 0.0, %v1529
      %1531 = vmatprep.mubr.bf16.mxu0 0
      %1532 = vmatmul.mubr.bf16.gmra.mrb[0].mxu0 %v1003
      %v1533 = vpop.f32.mrb[0].mxu0
      %v1534 = vadd.f32 0.0, %v1533
      %v1535 = vpop.f32.mrb[0].mxu0
      %v1536 = vadd.f32 0.0, %v1535
      %v1537 = vpop.f32.mrb[0].mxu0
      %v1538 = vadd.f32 0.0, %v1537
      %v1539 = vpop.f32.mrb[0].mxu0
      %v1540 = vadd.f32 0.0, %v1539
      %1541 = vmatprep.mubr.bf16.mxu0 0
      %1542 = vmatmul.mubr.bf16.gmra.mrb[0].mxu0 %v1006
      %v1543 = vpop.f32.mrb[0].mxu0
      %v1544 = vadd.f32 0.0, %v1543
      %v1545 = vpop.f32.mrb[0].mxu0
      %v1546 = vadd.f32 0.0, %v1545
      %v1547 = vpop.f32.mrb[0].mxu0
      %v1548 = vadd.f32 0.0, %v1547
      %v1549 = vpop.f32.mrb[0].mxu0
      %v1550 = vadd.f32 0.0, %v1549
      %1551 = vmatprep.mubr.bf16.mxu0 0
      %1552 = vmatmul.mubr.bf16.gmra.mrb[0].mxu0 %v1009
      %v1553 = vpop.f32.mrb[0].mxu0
      %v1554 = vadd.f32 0.0, %v1553
      %v1555 = vpop.f32.mrb[0].mxu0
      %v1556 = vadd.f32 0.0, %v1555
      %v1557 = vpop.f32.mrb[0].mxu0
      %v1558 = vadd.f32 0.0, %v1557
      %v1559 = vpop.f32.mrb[0].mxu0
      %v1560 = vadd.f32 0.0, %v1559
      %1561 = vmatprep.mubr.bf16.mxu0 0
      %1562 = vmatmul.mubr.bf16.gmra.mrb[0].mxu0 %v1012
      %v1563 = vpop.f32.mrb[0].mxu0
      %v1564 = vadd.f32 0.0, %v1563
      %v1565 = vpop.f32.mrb[0].mxu0
      %v1566 = vadd.f32 0.0, %v1565
      %v1567 = vpop.f32.mrb[0].mxu0
      %v1568 = vadd.f32 0.0, %v1567
      %v1569 = vpop.f32.mrb[0].mxu0
      %v1570 = vadd.f32 0.0, %v1569
      %1571 = vmatprep.mubr.bf16.mxu0 0
      %1572 = vmatmul.mubr.bf16.gmra.mrb[0].mxu0 %v1015
      %v1573 = vpop.f32.mrb[0].mxu0
      %v1574 = vadd.f32 0.0, %v1573
      %v1575 = vpop.f32.mrb[0].mxu0
      %v1576 = vadd.f32 0.0, %v1575
      %v1577 = vpop.f32.mrb[0].mxu0
      %v1578 = vadd.f32 0.0, %v1577
      %v1579 = vpop.f32.mrb[0].mxu0
      %v1580 = vadd.f32 0.0, %v1579
      %1581 = vmatprep.mubr.bf16.mxu0 0
      %1582 = vmatmul.mubr.bf16.gmra.mrb[0].mxu0 %v1018
      %v1583 = vpop.f32.mrb[0].mxu0
      %v1584 = vadd.f32 0.0, %v1583
      %v1585 = vpop.f32.mrb[0].mxu0
      %v1586 = vadd.f32 0.0, %v1585
      %v1587 = vpop.f32.mrb[0].mxu0
      %v1588 = vadd.f32 0.0, %v1587
      %v1589 = vpop.f32.mrb[0].mxu0
      %v1590 = vadd.f32 0.0, %v1589
      %1591 = vmatprep.mubr.bf16.mxu0 0
      %1592 = vmatmul.mubr.bf16.gmra.mrb[0].mxu0 %v1021
      %v1593 = vpop.f32.mrb[0].mxu0
      %v1594 = vadd.f32 0.0, %v1593
      %v1595 = vpop.f32.mrb[0].mxu0
      %v1596 = vadd.f32 0.0, %v1595
      %v1597 = vpop.f32.mrb[0].mxu0
      %v1598 = vadd.f32 0.0, %v1597
      %v1599 = vpop.f32.mrb[0].mxu0
      %v1600 = vadd.f32 0.0, %v1599
      %1601 = vdwg.mxu0
      %1602 = vmatprep.subr.bf16.mxu0 %v918
      %1603 = vmatpush1.bf16.msra.mxu0 %v917
      %1604 = vmatprep.subr.bf16.mxu0 %v926
      %1605 = vmatpush1.bf16.msra.mxu0 %v925
      %1606 = vmatprep.subr.bf16.mxu0 %v934
      %1607 = vmatpush1.bf16.msra.mxu0 %v933
      %1608 = vmatprep.subr.bf16.mxu0 %v942
      %1609 = vmatpush1.bf16.msra.mxu0 %v941
      %1610 = vmatprep.subr.bf16.mxu0 0
      %1611 = vmatpush1.bf16.msra.mxu0 0
      %1612 = vmatprep.subr.bf16.mxu0 0
      %1613 = vmatpush1.bf16.msra.mxu0 0
      %1614 = vmatprep.subr.bf16.mxu0 0
      %1615 = vmatpush1.bf16.msra.mxu0 0
      %1616 = vmatprep.subr.bf16.mxu0 0
      %1617 = vmatpush1.bf16.msra.mxu0 0
      %1618 = vmatprep.subr.bf16.mxu0 0
      %1619 = vmatpush1.bf16.msra.mxu0 0
      %1620 = vmatprep.subr.bf16.mxu0 0
      %1621 = vmatpush1.bf16.msra.mxu0 0
      %1622 = vmatprep.subr.bf16.mxu0 0
      %1623 = vmatpush1.bf16.msra.mxu0 0
      %1624 = vmatprep.subr.bf16.mxu0 0
      %1625 = vmatpush1.bf16.msra.mxu0 0
      %1626 = vmatprep.subr.bf16.mxu0 0
      %1627 = vmatpush1.bf16.msra.mxu0 0
      %1628 = vmatprep.subr.bf16.mxu0 0
      %1629 = vmatpush1.bf16.msra.mxu0 0
      %1630 = vmatprep.subr.bf16.mxu0 0
      %1631 = vmatpush1.bf16.msra.mxu0 0
      %1632 = vmatprep.subr.bf16.mxu0 0
      %1633 = vmatpush1.bf16.msra.mxu0 0
      %1634 = vmatprep.mubr.bf16.mxu0 0
      %1635 = vmatmul.mubr.bf16.gmra.mrb[0].mxu0 %v976
      %v1636 = vpop.f32.mrb[0].mxu0
      %v1637 = vadd.f32 0.0, %v1636
      %v1638 = vpop.f32.mrb[0].mxu0
      %v1639 = vadd.f32 0.0, %v1638
      %v1640 = vpop.f32.mrb[0].mxu0
      %v1641 = vadd.f32 0.0, %v1640
      %v1642 = vpop.f32.mrb[0].mxu0
      %v1643 = vadd.f32 0.0, %v1642
      %1644 = vmatprep.mubr.bf16.mxu0 0
      %1645 = vmatmul.mubr.bf16.gmra.mrb[0].mxu0 %v979
      %v1646 = vpop.f32.mrb[0].mxu0
      %v1647 = vadd.f32 0.0, %v1646
      %v1648 = vpop.f32.mrb[0].mxu0
      %v1649 = vadd.f32 0.0, %v1648
      %v1650 = vpop.f32.mrb[0].mxu0
      %v1651 = vadd.f32 0.0, %v1650
      %v1652 = vpop.f32.mrb[0].mxu0
      %v1653 = vadd.f32 0.0, %v1652
      %1654 = vmatprep.mubr.bf16.mxu0 0
      %1655 = vmatmul.mubr.bf16.gmra.mrb[0].mxu0 %v982
      %v1656 = vpop.f32.mrb[0].mxu0
      %v1657 = vadd.f32 0.0, %v1656
      %v1658 = vpop.f32.mrb[0].mxu0
      %v1659 = vadd.f32 0.0, %v1658
      %v1660 = vpop.f32.mrb[0].mxu0
      %v1661 = vadd.f32 0.0, %v1660
      %v1662 = vpop.f32.mrb[0].mxu0
      %v1663 = vadd.f32 0.0, %v1662
      %1664 = vmatprep.mubr.bf16.mxu0 0
      %1665 = vmatmul.mubr.bf16.gmra.mrb[0].mxu0 %v985
      %v1666 = vpop.f32.mrb[0].mxu0
      %v1667 = vadd.f32 0.0, %v1666
      %v1668 = vpop.f32.mrb[0].mxu0
      %v1669 = vadd.f32 0.0, %v1668
      %v1670 = vpop.f32.mrb[0].mxu0
      %v1671 = vadd.f32 0.0, %v1670
      %v1672 = vpop.f32.mrb[0].mxu0
      %v1673 = vadd.f32 0.0, %v1672
      %1674 = vmatprep.mubr.bf16.mxu0 0
      %1675 = vmatmul.mubr.bf16.gmra.mrb[0].mxu0 %v988
      %v1676 = vpop.f32.mrb[0].mxu0
      %v1677 = vadd.f32 0.0, %v1676
      %v1678 = vpop.f32.mrb[0].mxu0
      %v1679 = vadd.f32 0.0, %v1678
      %v1680 = vpop.f32.mrb[0].mxu0
      %v1681 = vadd.f32 0.0, %v1680
      %v1682 = vpop.f32.mrb[0].mxu0
      %v1683 = vadd.f32 0.0, %v1682
      %1684 = vmatprep.mubr.bf16.mxu0 0
      %1685 = vmatmul.mubr.bf16.gmra.mrb[0].mxu0 %v991
      %v1686 = vpop.f32.mrb[0].mxu0
      %v1687 = vadd.f32 0.0, %v1686
      %v1688 = vpop.f32.mrb[0].mxu0
      %v1689 = vadd.f32 0.0, %v1688
      %v1690 = vpop.f32.mrb[0].mxu0
      %v1691 = vadd.f32 0.0, %v1690
      %v1692 = vpop.f32.mrb[0].mxu0
      %v1693 = vadd.f32 0.0, %v1692
      %1694 = vmatprep.mubr.bf16.mxu0 0
      %1695 = vmatmul.mubr.bf16.gmra.mrb[0].mxu0 %v994
      %v1696 = vpop.f32.mrb[0].mxu0
      %v1697 = vadd.f32 0.0, %v1696
      %v1698 = vpop.f32.mrb[0].mxu0
      %v1699 = vadd.f32 0.0, %v1698
      %v1700 = vpop.f32.mrb[0].mxu0
      %v1701 = vadd.f32 0.0, %v1700
      %v1702 = vpop.f32.mrb[0].mxu0
      %v1703 = vadd.f32 0.0, %v1702
      %1704 = vmatprep.mubr.bf16.mxu0 0
      %1705 = vmatmul.mubr.bf16.gmra.mrb[0].mxu0 %v997
      %v1706 = vpop.f32.mrb[0].mxu0
      %v1707 = vadd.f32 0.0, %v1706
      %v1708 = vpop.f32.mrb[0].mxu0
      %v1709 = vadd.f32 0.0, %v1708
      %v1710 = vpop.f32.mrb[0].mxu0
      %v1711 = vadd.f32 0.0, %v1710
      %v1712 = vpop.f32.mrb[0].mxu0
      %v1713 = vadd.f32 0.0, %v1712
      %1714 = vmatprep.mubr.bf16.mxu0 0
      %1715 = vmatmul.mubr.bf16.gmra.mrb[0].mxu0 %v1000
      %v1716 = vpop.f32.mrb[0].mxu0
      %v1717 = vadd.f32 0.0, %v1716
      %v1718 = vpop.f32.mrb[0].mxu0
      %v1719 = vadd.f32 0.0, %v1718
      %v1720 = vpop.f32.mrb[0].mxu0
      %v1721 = vadd.f32 0.0, %v1720
      %v1722 = vpop.f32.mrb[0].mxu0
      %v1723 = vadd.f32 0.0, %v1722
      %1724 = vmatprep.mubr.bf16.mxu0 0
      %1725 = vmatmul.mubr.bf16.gmra.mrb[0].mxu0 %v1003
      %v1726 = vpop.f32.mrb[0].mxu0
      %v1727 = vadd.f32 0.0, %v1726
      %v1728 = vpop.f32.mrb[0].mxu0
      %v1729 = vadd.f32 0.0, %v1728
      %v1730 = vpop.f32.mrb[0].mxu0
      %v1731 = vadd.f32 0.0, %v1730
      %v1732 = vpop.f32.mrb[0].mxu0
      %v1733 = vadd.f32 0.0, %v1732
      %1734 = vmatprep.mubr.bf16.mxu0 0
      %1735 = vmatmul.mubr.bf16.gmra.mrb[0].mxu0 %v1006
      %v1736 = vpop.f32.mrb[0].mxu0
      %v1737 = vadd.f32 0.0, %v1736
      %v1738 = vpop.f32.mrb[0].mxu0
      %v1739 = vadd.f32 0.0, %v1738
      %v1740 = vpop.f32.mrb[0].mxu0
      %v1741 = vadd.f32 0.0, %v1740
      %v1742 = vpop.f32.mrb[0].mxu0
      %v1743 = vadd.f32 0.0, %v1742
      %1744 = vmatprep.mubr.bf16.mxu0 0
      %1745 = vmatmul.mubr.bf16.gmra.mrb[0].mxu0 %v1009
      %v1746 = vpop.f32.mrb[0].mxu0
      %v1747 = vadd.f32 0.0, %v1746
      %v1748 = vpop.f32.mrb[0].mxu0
      %v1749 = vadd.f32 0.0, %v1748
      %v1750 = vpop.f32.mrb[0].mxu0
      %v1751 = vadd.f32 0.0, %v1750
      %v1752 = vpop.f32.mrb[0].mxu0
      %v1753 = vadd.f32 0.0, %v1752
      %1754 = vmatprep.mubr.bf16.mxu0 0
      %1755 = vmatmul.mubr.bf16.gmra.mrb[0].mxu0 %v1012
      %v1756 = vpop.f32.mrb[0].mxu0
      %v1757 = vadd.f32 0.0, %v1756
      %v1758 = vpop.f32.mrb[0].mxu0
      %v1759 = vadd.f32 0.0, %v1758
      %v1760 = vpop.f32.mrb[0].mxu0
      %v1761 = vadd.f32 0.0, %v1760
      %v1762 = vpop.f32.mrb[0].mxu0
      %v1763 = vadd.f32 0.0, %v1762
      %1764 = vmatprep.mubr.bf16.mxu0 0
      %1765 = vmatmul.mubr.bf16.gmra.mrb[0].mxu0 %v1015
      %v1766 = vpop.f32.mrb[0].mxu0
      %v1767 = vadd.f32 0.0, %v1766
      %v1768 = vpop.f32.mrb[0].mxu0
      %v1769 = vadd.f32 0.0, %v1768
      %v1770 = vpop.f32.mrb[0].mxu0
      %v1771 = vadd.f32 0.0, %v1770
      %v1772 = vpop.f32.mrb[0].mxu0
      %v1773 = vadd.f32 0.0, %v1772
      %1774 = vmatprep.mubr.bf16.mxu0 0
      %1775 = vmatmul.mubr.bf16.gmra.mrb[0].mxu0 %v1018
      %v1776 = vpop.f32.mrb[0].mxu0
      %v1777 = vadd.f32 0.0, %v1776
      %v1778 = vpop.f32.mrb[0].mxu0
      %v1779 = vadd.f32 0.0, %v1778
      %v1780 = vpop.f32.mrb[0].mxu0
      %v1781 = vadd.f32 0.0, %v1780
      %v1782 = vpop.f32.mrb[0].mxu0
      %v1783 = vadd.f32 0.0, %v1782
      %1784 = vmatprep.mubr.bf16.mxu0 0
      %1785 = vmatmul.mubr.bf16.gmra.mrb[0].mxu0 %v1021
      %v1786 = vpop.f32.mrb[0].mxu0
      %v1787 = vadd.f32 0.0, %v1786
      %v1788 = vpop.f32.mrb[0].mxu0
      %v1789 = vadd.f32 0.0, %v1788
      %v1790 = vpop.f32.mrb[0].mxu0
      %v1791 = vadd.f32 0.0, %v1790
      %v1792 = vpop.f32.mrb[0].mxu0
      %v1793 = vadd.f32 0.0, %v1792
      %1794 = vdwg.mxu0
      %v1795 = vmax.f32 %v1058, %v1062
      %v1796 = vmax.f32 %v1795, %v1068
      %v1797 = vmax.f32 %v1796, %v1072
      %v1798 = vmax.f32 %v1797, %v1078
      %v1799 = vmax.f32 %v1798, %v1082
      %v1800 = vmax.f32 %v1799, %v1088
      %v1801 = vmax.f32 %v1800, %v1092
      %v1802 = vmax.f32 %v1801, %v1098
      %v1803 = vmax.f32 %v1802, %v1102
      %v1804 = vmax.f32 %v1803, %v1108
      %v1805 = vmax.f32 %v1804, %v1112
      %v1806 = vmax.f32 %v1805, %v1118
      %v1807 = vmax.f32 %v1806, %v1122
      %v1808 = vmax.f32 %v1807, %v1128
      %v1809 = vmax.f32 %v1808, %v1132
      %v1810 = vmax.f32 %v1809, %v1138
      %v1811 = vmax.f32 %v1810, %v1142
      %v1812 = vmax.f32 %v1811, %v1148
      %v1813 = vmax.f32 %v1812, %v1152
      %v1814 = vmax.f32 %v1813, %v1158
      %v1815 = vmax.f32 %v1814, %v1162
      %v1816 = vmax.f32 %v1815, %v1168
      %v1817 = vmax.f32 %v1816, %v1172
      %v1818 = vmax.f32 %v1817, %v1178
      %v1819 = vmax.f32 %v1818, %v1182
      %v1820 = vmax.f32 %v1819, %v1188
      %v1821 = vmax.f32 %v1820, %v1192
      %v1822 = vmax.f32 %v1821, %v1198
      %v1823 = vmax.f32 %v1822, %v1202
      %v1824 = vmax.f32 %v1823, %v1208
      %v1825 = vmax.f32 %v1824, %v1212
      %v1826 = vrot.slane %v1825, 4
      %v1827 = vmax.f32 %v1825, %v1826
      %v1828 = vrot.slane %v1827, 2
      %v1829 = vmax.f32 %v1827, %v1828
      %v1830 = vrot.slane %v1829, 1
      %v1831 = vmax.f32 %v1829, %v1830
      %v1832 = vmax.f32 %v1060, %v1064
      %v1833 = vmax.f32 %v1832, %v1070
      %v1834 = vmax.f32 %v1833, %v1074
      %v1835 = vmax.f32 %v1834, %v1080
      %v1836 = vmax.f32 %v1835, %v1084
      %v1837 = vmax.f32 %v1836, %v1090
      %v1838 = vmax.f32 %v1837, %v1094
      %v1839 = vmax.f32 %v1838, %v1100
      %v1840 = vmax.f32 %v1839, %v1104
      %v1841 = vmax.f32 %v1840, %v1110
      %v1842 = vmax.f32 %v1841, %v1114
      %v1843 = vmax.f32 %v1842, %v1120
      %v1844 = vmax.f32 %v1843, %v1124
      %v1845 = vmax.f32 %v1844, %v1130
      %v1846 = vmax.f32 %v1845, %v1134
      %v1847 = vmax.f32 %v1846, %v1140
      %v1848 = vmax.f32 %v1847, %v1144
      %v1849 = vmax.f32 %v1848, %v1150
      %v1850 = vmax.f32 %v1849, %v1154
      %v1851 = vmax.f32 %v1850, %v1160
      %v1852 = vmax.f32 %v1851, %v1164
      %v1853 = vmax.f32 %v1852, %v1170
      %v1854 = vmax.f32 %v1853, %v1174
      %v1855 = vmax.f32 %v1854, %v1180
      %v1856 = vmax.f32 %v1855, %v1184
      %v1857 = vmax.f32 %v1856, %v1190
      %v1858 = vmax.f32 %v1857, %v1194
      %v1859 = vmax.f32 %v1858, %v1200
      %v1860 = vmax.f32 %v1859, %v1204
      %v1861 = vmax.f32 %v1860, %v1210
      %v1862 = vmax.f32 %v1861, %v1214
      %v1863 = vrot.slane %v1862, 4
      %v1864 = vmax.f32 %v1862, %v1863
      %v1865 = vrot.slane %v1864, 2
      %v1866 = vmax.f32 %v1864, %v1865
      %v1867 = vrot.slane %v1866, 1
      %v1868 = vmax.f32 %v1866, %v1867
      %v1869 = vmax.f32 %v1251, %v1255
      %v1870 = vmax.f32 %v1869, %v1261
      %v1871 = vmax.f32 %v1870, %v1265
      %v1872 = vmax.f32 %v1871, %v1271
      %v1873 = vmax.f32 %v1872, %v1275
      %v1874 = vmax.f32 %v1873, %v1281
      %v1875 = vmax.f32 %v1874, %v1285
      %v1876 = vmax.f32 %v1875, %v1291
      %v1877 = vmax.f32 %v1876, %v1295
      %v1878 = vmax.f32 %v1877, %v1301
      %v1879 = vmax.f32 %v1878, %v1305
      %v1880 = vmax.f32 %v1879, %v1311
      %v1881 = vmax.f32 %v1880, %v1315
      %v1882 = vmax.f32 %v1881, %v1321
      %v1883 = vmax.f32 %v1882, %v1325
      %v1884 = vmax.f32 %v1883, %v1331
      %v1885 = vmax.f32 %v1884, %v1335
      %v1886 = vmax.f32 %v1885, %v1341
      %v1887 = vmax.f32 %v1886, %v1345
      %v1888 = vmax.f32 %v1887, %v1351
      %v1889 = vmax.f32 %v1888, %v1355
      %v1890 = vmax.f32 %v1889, %v1361
      %v1891 = vmax.f32 %v1890, %v1365
      %v1892 = vmax.f32 %v1891, %v1371
      %v1893 = vmax.f32 %v1892, %v1375
      %v1894 = vmax.f32 %v1893, %v1381
      %v1895 = vmax.f32 %v1894, %v1385
      %v1896 = vmax.f32 %v1895, %v1391
      %v1897 = vmax.f32 %v1896, %v1395
      %v1898 = vmax.f32 %v1897, %v1401
      %v1899 = vmax.f32 %v1898, %v1405
      %v1900 = vrot.slane %v1899, 4
      %v1901 = vmax.f32 %v1899, %v1900
      %v1902 = vrot.slane %v1901, 2
      %v1903 = vmax.f32 %v1901, %v1902
      %v1904 = vrot.slane %v1903, 1
      %v1905 = vmax.f32 %v1903, %v1904
      %v1906 = vmax.f32 %v1253, %v1257
      %v1907 = vmax.f32 %v1906, %v1263
      %v1908 = vmax.f32 %v1907, %v1267
      %v1909 = vmax.f32 %v1908, %v1273
      %v1910 = vmax.f32 %v1909, %v1277
      %v1911 = vmax.f32 %v1910, %v1283
      %v1912 = vmax.f32 %v1911, %v1287
      %v1913 = vmax.f32 %v1912, %v1293
      %v1914 = vmax.f32 %v1913, %v1297
      %v1915 = vmax.f32 %v1914, %v1303
      %v1916 = vmax.f32 %v1915, %v1307
      %v1917 = vmax.f32 %v1916, %v1313
      %v1918 = vmax.f32 %v1917, %v1317
      %v1919 = vmax.f32 %v1918, %v1323
      %v1920 = vmax.f32 %v1919, %v1327
      %v1921 = vmax.f32 %v1920, %v1333
      %v1922 = vmax.f32 %v1921, %v1337
      %v1923 = vmax.f32 %v1922, %v1343
      %v1924 = vmax.f32 %v1923, %v1347
      %v1925 = vmax.f32 %v1924, %v1353
      %v1926 = vmax.f32 %v1925, %v1357
      %v1927 = vmax.f32 %v1926, %v1363
      %v1928 = vmax.f32 %v1927, %v1367
      %v1929 = vmax.f32 %v1928, %v1373
      %v1930 = vmax.f32 %v1929, %v1377
      %v1931 = vmax.f32 %v1930, %v1383
      %v1932 = vmax.f32 %v1931, %v1387
      %v1933 = vmax.f32 %v1932, %v1393
      %v1934 = vmax.f32 %v1933, %v1397
      %v1935 = vmax.f32 %v1934, %v1403
      %v1936 = vmax.f32 %v1935, %v1407
      %v1937 = vrot.slane %v1936, 4
      %v1938 = vmax.f32 %v1936, %v1937
      %v1939 = vrot.slane %v1938, 2
      %v1940 = vmax.f32 %v1938, %v1939
      %v1941 = vrot.slane %v1940, 1
      %v1942 = vmax.f32 %v1940, %v1941
      %v1943 = vmax.f32 %v1444, %v1448
      %v1944 = vmax.f32 %v1943, %v1454
      %v1945 = vmax.f32 %v1944, %v1458
      %v1946 = vmax.f32 %v1945, %v1464
      %v1947 = vmax.f32 %v1946, %v1468
      %v1948 = vmax.f32 %v1947, %v1474
      %v1949 = vmax.f32 %v1948, %v1478
      %v1950 = vmax.f32 %v1949, %v1484
      %v1951 = vmax.f32 %v1950, %v1488
      %v1952 = vmax.f32 %v1951, %v1494
      %v1953 = vmax.f32 %v1952, %v1498
      %v1954 = vmax.f32 %v1953, %v1504
      %v1955 = vmax.f32 %v1954, %v1508
      %v1956 = vmax.f32 %v1955, %v1514
      %v1957 = vmax.f32 %v1956, %v1518
      %v1958 = vmax.f32 %v1957, %v1524
      %v1959 = vmax.f32 %v1958, %v1528
      %v1960 = vmax.f32 %v1959, %v1534
      %v1961 = vmax.f32 %v1960, %v1538
      %v1962 = vmax.f32 %v1961, %v1544
      %v1963 = vmax.f32 %v1962, %v1548
      %v1964 = vmax.f32 %v1963, %v1554
      %v1965 = vmax.f32 %v1964, %v1558
      %v1966 = vmax.f32 %v1965, %v1564
      %v1967 = vmax.f32 %v1966, %v1568
      %v1968 = vmax.f32 %v1967, %v1574
      %v1969 = vmax.f32 %v1968, %v1578
      %v1970 = vmax.f32 %v1969, %v1584
      %v1971 = vmax.f32 %v1970, %v1588
      %v1972 = vmax.f32 %v1971, %v1594
      %v1973 = vmax.f32 %v1972, %v1598
      %v1974 = vrot.slane %v1973, 4
      %v1975 = vmax.f32 %v1973, %v1974
      %v1976 = vrot.slane %v1975, 2
      %v1977 = vmax.f32 %v1975, %v1976
      %v1978 = vrot.slane %v1977, 1
      %v1979 = vmax.f32 %v1977, %v1978
      %v1980 = vmax.f32 %v1446, %v1450
      %v1981 = vmax.f32 %v1980, %v1456
      %v1982 = vmax.f32 %v1981, %v1460
      %v1983 = vmax.f32 %v1982, %v1466
      %v1984 = vmax.f32 %v1983, %v1470
      %v1985 = vmax.f32 %v1984, %v1476
      %v1986 = vmax.f32 %v1985, %v1480
      %v1987 = vmax.f32 %v1986, %v1486
      %v1988 = vmax.f32 %v1987, %v1490
      %v1989 = vmax.f32 %v1988, %v1496
      %v1990 = vmax.f32 %v1989, %v1500
      %v1991 = vmax.f32 %v1990, %v1506
      %v1992 = vmax.f32 %v1991, %v1510
      %v1993 = vmax.f32 %v1992, %v1516
      %v1994 = vmax.f32 %v1993, %v1520
      %v1995 = vmax.f32 %v1994, %v1526
      %v1996 = vmax.f32 %v1995, %v1530
      %v1997 = vmax.f32 %v1996, %v1536
      %v1998 = vmax.f32 %v1997, %v1540
      %v1999 = vmax.f32 %v1998, %v1546
      %v2000 = vmax.f32 %v1999, %v1550
      %v2001 = vmax.f32 %v2000, %v1556
      %v2002 = vmax.f32 %v2001, %v1560
      %v2003 = vmax.f32 %v2002, %v1566
      %v2004 = vmax.f32 %v2003, %v1570
      %v2005 = vmax.f32 %v2004, %v1576
      %v2006 = vmax.f32 %v2005, %v1580
      %v2007 = vmax.f32 %v2006, %v1586
      %v2008 = vmax.f32 %v2007, %v1590
      %v2009 = vmax.f32 %v2008, %v1596
      %v2010 = vmax.f32 %v2009, %v1600
      %v2011 = vrot.slane %v2010, 4
      %v2012 = vmax.f32 %v2010, %v2011
      %v2013 = vrot.slane %v2012, 2
      %v2014 = vmax.f32 %v2012, %v2013
      %v2015 = vrot.slane %v2014, 1
      %v2016 = vmax.f32 %v2014, %v2015
      %v2017 = vmax.f32 %v1637, %v1641
      %v2018 = vmax.f32 %v2017, %v1647
      %v2019 = vmax.f32 %v2018, %v1651
      %v2020 = vmax.f32 %v2019, %v1657
      %v2021 = vmax.f32 %v2020, %v1661
      %v2022 = vmax.f32 %v2021, %v1667
      %v2023 = vmax.f32 %v2022, %v1671
      %v2024 = vmax.f32 %v2023, %v1677
      %v2025 = vmax.f32 %v2024, %v1681
      %v2026 = vmax.f32 %v2025, %v1687
      %v2027 = vmax.f32 %v2026, %v1691
      %v2028 = vmax.f32 %v2027, %v1697
      %v2029 = vmax.f32 %v2028, %v1701
      %v2030 = vmax.f32 %v2029, %v1707
      %v2031 = vmax.f32 %v2030, %v1711
      %v2032 = vmax.f32 %v2031, %v1717
      %v2033 = vmax.f32 %v2032, %v1721
      %v2034 = vmax.f32 %v2033, %v1727
      %v2035 = vmax.f32 %v2034, %v1731
      %v2036 = vmax.f32 %v2035, %v1737
      %v2037 = vmax.f32 %v2036, %v1741
      %v2038 = vmax.f32 %v2037, %v1747
      %v2039 = vmax.f32 %v2038, %v1751
      %v2040 = vmax.f32 %v2039, %v1757
      %v2041 = vmax.f32 %v2040, %v1761
      %v2042 = vmax.f32 %v2041, %v1767
      %v2043 = vmax.f32 %v2042, %v1771
      %v2044 = vmax.f32 %v2043, %v1777
      %v2045 = vmax.f32 %v2044, %v1781
      %v2046 = vmax.f32 %v2045, %v1787
      %v2047 = vmax.f32 %v2046, %v1791
      %v2048 = vrot.slane %v2047, 4
      %v2049 = vmax.f32 %v2047, %v2048
      %v2050 = vrot.slane %v2049, 2
      %v2051 = vmax.f32 %v2049, %v2050
      %v2052 = vrot.slane %v2051, 1
      %v2053 = vmax.f32 %v2051, %v2052
      %v2054 = vmax.f32 %v1639, %v1643
      %v2055 = vmax.f32 %v2054, %v1649
      %v2056 = vmax.f32 %v2055, %v1653
      %v2057 = vmax.f32 %v2056, %v1659
      %v2058 = vmax.f32 %v2057, %v1663
      %v2059 = vmax.f32 %v2058, %v1669
      %v2060 = vmax.f32 %v2059, %v1673
      %v2061 = vmax.f32 %v2060, %v1679
      %v2062 = vmax.f32 %v2061, %v1683
      %v2063 = vmax.f32 %v2062, %v1689
      %v2064 = vmax.f32 %v2063, %v1693
      %v2065 = vmax.f32 %v2064, %v1699
      %v2066 = vmax.f32 %v2065, %v1703
      %v2067 = vmax.f32 %v2066, %v1709
      %v2068 = vmax.f32 %v2067, %v1713
      %v2069 = vmax.f32 %v2068, %v1719
      %v2070 = vmax.f32 %v2069, %v1723
      %v2071 = vmax.f32 %v2070, %v1729
      %v2072 = vmax.f32 %v2071, %v1733
      %v2073 = vmax.f32 %v2072, %v1739
      %v2074 = vmax.f32 %v2073, %v1743
      %v2075 = vmax.f32 %v2074, %v1749
      %v2076 = vmax.f32 %v2075, %v1753
      %v2077 = vmax.f32 %v2076, %v1759
      %v2078 = vmax.f32 %v2077, %v1763
      %v2079 = vmax.f32 %v2078, %v1769
      %v2080 = vmax.f32 %v2079, %v1773
      %v2081 = vmax.f32 %v2080, %v1779
      %v2082 = vmax.f32 %v2081, %v1783
      %v2083 = vmax.f32 %v2082, %v1789
      %v2084 = vmax.f32 %v2083, %v1793
      %v2085 = vrot.slane %v2084, 4
      %v2086 = vmax.f32 %v2084, %v2085
      %v2087 = vrot.slane %v2086, 2
      %v2088 = vmax.f32 %v2086, %v2087
      %v2089 = vrot.slane %v2088, 1
      %v2090 = vmax.f32 %v2088, %v2089
      %v2091 = vsub.f32 %v1058, %v1831
      %v2092 = vsub.f32 %v1060, %v1868
      %v2093 = vsub.f32 %v1251, %v1905
      %v2094 = vsub.f32 %v1253, %v1942
      %v2095 = vsub.f32 %v1444, %v1979
      %v2096 = vsub.f32 %v1446, %v2016
      %v2097 = vsub.f32 %v1637, %v2053
      %v2098 = vsub.f32 %v1639, %v2090
      %v2099 = vsub.f32 %v1062, %v1831
      %v2100 = vsub.f32 %v1064, %v1868
      %v2101 = vsub.f32 %v1255, %v1905
      %v2102 = vsub.f32 %v1257, %v1942
      %v2103 = vsub.f32 %v1448, %v1979
      %v2104 = vsub.f32 %v1450, %v2016
      %v2105 = vsub.f32 %v1641, %v2053
      %v2106 = vsub.f32 %v1643, %v2090
      %v2107 = vsub.f32 %v1068, %v1831
      %v2108 = vsub.f32 %v1070, %v1868
      %v2109 = vsub.f32 %v1261, %v1905
      %v2110 = vsub.f32 %v1263, %v1942
      %v2111 = vsub.f32 %v1454, %v1979
      %v2112 = vsub.f32 %v1456, %v2016
      %v2113 = vsub.f32 %v1647, %v2053
      %v2114 = vsub.f32 %v1649, %v2090
      %v2115 = vsub.f32 %v1072, %v1831
      %v2116 = vsub.f32 %v1074, %v1868
      %v2117 = vsub.f32 %v1265, %v1905
      %v2118 = vsub.f32 %v1267, %v1942
      %v2119 = vsub.f32 %v1458, %v1979
      %v2120 = vsub.f32 %v1460, %v2016
      %v2121 = vsub.f32 %v1651, %v2053
      %v2122 = vsub.f32 %v1653, %v2090
      %v2123 = vsub.f32 %v1078, %v1831
      %v2124 = vsub.f32 %v1080, %v1868
      %v2125 = vsub.f32 %v1271, %v1905
      %v2126 = vsub.f32 %v1273, %v1942
      %v2127 = vsub.f32 %v1464, %v1979
      %v2128 = vsub.f32 %v1466, %v2016
      %v2129 = vsub.f32 %v1657, %v2053
      %v2130 = vsub.f32 %v1659, %v2090
      %v2131 = vsub.f32 %v1082, %v1831
      %v2132 = vsub.f32 %v1084, %v1868
      %v2133 = vsub.f32 %v1275, %v1905
      %v2134 = vsub.f32 %v1277, %v1942
      %v2135 = vsub.f32 %v1468, %v1979
      %v2136 = vsub.f32 %v1470, %v2016
      %v2137 = vsub.f32 %v1661, %v2053
      %v2138 = vsub.f32 %v1663, %v2090
      %v2139 = vsub.f32 %v1088, %v1831
      %v2140 = vsub.f32 %v1090, %v1868
      %v2141 = vsub.f32 %v1281, %v1905
      %v2142 = vsub.f32 %v1283, %v1942
      %v2143 = vsub.f32 %v1474, %v1979
      %v2144 = vsub.f32 %v1476, %v2016
      %v2145 = vsub.f32 %v1667, %v2053
      %v2146 = vsub.f32 %v1669, %v2090
      %v2147 = vsub.f32 %v1092, %v1831
      %v2148 = vsub.f32 %v1094, %v1868
      %v2149 = vsub.f32 %v1285, %v1905
      %v2150 = vsub.f32 %v1287, %v1942
      %v2151 = vsub.f32 %v1478, %v1979
      %v2152 = vsub.f32 %v1480, %v2016
      %v2153 = vsub.f32 %v1671, %v2053
      %v2154 = vsub.f32 %v1673, %v2090
      %v2155 = vsub.f32 %v1098, %v1831
      %v2156 = vsub.f32 %v1100, %v1868
      %v2157 = vsub.f32 %v1291, %v1905
      %v2158 = vsub.f32 %v1293, %v1942
      %v2159 = vsub.f32 %v1484, %v1979
      %v2160 = vsub.f32 %v1486, %v2016
      %v2161 = vsub.f32 %v1677, %v2053
      %v2162 = vsub.f32 %v1679, %v2090
      %v2163 = vsub.f32 %v1102, %v1831
      %v2164 = vsub.f32 %v1104, %v1868
      %v2165 = vsub.f32 %v1295, %v1905
      %v2166 = vsub.f32 %v1297, %v1942
      %v2167 = vsub.f32 %v1488, %v1979
      %v2168 = vsub.f32 %v1490, %v2016
      %v2169 = vsub.f32 %v1681, %v2053
      %v2170 = vsub.f32 %v1683, %v2090
      %v2171 = vsub.f32 %v1108, %v1831
      %v2172 = vsub.f32 %v1110, %v1868
      %v2173 = vsub.f32 %v1301, %v1905
      %v2174 = vsub.f32 %v1303, %v1942
      %v2175 = vsub.f32 %v1494, %v1979
      %v2176 = vsub.f32 %v1496, %v2016
      %v2177 = vsub.f32 %v1687, %v2053
      %v2178 = vsub.f32 %v1689, %v2090
      %v2179 = vsub.f32 %v1112, %v1831
      %v2180 = vsub.f32 %v1114, %v1868
      %v2181 = vsub.f32 %v1305, %v1905
      %v2182 = vsub.f32 %v1307, %v1942
      %v2183 = vsub.f32 %v1498, %v1979
      %v2184 = vsub.f32 %v1500, %v2016
      %v2185 = vsub.f32 %v1691, %v2053
      %v2186 = vsub.f32 %v1693, %v2090
      %v2187 = vsub.f32 %v1118, %v1831
      %v2188 = vsub.f32 %v1120, %v1868
      %v2189 = vsub.f32 %v1311, %v1905
      %v2190 = vsub.f32 %v1313, %v1942
      %v2191 = vsub.f32 %v1504, %v1979
      %v2192 = vsub.f32 %v1506, %v2016
      %v2193 = vsub.f32 %v1697, %v2053
      %v2194 = vsub.f32 %v1699, %v2090
      %v2195 = vsub.f32 %v1122, %v1831
      %v2196 = vsub.f32 %v1124, %v1868
      %v2197 = vsub.f32 %v1315, %v1905
      %v2198 = vsub.f32 %v1317, %v1942
      %v2199 = vsub.f32 %v1508, %v1979
      %v2200 = vsub.f32 %v1510, %v2016
      %v2201 = vsub.f32 %v1701, %v2053
      %v2202 = vsub.f32 %v1703, %v2090
      %v2203 = vsub.f32 %v1128, %v1831
      %v2204 = vsub.f32 %v1130, %v1868
      %v2205 = vsub.f32 %v1321, %v1905
      %v2206 = vsub.f32 %v1323, %v1942
      %v2207 = vsub.f32 %v1514, %v1979
      %v2208 = vsub.f32 %v1516, %v2016
      %v2209 = vsub.f32 %v1707, %v2053
      %v2210 = vsub.f32 %v1709, %v2090
      %v2211 = vsub.f32 %v1132, %v1831
      %v2212 = vsub.f32 %v1134, %v1868
      %v2213 = vsub.f32 %v1325, %v1905
      %v2214 = vsub.f32 %v1327, %v1942
      %v2215 = vsub.f32 %v1518, %v1979
      %v2216 = vsub.f32 %v1520, %v2016
      %v2217 = vsub.f32 %v1711, %v2053
      %v2218 = vsub.f32 %v1713, %v2090
      %v2219 = vsub.f32 %v1138, %v1831
      %v2220 = vsub.f32 %v1140, %v1868
      %v2221 = vsub.f32 %v1331, %v1905
      %v2222 = vsub.f32 %v1333, %v1942
      %v2223 = vsub.f32 %v1524, %v1979
      %v2224 = vsub.f32 %v1526, %v2016
      %v2225 = vsub.f32 %v1717, %v2053
      %v2226 = vsub.f32 %v1719, %v2090
      %v2227 = vsub.f32 %v1142, %v1831
      %v2228 = vsub.f32 %v1144, %v1868
      %v2229 = vsub.f32 %v1335, %v1905
      %v2230 = vsub.f32 %v1337, %v1942
      %v2231 = vsub.f32 %v1528, %v1979
      %v2232 = vsub.f32 %v1530, %v2016
      %v2233 = vsub.f32 %v1721, %v2053
      %v2234 = vsub.f32 %v1723, %v2090
      %v2235 = vsub.f32 %v1148, %v1831
      %v2236 = vsub.f32 %v1150, %v1868
      %v2237 = vsub.f32 %v1341, %v1905
      %v2238 = vsub.f32 %v1343, %v1942
      %v2239 = vsub.f32 %v1534, %v1979
      %v2240 = vsub.f32 %v1536, %v2016
      %v2241 = vsub.f32 %v1727, %v2053
      %v2242 = vsub.f32 %v1729, %v2090
      %v2243 = vsub.f32 %v1152, %v1831
      %v2244 = vsub.f32 %v1154, %v1868
      %v2245 = vsub.f32 %v1345, %v1905
      %v2246 = vsub.f32 %v1347, %v1942
      %v2247 = vsub.f32 %v1538, %v1979
      %v2248 = vsub.f32 %v1540, %v2016
      %v2249 = vsub.f32 %v1731, %v2053
      %v2250 = vsub.f32 %v1733, %v2090
      %v2251 = vsub.f32 %v1158, %v1831
      %v2252 = vsub.f32 %v1160, %v1868
      %v2253 = vsub.f32 %v1351, %v1905
      %v2254 = vsub.f32 %v1353, %v1942
      %v2255 = vsub.f32 %v1544, %v1979
      %v2256 = vsub.f32 %v1546, %v2016
      %v2257 = vsub.f32 %v1737, %v2053
      %v2258 = vsub.f32 %v1739, %v2090
      %v2259 = vsub.f32 %v1162, %v1831
      %v2260 = vsub.f32 %v1164, %v1868
      %v2261 = vsub.f32 %v1355, %v1905
      %v2262 = vsub.f32 %v1357, %v1942
      %v2263 = vsub.f32 %v1548, %v1979
      %v2264 = vsub.f32 %v1550, %v2016
      %v2265 = vsub.f32 %v1741, %v2053
      %v2266 = vsub.f32 %v1743, %v2090
      %v2267 = vsub.f32 %v1168, %v1831
      %v2268 = vsub.f32 %v1170, %v1868
      %v2269 = vsub.f32 %v1361, %v1905
      %v2270 = vsub.f32 %v1363, %v1942
      %v2271 = vsub.f32 %v1554, %v1979
      %v2272 = vsub.f32 %v1556, %v2016
      %v2273 = vsub.f32 %v1747, %v2053
      %v2274 = vsub.f32 %v1749, %v2090
      %v2275 = vsub.f32 %v1172, %v1831
      %v2276 = vsub.f32 %v1174, %v1868
      %v2277 = vsub.f32 %v1365, %v1905
      %v2278 = vsub.f32 %v1367, %v1942
      %v2279 = vsub.f32 %v1558, %v1979
      %v2280 = vsub.f32 %v1560, %v2016
      %v2281 = vsub.f32 %v1751, %v2053
      %v2282 = vsub.f32 %v1753, %v2090
      %v2283 = vsub.f32 %v1178, %v1831
      %v2284 = vsub.f32 %v1180, %v1868
      %v2285 = vsub.f32 %v1371, %v1905
      %v2286 = vsub.f32 %v1373, %v1942
      %v2287 = vsub.f32 %v1564, %v1979
      %v2288 = vsub.f32 %v1566, %v2016
      %v2289 = vsub.f32 %v1757, %v2053
      %v2290 = vsub.f32 %v1759, %v2090
      %v2291 = vsub.f32 %v1182, %v1831
      %v2292 = vsub.f32 %v1184, %v1868
      %v2293 = vsub.f32 %v1375, %v1905
      %v2294 = vsub.f32 %v1377, %v1942
      %v2295 = vsub.f32 %v1568, %v1979
      %v2296 = vsub.f32 %v1570, %v2016
      %v2297 = vsub.f32 %v1761, %v2053
      %v2298 = vsub.f32 %v1763, %v2090
      %v2299 = vsub.f32 %v1188, %v1831
      %v2300 = vsub.f32 %v1190, %v1868
      %v2301 = vsub.f32 %v1381, %v1905
      %v2302 = vsub.f32 %v1383, %v1942
      %v2303 = vsub.f32 %v1574, %v1979
      %v2304 = vsub.f32 %v1576, %v2016
      %v2305 = vsub.f32 %v1767, %v2053
      %v2306 = vsub.f32 %v1769, %v2090
      %v2307 = vsub.f32 %v1192, %v1831
      %v2308 = vsub.f32 %v1194, %v1868
      %v2309 = vsub.f32 %v1385, %v1905
      %v2310 = vsub.f32 %v1387, %v1942
      %v2311 = vsub.f32 %v1578, %v1979
      %v2312 = vsub.f32 %v1580, %v2016
      %v2313 = vsub.f32 %v1771, %v2053
      %v2314 = vsub.f32 %v1773, %v2090
      %v2315 = vsub.f32 %v1198, %v1831
      %v2316 = vsub.f32 %v1200, %v1868
      %v2317 = vsub.f32 %v1391, %v1905
      %v2318 = vsub.f32 %v1393, %v1942
      %v2319 = vsub.f32 %v1584, %v1979
      %v2320 = vsub.f32 %v1586, %v2016
      %v2321 = vsub.f32 %v1777, %v2053
      %v2322 = vsub.f32 %v1779, %v2090
      %v2323 = vsub.f32 %v1202, %v1831
      %v2324 = vsub.f32 %v1204, %v1868
      %v2325 = vsub.f32 %v1395, %v1905
      %v2326 = vsub.f32 %v1397, %v1942
      %v2327 = vsub.f32 %v1588, %v1979
      %v2328 = vsub.f32 %v1590, %v2016
      %v2329 = vsub.f32 %v1781, %v2053
      %v2330 = vsub.f32 %v1783, %v2090
      %v2331 = vsub.f32 %v1208, %v1831
      %v2332 = vsub.f32 %v1210, %v1868
      %v2333 = vsub.f32 %v1401, %v1905
      %v2334 = vsub.f32 %v1403, %v1942
      %v2335 = vsub.f32 %v1594, %v1979
      %v2336 = vsub.f32 %v1596, %v2016
      %v2337 = vsub.f32 %v1787, %v2053
      %v2338 = vsub.f32 %v1789, %v2090
      %v2339 = vsub.f32 %v1212, %v1831
      %v2340 = vsub.f32 %v1214, %v1868
      %v2341 = vsub.f32 %v1405, %v1905
      %v2342 = vsub.f32 %v1407, %v1942
      %v2343 = vsub.f32 %v1598, %v1979
      %v2344 = vsub.f32 %v1600, %v2016
      %v2345 = vsub.f32 %v1791, %v2053
      %v2346 = vsub.f32 %v1793, %v2090
      %v2347 = vmul.f32 %v2091, 1.442695
      %v2348 = vpow.pop %v2347
      %v2349 = vmul.f32 %v2092, 1.442695
      %v2350 = vpow.pop %v2349
      %v2351 = vmul.f32 %v2093, 1.442695
      %v2352 = vpow.pop %v2351
      %v2353 = vmul.f32 %v2094, 1.442695
      %v2354 = vpow.pop %v2353
      %v2355 = vmul.f32 %v2095, 1.442695
      %v2356 = vpow.pop %v2355
      %v2357 = vmul.f32 %v2096, 1.442695
      %v2358 = vpow.pop %v2357
      %v2359 = vmul.f32 %v2097, 1.442695
      %v2360 = vpow.pop %v2359
      %v2361 = vmul.f32 %v2098, 1.442695
      %v2362 = vpow.pop %v2361
      %v2363 = vmul.f32 %v2099, 1.442695
      %v2364 = vpow.pop %v2363
      %v2365 = vmul.f32 %v2100, 1.442695
      %v2366 = vpow.pop %v2365
      %v2367 = vmul.f32 %v2101, 1.442695
      %v2368 = vpow.pop %v2367
      %v2369 = vmul.f32 %v2102, 1.442695
      %v2370 = vpow.pop %v2369
      %v2371 = vmul.f32 %v2103, 1.442695
      %v2372 = vpow.pop %v2371
      %v2373 = vmul.f32 %v2104, 1.442695
      %v2374 = vpow.pop %v2373
      %v2375 = vmul.f32 %v2105, 1.442695
      %v2376 = vpow.pop %v2375
      %v2377 = vmul.f32 %v2106, 1.442695
      %v2378 = vpow.pop %v2377
      %v2379 = vmul.f32 %v2107, 1.442695
      %v2380 = vpow.pop %v2379
      %v2381 = vmul.f32 %v2108, 1.442695
      %v2382 = vpow.pop %v2381
      %v2383 = vmul.f32 %v2109, 1.442695
      %v2384 = vpow.pop %v2383
      %v2385 = vmul.f32 %v2110, 1.442695
      %v2386 = vpow.pop %v2385
      %v2387 = vmul.f32 %v2111, 1.442695
      %v2388 = vpow.pop %v2387
      %v2389 = vmul.f32 %v2112, 1.442695
      %v2390 = vpow.pop %v2389
      %v2391 = vmul.f32 %v2113, 1.442695
      %v2392 = vpow.pop %v2391
      %v2393 = vmul.f32 %v2114, 1.442695
      %v2394 = vpow.pop %v2393
      %v2395 = vmul.f32 %v2115, 1.442695
      %v2396 = vpow.pop %v2395
      %v2397 = vmul.f32 %v2116, 1.442695
      %v2398 = vpow.pop %v2397
      %v2399 = vmul.f32 %v2117, 1.442695
      %v2400 = vpow.pop %v2399
      %v2401 = vmul.f32 %v2118, 1.442695
      %v2402 = vpow.pop %v2401
      %v2403 = vmul.f32 %v2119, 1.442695
      %v2404 = vpow.pop %v2403
      %v2405 = vmul.f32 %v2120, 1.442695
      %v2406 = vpow.pop %v2405
      %v2407 = vmul.f32 %v2121, 1.442695
      %v2408 = vpow.pop %v2407
      %v2409 = vmul.f32 %v2122, 1.442695
      %v2410 = vpow.pop %v2409
      %v2411 = vmul.f32 %v2123, 1.442695
      %v2412 = vpow.pop %v2411
      %v2413 = vmul.f32 %v2124, 1.442695
      %v2414 = vpow.pop %v2413
      %v2415 = vmul.f32 %v2125, 1.442695
      %v2416 = vpow.pop %v2415
      %v2417 = vmul.f32 %v2126, 1.442695
      %v2418 = vpow.pop %v2417
      %v2419 = vmul.f32 %v2127, 1.442695
      %v2420 = vpow.pop %v2419
      %v2421 = vmul.f32 %v2128, 1.442695
      %v2422 = vpow.pop %v2421
      %v2423 = vmul.f32 %v2129, 1.442695
      %v2424 = vpow.pop %v2423
      %v2425 = vmul.f32 %v2130, 1.442695
      %v2426 = vpow.pop %v2425
      %v2427 = vmul.f32 %v2131, 1.442695
      %v2428 = vpow.pop %v2427
      %v2429 = vmul.f32 %v2132, 1.442695
      %v2430 = vpow.pop %v2429
      %v2431 = vmul.f32 %v2133, 1.442695
      %v2432 = vpow.pop %v2431
      %v2433 = vmul.f32 %v2134, 1.442695
      %v2434 = vpow.pop %v2433
      %v2435 = vmul.f32 %v2135, 1.442695
      %v2436 = vpow.pop %v2435
      %v2437 = vmul.f32 %v2136, 1.442695
      %v2438 = vpow.pop %v2437
      %v2439 = vmul.f32 %v2137, 1.442695
      %v2440 = vpow.pop %v2439
      %v2441 = vmul.f32 %v2138, 1.442695
      %v2442 = vpow.pop %v2441
      %v2443 = vmul.f32 %v2139, 1.442695
      %v2444 = vpow.pop %v2443
      %v2445 = vmul.f32 %v2140, 1.442695
      %v2446 = vpow.pop %v2445
      %v2447 = vmul.f32 %v2141, 1.442695
      %v2448 = vpow.pop %v2447
      %v2449 = vmul.f32 %v2142, 1.442695
      %v2450 = vpow.pop %v2449
      %v2451 = vmul.f32 %v2143, 1.442695
      %v2452 = vpow.pop %v2451
      %v2453 = vmul.f32 %v2144, 1.442695
      %v2454 = vpow.pop %v2453
      %v2455 = vmul.f32 %v2145, 1.442695
      %v2456 = vpow.pop %v2455
      %v2457 = vmul.f32 %v2146, 1.442695
      %v2458 = vpow.pop %v2457
      %v2459 = vmul.f32 %v2147, 1.442695
      %v2460 = vpow.pop %v2459
      %v2461 = vmul.f32 %v2148, 1.442695
      %v2462 = vpow.pop %v2461
      %v2463 = vmul.f32 %v2149, 1.442695
      %v2464 = vpow.pop %v2463
      %v2465 = vmul.f32 %v2150, 1.442695
      %v2466 = vpow.pop %v2465
      %v2467 = vmul.f32 %v2151, 1.442695
      %v2468 = vpow.pop %v2467
      %v2469 = vmul.f32 %v2152, 1.442695
      %v2470 = vpow.pop %v2469
      %v2471 = vmul.f32 %v2153, 1.442695
      %v2472 = vpow.pop %v2471
      %v2473 = vmul.f32 %v2154, 1.442695
      %v2474 = vpow.pop %v2473
      %v2475 = vmul.f32 %v2155, 1.442695
      %v2476 = vpow.pop %v2475
      %v2477 = vmul.f32 %v2156, 1.442695
      %v2478 = vpow.pop %v2477
      %v2479 = vmul.f32 %v2157, 1.442695
      %v2480 = vpow.pop %v2479
      %v2481 = vmul.f32 %v2158, 1.442695
      %v2482 = vpow.pop %v2481
      %v2483 = vmul.f32 %v2159, 1.442695
      %v2484 = vpow.pop %v2483
      %v2485 = vmul.f32 %v2160, 1.442695
      %v2486 = vpow.pop %v2485
      %v2487 = vmul.f32 %v2161, 1.442695
      %v2488 = vpow.pop %v2487
      %v2489 = vmul.f32 %v2162, 1.442695
      %v2490 = vpow.pop %v2489
      %v2491 = vmul.f32 %v2163, 1.442695
      %v2492 = vpow.pop %v2491
      %v2493 = vmul.f32 %v2164, 1.442695
      %v2494 = vpow.pop %v2493
      %v2495 = vmul.f32 %v2165, 1.442695
      %v2496 = vpow.pop %v2495
      %v2497 = vmul.f32 %v2166, 1.442695
      %v2498 = vpow.pop %v2497
      %v2499 = vmul.f32 %v2167, 1.442695
      %v2500 = vpow.pop %v2499
      %v2501 = vmul.f32 %v2168, 1.442695
      %v2502 = vpow.pop %v2501
      %v2503 = vmul.f32 %v2169, 1.442695
      %v2504 = vpow.pop %v2503
      %v2505 = vmul.f32 %v2170, 1.442695
      %v2506 = vpow.pop %v2505
      %v2507 = vmul.f32 %v2171, 1.442695
      %v2508 = vpow.pop %v2507
      %v2509 = vmul.f32 %v2172, 1.442695
      %v2510 = vpow.pop %v2509
      %v2511 = vmul.f32 %v2173, 1.442695
      %v2512 = vpow.pop %v2511
      %v2513 = vmul.f32 %v2174, 1.442695
      %v2514 = vpow.pop %v2513
      %v2515 = vmul.f32 %v2175, 1.442695
      %v2516 = vpow.pop %v2515
      %v2517 = vmul.f32 %v2176, 1.442695
      %v2518 = vpow.pop %v2517
      %v2519 = vmul.f32 %v2177, 1.442695
      %v2520 = vpow.pop %v2519
      %v2521 = vmul.f32 %v2178, 1.442695
      %v2522 = vpow.pop %v2521
      %v2523 = vmul.f32 %v2179, 1.442695
      %v2524 = vpow.pop %v2523
      %v2525 = vmul.f32 %v2180, 1.442695
      %v2526 = vpow.pop %v2525
      %v2527 = vmul.f32 %v2181, 1.442695
      %v2528 = vpow.pop %v2527
      %v2529 = vmul.f32 %v2182, 1.442695
      %v2530 = vpow.pop %v2529
      %v2531 = vmul.f32 %v2183, 1.442695
      %v2532 = vpow.pop %v2531
      %v2533 = vmul.f32 %v2184, 1.442695
      %v2534 = vpow.pop %v2533
      %v2535 = vmul.f32 %v2185, 1.442695
      %v2536 = vpow.pop %v2535
      %v2537 = vmul.f32 %v2186, 1.442695
      %v2538 = vpow.pop %v2537
      %v2539 = vmul.f32 %v2187, 1.442695
      %v2540 = vpow.pop %v2539
      %v2541 = vmul.f32 %v2188, 1.442695
      %v2542 = vpow.pop %v2541
      %v2543 = vmul.f32 %v2189, 1.442695
      %v2544 = vpow.pop %v2543
      %v2545 = vmul.f32 %v2190, 1.442695
      %v2546 = vpow.pop %v2545
      %v2547 = vmul.f32 %v2191, 1.442695
      %v2548 = vpow.pop %v2547
      %v2549 = vmul.f32 %v2192, 1.442695
      %v2550 = vpow.pop %v2549
      %v2551 = vmul.f32 %v2193, 1.442695
      %v2552 = vpow.pop %v2551
      %v2553 = vmul.f32 %v2194, 1.442695
      %v2554 = vpow.pop %v2553
      %v2555 = vmul.f32 %v2195, 1.442695
      %v2556 = vpow.pop %v2555
      %v2557 = vmul.f32 %v2196, 1.442695
      %v2558 = vpow.pop %v2557
      %v2559 = vmul.f32 %v2197, 1.442695
      %v2560 = vpow.pop %v2559
      %v2561 = vmul.f32 %v2198, 1.442695
      %v2562 = vpow.pop %v2561
      %v2563 = vmul.f32 %v2199, 1.442695
      %v2564 = vpow.pop %v2563
      %v2565 = vmul.f32 %v2200, 1.442695
      %v2566 = vpow.pop %v2565
      %v2567 = vmul.f32 %v2201, 1.442695
      %v2568 = vpow.pop %v2567
      %v2569 = vmul.f32 %v2202, 1.442695
      %v2570 = vpow.pop %v2569
      %v2571 = vmul.f32 %v2203, 1.442695
      %v2572 = vpow.pop %v2571
      %v2573 = vmul.f32 %v2204, 1.442695
      %v2574 = vpow.pop %v2573
      %v2575 = vmul.f32 %v2205, 1.442695
      %v2576 = vpow.pop %v2575
      %v2577 = vmul.f32 %v2206, 1.442695
      %v2578 = vpow.pop %v2577
      %v2579 = vmul.f32 %v2207, 1.442695
      %v2580 = vpow.pop %v2579
      %v2581 = vmul.f32 %v2208, 1.442695
      %v2582 = vpow.pop %v2581
      %v2583 = vmul.f32 %v2209, 1.442695
      %v2584 = vpow.pop %v2583
      %v2585 = vmul.f32 %v2210, 1.442695
      %v2586 = vpow.pop %v2585
      %v2587 = vmul.f32 %v2211, 1.442695
      %v2588 = vpow.pop %v2587
      %v2589 = vmul.f32 %v2212, 1.442695
      %v2590 = vpow.pop %v2589
      %v2591 = vmul.f32 %v2213, 1.442695
      %v2592 = vpow.pop %v2591
      %v2593 = vmul.f32 %v2214, 1.442695
      %v2594 = vpow.pop %v2593
      %v2595 = vmul.f32 %v2215, 1.442695
      %v2596 = vpow.pop %v2595
      %v2597 = vmul.f32 %v2216, 1.442695
      %v2598 = vpow.pop %v2597
      %v2599 = vmul.f32 %v2217, 1.442695
      %v2600 = vpow.pop %v2599
      %v2601 = vmul.f32 %v2218, 1.442695
      %v2602 = vpow.pop %v2601
      %v2603 = vmul.f32 %v2219, 1.442695
      %v2604 = vpow.pop %v2603
      %v2605 = vmul.f32 %v2220, 1.442695
      %v2606 = vpow.pop %v2605
      %v2607 = vmul.f32 %v2221, 1.442695
      %v2608 = vpow.pop %v2607
      %v2609 = vmul.f32 %v2222, 1.442695
      %v2610 = vpow.pop %v2609
      %v2611 = vmul.f32 %v2223, 1.442695
      %v2612 = vpow.pop %v2611
      %v2613 = vmul.f32 %v2224, 1.442695
      %v2614 = vpow.pop %v2613
      %v2615 = vmul.f32 %v2225, 1.442695
      %v2616 = vpow.pop %v2615
      %v2617 = vmul.f32 %v2226, 1.442695
      %v2618 = vpow.pop %v2617
      %v2619 = vmul.f32 %v2227, 1.442695
      %v2620 = vpow.pop %v2619
      %v2621 = vmul.f32 %v2228, 1.442695
      %v2622 = vpow.pop %v2621
      %v2623 = vmul.f32 %v2229, 1.442695
      %v2624 = vpow.pop %v2623
      %v2625 = vmul.f32 %v2230, 1.442695
      %v2626 = vpow.pop %v2625
      %v2627 = vmul.f32 %v2231, 1.442695
      %v2628 = vpow.pop %v2627
      %v2629 = vmul.f32 %v2232, 1.442695
      %v2630 = vpow.pop %v2629
      %v2631 = vmul.f32 %v2233, 1.442695
      %v2632 = vpow.pop %v2631
      %v2633 = vmul.f32 %v2234, 1.442695
      %v2634 = vpow.pop %v2633
      %v2635 = vmul.f32 %v2235, 1.442695
      %v2636 = vpow.pop %v2635
      %v2637 = vmul.f32 %v2236, 1.442695
      %v2638 = vpow.pop %v2637
      %v2639 = vmul.f32 %v2237, 1.442695
      %v2640 = vpow.pop %v2639
      %v2641 = vmul.f32 %v2238, 1.442695
      %v2642 = vpow.pop %v2641
      %v2643 = vmul.f32 %v2239, 1.442695
      %v2644 = vpow.pop %v2643
      %v2645 = vmul.f32 %v2240, 1.442695
      %v2646 = vpow.pop %v2645
      %v2647 = vmul.f32 %v2241, 1.442695
      %v2648 = vpow.pop %v2647
      %v2649 = vmul.f32 %v2242, 1.442695
      %v2650 = vpow.pop %v2649
      %v2651 = vmul.f32 %v2243, 1.442695
      %v2652 = vpow.pop %v2651
      %v2653 = vmul.f32 %v2244, 1.442695
      %v2654 = vpow.pop %v2653
      %v2655 = vmul.f32 %v2245, 1.442695
      %v2656 = vpow.pop %v2655
      %v2657 = vmul.f32 %v2246, 1.442695
      %v2658 = vpow.pop %v2657
      %v2659 = vmul.f32 %v2247, 1.442695
      %v2660 = vpow.pop %v2659
      %v2661 = vmul.f32 %v2248, 1.442695
      %v2662 = vpow.pop %v2661
      %v2663 = vmul.f32 %v2249, 1.442695
      %v2664 = vpow.pop %v2663
      %v2665 = vmul.f32 %v2250, 1.442695
      %v2666 = vpow.pop %v2665
      %v2667 = vmul.f32 %v2251, 1.442695
      %v2668 = vpow.pop %v2667
      %v2669 = vmul.f32 %v2252, 1.442695
      %v2670 = vpow.pop %v2669
      %v2671 = vmul.f32 %v2253, 1.442695
      %v2672 = vpow.pop %v2671
      %v2673 = vmul.f32 %v2254, 1.442695
      %v2674 = vpow.pop %v2673
      %v2675 = vmul.f32 %v2255, 1.442695
      %v2676 = vpow.pop %v2675
      %v2677 = vmul.f32 %v2256, 1.442695
      %v2678 = vpow.pop %v2677
      %v2679 = vmul.f32 %v2257, 1.442695
      %v2680 = vpow.pop %v2679
      %v2681 = vmul.f32 %v2258, 1.442695
      %v2682 = vpow.pop %v2681
      %v2683 = vmul.f32 %v2259, 1.442695
      %v2684 = vpow.pop %v2683
      %v2685 = vmul.f32 %v2260, 1.442695
      %v2686 = vpow.pop %v2685
      %v2687 = vmul.f32 %v2261, 1.442695
      %v2688 = vpow.pop %v2687
      %v2689 = vmul.f32 %v2262, 1.442695
      %v2690 = vpow.pop %v2689
      %v2691 = vmul.f32 %v2263, 1.442695
      %v2692 = vpow.pop %v2691
      %v2693 = vmul.f32 %v2264, 1.442695
      %v2694 = vpow.pop %v2693
      %v2695 = vmul.f32 %v2265, 1.442695
      %v2696 = vpow.pop %v2695
      %v2697 = vmul.f32 %v2266, 1.442695
      %v2698 = vpow.pop %v2697
      %v2699 = vmul.f32 %v2267, 1.442695
      %v2700 = vpow.pop %v2699
      %v2701 = vmul.f32 %v2268, 1.442695
      %v2702 = vpow.pop %v2701
      %v2703 = vmul.f32 %v2269, 1.442695
      %v2704 = vpow.pop %v2703
      %v2705 = vmul.f32 %v2270, 1.442695
      %v2706 = vpow.pop %v2705
      %v2707 = vmul.f32 %v2271, 1.442695
      %v2708 = vpow.pop %v2707
      %v2709 = vmul.f32 %v2272, 1.442695
      %v2710 = vpow.pop %v2709
      %v2711 = vmul.f32 %v2273, 1.442695
      %v2712 = vpow.pop %v2711
      %v2713 = vmul.f32 %v2274, 1.442695
      %v2714 = vpow.pop %v2713
      %v2715 = vmul.f32 %v2275, 1.442695
      %v2716 = vpow.pop %v2715
      %v2717 = vmul.f32 %v2276, 1.442695
      %v2718 = vpow.pop %v2717
      %v2719 = vmul.f32 %v2277, 1.442695
      %v2720 = vpow.pop %v2719
      %v2721 = vmul.f32 %v2278, 1.442695
      %v2722 = vpow.pop %v2721
      %v2723 = vmul.f32 %v2279, 1.442695
      %v2724 = vpow.pop %v2723
      %v2725 = vmul.f32 %v2280, 1.442695
      %v2726 = vpow.pop %v2725
      %v2727 = vmul.f32 %v2281, 1.442695
      %v2728 = vpow.pop %v2727
      %v2729 = vmul.f32 %v2282, 1.442695
      %v2730 = vpow.pop %v2729
      %v2731 = vmul.f32 %v2283, 1.442695
      %v2732 = vpow.pop %v2731
      %v2733 = vmul.f32 %v2284, 1.442695
      %v2734 = vpow.pop %v2733
      %v2735 = vmul.f32 %v2285, 1.442695
      %v2736 = vpow.pop %v2735
      %v2737 = vmul.f32 %v2286, 1.442695
      %v2738 = vpow.pop %v2737
      %v2739 = vmul.f32 %v2287, 1.442695
      %v2740 = vpow.pop %v2739
      %v2741 = vmul.f32 %v2288, 1.442695
      %v2742 = vpow.pop %v2741
      %v2743 = vmul.f32 %v2289, 1.442695
      %v2744 = vpow.pop %v2743
      %v2745 = vmul.f32 %v2290, 1.442695
      %v2746 = vpow.pop %v2745
      %v2747 = vmul.f32 %v2291, 1.442695
      %v2748 = vpow.pop %v2747
      %v2749 = vmul.f32 %v2292, 1.442695
      %v2750 = vpow.pop %v2749
      %v2751 = vmul.f32 %v2293, 1.442695
      %v2752 = vpow.pop %v2751
      %v2753 = vmul.f32 %v2294, 1.442695
      %v2754 = vpow.pop %v2753
      %v2755 = vmul.f32 %v2295, 1.442695
      %v2756 = vpow.pop %v2755
      %v2757 = vmul.f32 %v2296, 1.442695
      %v2758 = vpow.pop %v2757
      %v2759 = vmul.f32 %v2297, 1.442695
      %v2760 = vpow.pop %v2759
      %v2761 = vmul.f32 %v2298, 1.442695
      %v2762 = vpow.pop %v2761
      %v2763 = vmul.f32 %v2299, 1.442695
      %v2764 = vpow.pop %v2763
      %v2765 = vmul.f32 %v2300, 1.442695
      %v2766 = vpow.pop %v2765
      %v2767 = vmul.f32 %v2301, 1.442695
      %v2768 = vpow.pop %v2767
      %v2769 = vmul.f32 %v2302, 1.442695
      %v2770 = vpow.pop %v2769
      %v2771 = vmul.f32 %v2303, 1.442695
      %v2772 = vpow.pop %v2771
      %v2773 = vmul.f32 %v2304, 1.442695
      %v2774 = vpow.pop %v2773
      %v2775 = vmul.f32 %v2305, 1.442695
      %v2776 = vpow.pop %v2775
      %v2777 = vmul.f32 %v2306, 1.442695
      %v2778 = vpow.pop %v2777
      %v2779 = vmul.f32 %v2307, 1.442695
      %v2780 = vpow.pop %v2779
      %v2781 = vmul.f32 %v2308, 1.442695
      %v2782 = vpow.pop %v2781
      %v2783 = vmul.f32 %v2309, 1.442695
      %v2784 = vpow.pop %v2783
      %v2785 = vmul.f32 %v2310, 1.442695
      %v2786 = vpow.pop %v2785
      %v2787 = vmul.f32 %v2311, 1.442695
      %v2788 = vpow.pop %v2787
      %v2789 = vmul.f32 %v2312, 1.442695
      %v2790 = vpow.pop %v2789
      %v2791 = vmul.f32 %v2313, 1.442695
      %v2792 = vpow.pop %v2791
      %v2793 = vmul.f32 %v2314, 1.442695
      %v2794 = vpow.pop %v2793
      %v2795 = vmul.f32 %v2315, 1.442695
      %v2796 = vpow.pop %v2795
      %v2797 = vmul.f32 %v2316, 1.442695
      %v2798 = vpow.pop %v2797
      %v2799 = vmul.f32 %v2317, 1.442695
      %v2800 = vpow.pop %v2799
      %v2801 = vmul.f32 %v2318, 1.442695
      %v2802 = vpow.pop %v2801
      %v2803 = vmul.f32 %v2319, 1.442695
      %v2804 = vpow.pop %v2803
      %v2805 = vmul.f32 %v2320, 1.442695
      %v2806 = vpow.pop %v2805
      %v2807 = vmul.f32 %v2321, 1.442695
      %v2808 = vpow.pop %v2807
      %v2809 = vmul.f32 %v2322, 1.442695
      %v2810 = vpow.pop %v2809
      %v2811 = vmul.f32 %v2323, 1.442695
      %v2812 = vpow.pop %v2811
      %v2813 = vmul.f32 %v2324, 1.442695
      %v2814 = vpow.pop %v2813
      %v2815 = vmul.f32 %v2325, 1.442695
      %v2816 = vpow.pop %v2815
      %v2817 = vmul.f32 %v2326, 1.442695
      %v2818 = vpow.pop %v2817
      %v2819 = vmul.f32 %v2327, 1.442695
      %v2820 = vpow.pop %v2819
      %v2821 = vmul.f32 %v2328, 1.442695
      %v2822 = vpow.pop %v2821
      %v2823 = vmul.f32 %v2329, 1.442695
      %v2824 = vpow.pop %v2823
      %v2825 = vmul.f32 %v2330, 1.442695
      %v2826 = vpow.pop %v2825
      %v2827 = vmul.f32 %v2331, 1.442695
      %v2828 = vpow.pop %v2827
      %v2829 = vmul.f32 %v2332, 1.442695
      %v2830 = vpow.pop %v2829
      %v2831 = vmul.f32 %v2333, 1.442695
      %v2832 = vpow.pop %v2831
      %v2833 = vmul.f32 %v2334, 1.442695
      %v2834 = vpow.pop %v2833
      %v2835 = vmul.f32 %v2335, 1.442695
      %v2836 = vpow.pop %v2835
      %v2837 = vmul.f32 %v2336, 1.442695
      %v2838 = vpow.pop %v2837
      %v2839 = vmul.f32 %v2337, 1.442695
      %v2840 = vpow.pop %v2839
      %v2841 = vmul.f32 %v2338, 1.442695
      %v2842 = vpow.pop %v2841
      %v2843 = vmul.f32 %v2339, 1.442695
      %v2844 = vpow.pop %v2843
      %v2845 = vmul.f32 %v2340, 1.442695
      %v2846 = vpow.pop %v2845
      %v2847 = vmul.f32 %v2341, 1.442695
      %v2848 = vpow.pop %v2847
      %v2849 = vmul.f32 %v2342, 1.442695
      %v2850 = vpow.pop %v2849
      %v2851 = vmul.f32 %v2343, 1.442695
      %v2852 = vpow.pop %v2851
      %v2853 = vmul.f32 %v2344, 1.442695
      %v2854 = vpow.pop %v2853
      %v2855 = vmul.f32 %v2345, 1.442695
      %v2856 = vpow.pop %v2855
      %v2857 = vmul.f32 %v2346, 1.442695
      %v2858 = vpow.pop %v2857
      %v2859 = vadd.f32 %v2348, %v2364
      %v2860 = vadd.f32 %v2859, %v2380
      %v2861 = vadd.f32 %v2860, %v2396
      %v2862 = vadd.f32 %v2861, %v2412
      %v2863 = vadd.f32 %v2862, %v2428
      %v2864 = vadd.f32 %v2863, %v2444
      %v2865 = vadd.f32 %v2864, %v2460
      %v2866 = vadd.f32 %v2865, %v2476
      %v2867 = vadd.f32 %v2866, %v2492
      %v2868 = vadd.f32 %v2867, %v2508
      %v2869 = vadd.f32 %v2868, %v2524
      %v2870 = vadd.f32 %v2869, %v2540
      %v2871 = vadd.f32 %v2870, %v2556
      %v2872 = vadd.f32 %v2871, %v2572
      %v2873 = vadd.f32 %v2872, %v2588
      %v2874 = vadd.f32 %v2873, %v2604
      %v2875 = vadd.f32 %v2874, %v2620
      %v2876 = vadd.f32 %v2875, %v2636
      %v2877 = vadd.f32 %v2876, %v2652
      %v2878 = vadd.f32 %v2877, %v2668
      %v2879 = vadd.f32 %v2878, %v2684
      %v2880 = vadd.f32 %v2879, %v2700
      %v2881 = vadd.f32 %v2880, %v2716
      %v2882 = vadd.f32 %v2881, %v2732
      %v2883 = vadd.f32 %v2882, %v2748
      %v2884 = vadd.f32 %v2883, %v2764
      %v2885 = vadd.f32 %v2884, %v2780
      %v2886 = vadd.f32 %v2885, %v2796
      %v2887 = vadd.f32 %v2886, %v2812
      %v2888 = vadd.f32 %v2887, %v2828
      %v2889 = vadd.f32 %v2888, %v2844
      %v2890 = vrot.slane %v2889, 4
      %v2891 = vadd.f32 %v2889, %v2890
      %v2892 = vrot.slane %v2891, 2
      %v2893 = vadd.f32 %v2891, %v2892
      %v2894 = vrot.slane %v2893, 1
      %v2895 = vadd.f32 %v2893, %v2894
      %v2896 = vadd.f32 %v2350, %v2366
      %v2897 = vadd.f32 %v2896, %v2382
      %v2898 = vadd.f32 %v2897, %v2398
      %v2899 = vadd.f32 %v2898, %v2414
      %v2900 = vadd.f32 %v2899, %v2430
      %v2901 = vadd.f32 %v2900, %v2446
      %v2902 = vadd.f32 %v2901, %v2462
      %v2903 = vadd.f32 %v2902, %v2478
      %v2904 = vadd.f32 %v2903, %v2494
      %v2905 = vadd.f32 %v2904, %v2510
      %v2906 = vadd.f32 %v2905, %v2526
      %v2907 = vadd.f32 %v2906, %v2542
      %v2908 = vadd.f32 %v2907, %v2558
      %v2909 = vadd.f32 %v2908, %v2574
      %v2910 = vadd.f32 %v2909, %v2590
      %v2911 = vadd.f32 %v2910, %v2606
      %v2912 = vadd.f32 %v2911, %v2622
      %v2913 = vadd.f32 %v2912, %v2638
      %v2914 = vadd.f32 %v2913, %v2654
      %v2915 = vadd.f32 %v2914, %v2670
      %v2916 = vadd.f32 %v2915, %v2686
      %v2917 = vadd.f32 %v2916, %v2702
      %v2918 = vadd.f32 %v2917, %v2718
      %v2919 = vadd.f32 %v2918, %v2734
      %v2920 = vadd.f32 %v2919, %v2750
      %v2921 = vadd.f32 %v2920, %v2766
      %v2922 = vadd.f32 %v2921, %v2782
      %v2923 = vadd.f32 %v2922, %v2798
      %v2924 = vadd.f32 %v2923, %v2814
      %v2925 = vadd.f32 %v2924, %v2830
      %v2926 = vadd.f32 %v2925, %v2846
      %v2927 = vrot.slane %v2926, 4
      %v2928 = vadd.f32 %v2926, %v2927
      %v2929 = vrot.slane %v2928, 2
      %v2930 = vadd.f32 %v2928, %v2929
      %v2931 = vrot.slane %v2930, 1
      %v2932 = vadd.f32 %v2930, %v2931
      %v2933 = vadd.f32 %v2352, %v2368
      %v2934 = vadd.f32 %v2933, %v2384
      %v2935 = vadd.f32 %v2934, %v2400
      %v2936 = vadd.f32 %v2935, %v2416
      %v2937 = vadd.f32 %v2936, %v2432
      %v2938 = vadd.f32 %v2937, %v2448
      %v2939 = vadd.f32 %v2938, %v2464
      %v2940 = vadd.f32 %v2939, %v2480
      %v2941 = vadd.f32 %v2940, %v2496
      %v2942 = vadd.f32 %v2941, %v2512
      %v2943 = vadd.f32 %v2942, %v2528
      %v2944 = vadd.f32 %v2943, %v2544
      %v2945 = vadd.f32 %v2944, %v2560
      %v2946 = vadd.f32 %v2945, %v2576
      %v2947 = vadd.f32 %v2946, %v2592
      %v2948 = vadd.f32 %v2947, %v2608
      %v2949 = vadd.f32 %v2948, %v2624
      %v2950 = vadd.f32 %v2949, %v2640
      %v2951 = vadd.f32 %v2950, %v2656
      %v2952 = vadd.f32 %v2951, %v2672
      %v2953 = vadd.f32 %v2952, %v2688
      %v2954 = vadd.f32 %v2953, %v2704
      %v2955 = vadd.f32 %v2954, %v2720
      %v2956 = vadd.f32 %v2955, %v2736
      %v2957 = vadd.f32 %v2956, %v2752
      %v2958 = vadd.f32 %v2957, %v2768
      %v2959 = vadd.f32 %v2958, %v2784
      %v2960 = vadd.f32 %v2959, %v2800
      %v2961 = vadd.f32 %v2960, %v2816
      %v2962 = vadd.f32 %v2961, %v2832
      %v2963 = vadd.f32 %v2962, %v2848
      %v2964 = vrot.slane %v2963, 4
      %v2965 = vadd.f32 %v2963, %v2964
      %v2966 = vrot.slane %v2965, 2
      %v2967 = vadd.f32 %v2965, %v2966
      %v2968 = vrot.slane %v2967, 1
      %v2969 = vadd.f32 %v2967, %v2968
      %v2970 = vadd.f32 %v2354, %v2370
      %v2971 = vadd.f32 %v2970, %v2386
      %v2972 = vadd.f32 %v2971, %v2402
      %v2973 = vadd.f32 %v2972, %v2418
      %v2974 = vadd.f32 %v2973, %v2434
      %v2975 = vadd.f32 %v2974, %v2450
      %v2976 = vadd.f32 %v2975, %v2466
      %v2977 = vadd.f32 %v2976, %v2482
      %v2978 = vadd.f32 %v2977, %v2498
      %v2979 = vadd.f32 %v2978, %v2514
      %v2980 = vadd.f32 %v2979, %v2530
      %v2981 = vadd.f32 %v2980, %v2546
      %v2982 = vadd.f32 %v2981, %v2562
      %v2983 = vadd.f32 %v2982, %v2578
      %v2984 = vadd.f32 %v2983, %v2594
      %v2985 = vadd.f32 %v2984, %v2610
      %v2986 = vadd.f32 %v2985, %v2626
      %v2987 = vadd.f32 %v2986, %v2642
      %v2988 = vadd.f32 %v2987, %v2658
      %v2989 = vadd.f32 %v2988, %v2674
      %v2990 = vadd.f32 %v2989, %v2690
      %v2991 = vadd.f32 %v2990, %v2706
      %v2992 = vadd.f32 %v2991, %v2722
      %v2993 = vadd.f32 %v2992, %v2738
      %v2994 = vadd.f32 %v2993, %v2754
      %v2995 = vadd.f32 %v2994, %v2770
      %v2996 = vadd.f32 %v2995, %v2786
      %v2997 = vadd.f32 %v2996, %v2802
      %v2998 = vadd.f32 %v2997, %v2818
      %v2999 = vadd.f32 %v2998, %v2834
      %v3000 = vadd.f32 %v2999, %v2850
      %v3001 = vrot.slane %v3000, 4
      %v3002 = vadd.f32 %v3000, %v3001
      %v3003 = vrot.slane %v3002, 2
      %v3004 = vadd.f32 %v3002, %v3003
      %v3005 = vrot.slane %v3004, 1
      %v3006 = vadd.f32 %v3004, %v3005
      %v3007 = vadd.f32 %v2356, %v2372
      %v3008 = vadd.f32 %v3007, %v2388
      %v3009 = vadd.f32 %v3008, %v2404
      %v3010 = vadd.f32 %v3009, %v2420
      %v3011 = vadd.f32 %v3010, %v2436
      %v3012 = vadd.f32 %v3011, %v2452
      %v3013 = vadd.f32 %v3012, %v2468
      %v3014 = vadd.f32 %v3013, %v2484
      %v3015 = vadd.f32 %v3014, %v2500
      %v3016 = vadd.f32 %v3015, %v2516
      %v3017 = vadd.f32 %v3016, %v2532
      %v3018 = vadd.f32 %v3017, %v2548
      %v3019 = vadd.f32 %v3018, %v2564
      %v3020 = vadd.f32 %v3019, %v2580
      %v3021 = vadd.f32 %v3020, %v2596
      %v3022 = vadd.f32 %v3021, %v2612
      %v3023 = vadd.f32 %v3022, %v2628
      %v3024 = vadd.f32 %v3023, %v2644
      %v3025 = vadd.f32 %v3024, %v2660
      %v3026 = vadd.f32 %v3025, %v2676
      %v3027 = vadd.f32 %v3026, %v2692
      %v3028 = vadd.f32 %v3027, %v2708
      %v3029 = vadd.f32 %v3028, %v2724
      %v3030 = vadd.f32 %v3029, %v2740
      %v3031 = vadd.f32 %v3030, %v2756
      %v3032 = vadd.f32 %v3031, %v2772
      %v3033 = vadd.f32 %v3032, %v2788
      %v3034 = vadd.f32 %v3033, %v2804
      %v3035 = vadd.f32 %v3034, %v2820
      %v3036 = vadd.f32 %v3035, %v2836
      %v3037 = vadd.f32 %v3036, %v2852
      %v3038 = vrot.slane %v3037, 4
      %v3039 = vadd.f32 %v3037, %v3038
      %v3040 = vrot.slane %v3039, 2
      %v3041 = vadd.f32 %v3039, %v3040
      %v3042 = vrot.slane %v3041, 1
      %v3043 = vadd.f32 %v3041, %v3042
      %v3044 = vadd.f32 %v2358, %v2374
      %v3045 = vadd.f32 %v3044, %v2390
      %v3046 = vadd.f32 %v3045, %v2406
      %v3047 = vadd.f32 %v3046, %v2422
      %v3048 = vadd.f32 %v3047, %v2438
      %v3049 = vadd.f32 %v3048, %v2454
      %v3050 = vadd.f32 %v3049, %v2470
      %v3051 = vadd.f32 %v3050, %v2486
      %v3052 = vadd.f32 %v3051, %v2502
      %v3053 = vadd.f32 %v3052, %v2518
      %v3054 = vadd.f32 %v3053, %v2534
      %v3055 = vadd.f32 %v3054, %v2550
      %v3056 = vadd.f32 %v3055, %v2566
      %v3057 = vadd.f32 %v3056, %v2582
      %v3058 = vadd.f32 %v3057, %v2598
      %v3059 = vadd.f32 %v3058, %v2614
      %v3060 = vadd.f32 %v3059, %v2630
      %v3061 = vadd.f32 %v3060, %v2646
      %v3062 = vadd.f32 %v3061, %v2662
      %v3063 = vadd.f32 %v3062, %v2678
      %v3064 = vadd.f32 %v3063, %v2694
      %v3065 = vadd.f32 %v3064, %v2710
      %v3066 = vadd.f32 %v3065, %v2726
      %v3067 = vadd.f32 %v3066, %v2742
      %v3068 = vadd.f32 %v3067, %v2758
      %v3069 = vadd.f32 %v3068, %v2774
      %v3070 = vadd.f32 %v3069, %v2790
      %v3071 = vadd.f32 %v3070, %v2806
      %v3072 = vadd.f32 %v3071, %v2822
      %v3073 = vadd.f32 %v3072, %v2838
      %v3074 = vadd.f32 %v3073, %v2854
      %v3075 = vrot.slane %v3074, 4
      %v3076 = vadd.f32 %v3074, %v3075
      %v3077 = vrot.slane %v3076, 2
      %v3078 = vadd.f32 %v3076, %v3077
      %v3079 = vrot.slane %v3078, 1
      %v3080 = vadd.f32 %v3078, %v3079
      %v3081 = vadd.f32 %v2360, %v2376
      %v3082 = vadd.f32 %v3081, %v2392
      %v3083 = vadd.f32 %v3082, %v2408
      %v3084 = vadd.f32 %v3083, %v2424
      %v3085 = vadd.f32 %v3084, %v2440
      %v3086 = vadd.f32 %v3085, %v2456
      %v3087 = vadd.f32 %v3086, %v2472
      %v3088 = vadd.f32 %v3087, %v2488
      %v3089 = vadd.f32 %v3088, %v2504
      %v3090 = vadd.f32 %v3089, %v2520
      %v3091 = vadd.f32 %v3090, %v2536
      %v3092 = vadd.f32 %v3091, %v2552
      %v3093 = vadd.f32 %v3092, %v2568
      %v3094 = vadd.f32 %v3093, %v2584
      %v3095 = vadd.f32 %v3094, %v2600
      %v3096 = vadd.f32 %v3095, %v2616
      %v3097 = vadd.f32 %v3096, %v2632
      %v3098 = vadd.f32 %v3097, %v2648
      %v3099 = vadd.f32 %v3098, %v2664
      %v3100 = vadd.f32 %v3099, %v2680
      %v3101 = vadd.f32 %v3100, %v2696
      %v3102 = vadd.f32 %v3101, %v2712
      %v3103 = vadd.f32 %v3102, %v2728
      %v3104 = vadd.f32 %v3103, %v2744
      %v3105 = vadd.f32 %v3104, %v2760
      %v3106 = vadd.f32 %v3105, %v2776
      %v3107 = vadd.f32 %v3106, %v2792
      %v3108 = vadd.f32 %v3107, %v2808
      %v3109 = vadd.f32 %v3108, %v2824
      %v3110 = vadd.f32 %v3109, %v2840
      %v3111 = vadd.f32 %v3110, %v2856
      %v3112 = vrot.slane %v3111, 4
      %v3113 = vadd.f32 %v3111, %v3112
      %v3114 = vrot.slane %v3113, 2
      %v3115 = vadd.f32 %v3113, %v3114
      %v3116 = vrot.slane %v3115, 1
      %v3117 = vadd.f32 %v3115, %v3116
      %v3118 = vadd.f32 %v2362, %v2378
      %v3119 = vadd.f32 %v3118, %v2394
      %v3120 = vadd.f32 %v3119, %v2410
      %v3121 = vadd.f32 %v3120, %v2426
      %v3122 = vadd.f32 %v3121, %v2442
      %v3123 = vadd.f32 %v3122, %v2458
      %v3124 = vadd.f32 %v3123, %v2474
      %v3125 = vadd.f32 %v3124, %v2490
      %v3126 = vadd.f32 %v3125, %v2506
      %v3127 = vadd.f32 %v3126, %v2522
      %v3128 = vadd.f32 %v3127, %v2538
      %v3129 = vadd.f32 %v3128, %v2554
      %v3130 = vadd.f32 %v3129, %v2570
      %v3131 = vadd.f32 %v3130, %v2586
      %v3132 = vadd.f32 %v3131, %v2602
      %v3133 = vadd.f32 %v3132, %v2618
      %v3134 = vadd.f32 %v3133, %v2634
      %v3135 = vadd.f32 %v3134, %v2650
      %v3136 = vadd.f32 %v3135, %v2666
      %v3137 = vadd.f32 %v3136, %v2682
      %v3138 = vadd.f32 %v3137, %v2698
      %v3139 = vadd.f32 %v3138, %v2714
      %v3140 = vadd.f32 %v3139, %v2730
      %v3141 = vadd.f32 %v3140, %v2746
      %v3142 = vadd.f32 %v3141, %v2762
      %v3143 = vadd.f32 %v3142, %v2778
      %v3144 = vadd.f32 %v3143, %v2794
      %v3145 = vadd.f32 %v3144, %v2810
      %v3146 = vadd.f32 %v3145, %v2826
      %v3147 = vadd.f32 %v3146, %v2842
      %v3148 = vadd.f32 %v3147, %v2858
      %v3149 = vrot.slane %v3148, 4
      %v3150 = vadd.f32 %v3148, %v3149
      %v3151 = vrot.slane %v3150, 2
      %v3152 = vadd.f32 %v3150, %v3151
      %v3153 = vrot.slane %v3152, 1
      %v3154 = vadd.f32 %v3152, %v3153
      %v3155 = vpack.c.bf16 %v869, %v865
      %v3156 = vpack.c.bf16 %v871, %v867
      %v3157 = vpack.c.bf16 %v879, %v875
      %v3158 = vpack.c.bf16 %v881, %v877
      %v3159 = vpack.c.bf16 %v889, %v885
      %v3160 = vpack.c.bf16 %v891, %v887
      %v3161 = vpack.c.bf16 %v899, %v895
      %v3162 = vpack.c.bf16 %v901, %v897
      %v3163 = vpack.c.bf16 %v2364, %v2348
      %v3164 = vpack.c.bf16 %v2366, %v2350
      %v3165 = vpack.c.bf16 %v2368, %v2352
      %v3166 = vpack.c.bf16 %v2370, %v2354
      %v3167 = vpack.c.bf16 %v2372, %v2356
      %v3168 = vpack.c.bf16 %v2374, %v2358
      %v3169 = vpack.c.bf16 %v2376, %v2360
      %v3170 = vpack.c.bf16 %v2378, %v2362
      %v3171 = vpack.c.bf16 %v2396, %v2380
      %v3172 = vpack.c.bf16 %v2398, %v2382
      %v3173 = vpack.c.bf16 %v2400, %v2384
      %v3174 = vpack.c.bf16 %v2402, %v2386
      %v3175 = vpack.c.bf16 %v2404, %v2388
      %v3176 = vpack.c.bf16 %v2406, %v2390
      %v3177 = vpack.c.bf16 %v2408, %v2392
      %v3178 = vpack.c.bf16 %v2410, %v2394
      %v3179 = vpack.c.bf16 %v2428, %v2412
      %v3180 = vpack.c.bf16 %v2430, %v2414
      %v3181 = vpack.c.bf16 %v2432, %v2416
      %v3182 = vpack.c.bf16 %v2434, %v2418
      %v3183 = vpack.c.bf16 %v2436, %v2420
      %v3184 = vpack.c.bf16 %v2438, %v2422
      %v3185 = vpack.c.bf16 %v2440, %v2424
      %v3186 = vpack.c.bf16 %v2442, %v2426
      %v3187 = vpack.c.bf16 %v2460, %v2444
      %v3188 = vpack.c.bf16 %v2462, %v2446
      %v3189 = vpack.c.bf16 %v2464, %v2448
      %v3190 = vpack.c.bf16 %v2466, %v2450
      %v3191 = vpack.c.bf16 %v2468, %v2452
      %v3192 = vpack.c.bf16 %v2470, %v2454
      %v3193 = vpack.c.bf16 %v2472, %v2456
      %v3194 = vpack.c.bf16 %v2474, %v2458
      %v3195 = vpack.c.bf16 %v2492, %v2476
      %v3196 = vpack.c.bf16 %v2494, %v2478
      %v3197 = vpack.c.bf16 %v2496, %v2480
      %v3198 = vpack.c.bf16 %v2498, %v2482
      %v3199 = vpack.c.bf16 %v2500, %v2484
      %v3200 = vpack.c.bf16 %v2502, %v2486
      %v3201 = vpack.c.bf16 %v2504, %v2488
      %v3202 = vpack.c.bf16 %v2506, %v2490
      %v3203 = vpack.c.bf16 %v2524, %v2508
      %v3204 = vpack.c.bf16 %v2526, %v2510
      %v3205 = vpack.c.bf16 %v2528, %v2512
      %v3206 = vpack.c.bf16 %v2530, %v2514
      %v3207 = vpack.c.bf16 %v2532, %v2516
      %v3208 = vpack.c.bf16 %v2534, %v2518
      %v3209 = vpack.c.bf16 %v2536, %v2520
      %v3210 = vpack.c.bf16 %v2538, %v2522
      %v3211 = vpack.c.bf16 %v2556, %v2540
      %v3212 = vpack.c.bf16 %v2558, %v2542
      %v3213 = vpack.c.bf16 %v2560, %v2544
      %v3214 = vpack.c.bf16 %v2562, %v2546
      %v3215 = vpack.c.bf16 %v2564, %v2548
      %v3216 = vpack.c.bf16 %v2566, %v2550
      %v3217 = vpack.c.bf16 %v2568, %v2552
      %v3218 = vpack.c.bf16 %v2570, %v2554
      %v3219 = vpack.c.bf16 %v2588, %v2572
      %v3220 = vpack.c.bf16 %v2590, %v2574
      %v3221 = vpack.c.bf16 %v2592, %v2576
      %v3222 = vpack.c.bf16 %v2594, %v2578
      %v3223 = vpack.c.bf16 %v2596, %v2580
      %v3224 = vpack.c.bf16 %v2598, %v2582
      %v3225 = vpack.c.bf16 %v2600, %v2584
      %v3226 = vpack.c.bf16 %v2602, %v2586
      %v3227 = vpack.c.bf16 %v2620, %v2604
      %v3228 = vpack.c.bf16 %v2622, %v2606
      %v3229 = vpack.c.bf16 %v2624, %v2608
      %v3230 = vpack.c.bf16 %v2626, %v2610
      %v3231 = vpack.c.bf16 %v2628, %v2612
      %v3232 = vpack.c.bf16 %v2630, %v2614
      %v3233 = vpack.c.bf16 %v2632, %v2616
      %v3234 = vpack.c.bf16 %v2634, %v2618
      %v3235 = vpack.c.bf16 %v2652, %v2636
      %v3236 = vpack.c.bf16 %v2654, %v2638
      %v3237 = vpack.c.bf16 %v2656, %v2640
      %v3238 = vpack.c.bf16 %v2658, %v2642
      %v3239 = vpack.c.bf16 %v2660, %v2644
      %v3240 = vpack.c.bf16 %v2662, %v2646
      %v3241 = vpack.c.bf16 %v2664, %v2648
      %v3242 = vpack.c.bf16 %v2666, %v2650
      %v3243 = vpack.c.bf16 %v2684, %v2668
      %v3244 = vpack.c.bf16 %v2686, %v2670
      %v3245 = vpack.c.bf16 %v2688, %v2672
      %v3246 = vpack.c.bf16 %v2690, %v2674
      %v3247 = vpack.c.bf16 %v2692, %v2676
      %v3248 = vpack.c.bf16 %v2694, %v2678
      %v3249 = vpack.c.bf16 %v2696, %v2680
      %v3250 = vpack.c.bf16 %v2698, %v2682
      %v3251 = vpack.c.bf16 %v2716, %v2700
      %v3252 = vpack.c.bf16 %v2718, %v2702
      %v3253 = vpack.c.bf16 %v2720, %v2704
      %v3254 = vpack.c.bf16 %v2722, %v2706
      %v3255 = vpack.c.bf16 %v2724, %v2708
      %v3256 = vpack.c.bf16 %v2726, %v2710
      %v3257 = vpack.c.bf16 %v2728, %v2712
      %v3258 = vpack.c.bf16 %v2730, %v2714
      %v3259 = vpack.c.bf16 %v2748, %v2732
      %v3260 = vpack.c.bf16 %v2750, %v2734
      %v3261 = vpack.c.bf16 %v2752, %v2736
      %v3262 = vpack.c.bf16 %v2754, %v2738
      %v3263 = vpack.c.bf16 %v2756, %v2740
      %v3264 = vpack.c.bf16 %v2758, %v2742
      %v3265 = vpack.c.bf16 %v2760, %v2744
      %v3266 = vpack.c.bf16 %v2762, %v2746
      %v3267 = vpack.c.bf16 %v2780, %v2764
      %v3268 = vpack.c.bf16 %v2782, %v2766
      %v3269 = vpack.c.bf16 %v2784, %v2768
      %v3270 = vpack.c.bf16 %v2786, %v2770
      %v3271 = vpack.c.bf16 %v2788, %v2772
      %v3272 = vpack.c.bf16 %v2790, %v2774
      %v3273 = vpack.c.bf16 %v2792, %v2776
      %v3274 = vpack.c.bf16 %v2794, %v2778
      %v3275 = vpack.c.bf16 %v2812, %v2796
      %v3276 = vpack.c.bf16 %v2814, %v2798
      %v3277 = vpack.c.bf16 %v2816, %v2800
      %v3278 = vpack.c.bf16 %v2818, %v2802
      %v3279 = vpack.c.bf16 %v2820, %v2804
      %v3280 = vpack.c.bf16 %v2822, %v2806
      %v3281 = vpack.c.bf16 %v2824, %v2808
      %v3282 = vpack.c.bf16 %v2826, %v2810
      %v3283 = vpack.c.bf16 %v2844, %v2828
      %v3284 = vpack.c.bf16 %v2846, %v2830
      %v3285 = vpack.c.bf16 %v2848, %v2832
      %v3286 = vpack.c.bf16 %v2850, %v2834
      %v3287 = vpack.c.bf16 %v2852, %v2836
      %v3288 = vpack.c.bf16 %v2854, %v2838
      %v3289 = vpack.c.bf16 %v2856, %v2840
      %v3290 = vpack.c.bf16 %v2858, %v2842
      %3291 = vmatprep.subr.bf16.mxu0 %v3164
      %3292 = vmatpush1.bf16.msra.mxu0 %v3163
      %3293 = vmatprep.subr.bf16.mxu0 %v3172
      %3294 = vmatpush1.bf16.msra.mxu0 %v3171
      %3295 = vmatprep.subr.bf16.mxu0 %v3180
      %3296 = vmatpush1.bf16.msra.mxu0 %v3179
      %3297 = vmatprep.subr.bf16.mxu0 %v3188
      %3298 = vmatpush1.bf16.msra.mxu0 %v3187
      %3299 = vmatprep.subr.bf16.mxu0 %v3196
      %3300 = vmatpush1.bf16.msra.mxu0 %v3195
      %3301 = vmatprep.subr.bf16.mxu0 %v3204
      %3302 = vmatpush1.bf16.msra.mxu0 %v3203
      %3303 = vmatprep.subr.bf16.mxu0 %v3212
      %3304 = vmatpush1.bf16.msra.mxu0 %v3211
      %3305 = vmatprep.subr.bf16.mxu0 %v3220
      %3306 = vmatpush1.bf16.msra.mxu0 %v3219
      %3307 = vmatprep.subr.bf16.mxu0 %v3228
      %3308 = vmatpush1.bf16.msra.mxu0 %v3227
      %3309 = vmatprep.subr.bf16.mxu0 %v3236
      %3310 = vmatpush1.bf16.msra.mxu0 %v3235
      %3311 = vmatprep.subr.bf16.mxu0 %v3244
      %3312 = vmatpush1.bf16.msra.mxu0 %v3243
      %3313 = vmatprep.subr.bf16.mxu0 %v3252
      %3314 = vmatpush1.bf16.msra.mxu0 %v3251
      %3315 = vmatprep.subr.bf16.mxu0 %v3260
      %3316 = vmatpush1.bf16.msra.mxu0 %v3259
      %3317 = vmatprep.subr.bf16.mxu0 %v3268
      %3318 = vmatpush1.bf16.msra.mxu0 %v3267
      %3319 = vmatprep.subr.bf16.mxu0 %v3276
      %3320 = vmatpush1.bf16.msra.mxu0 %v3275
      %3321 = vmatprep.subr.bf16.mxu0 %v3284
      %3322 = vmatpush1.bf16.msra.mxu0 %v3283
      %3323 = vmatprep.mubr.bf16.mxu0 %v3156
      %3324 = vmatmul.mubr.bf16.gmra.mrb[0].mxu0 %v3155
      %v3325 = vpop.f32.mrb[0].mxu0
      %v3326 = vadd.f32 0.0, %v3325
      %v3327 = vpop.f32.mrb[0].mxu0
      %v3328 = vadd.f32 0.0, %v3327
      %v3329 = vpop.f32.mrb[0].mxu0
      %v3330 = vadd.f32 0.0, %v3329
      %v3331 = vpop.f32.mrb[0].mxu0
      %v3332 = vadd.f32 0.0, %v3331
      %3333 = vmatprep.mubr.bf16.mxu0 %v3158
      %3334 = vmatmul.mubr.bf16.gmra.mrb[0].mxu0 %v3157
      %v3335 = vpop.f32.mrb[0].mxu0
      %v3336 = vadd.f32 0.0, %v3335
      %v3337 = vpop.f32.mrb[0].mxu0
      %v3338 = vadd.f32 0.0, %v3337
      %v3339 = vpop.f32.mrb[0].mxu0
      %v3340 = vadd.f32 0.0, %v3339
      %v3341 = vpop.f32.mrb[0].mxu0
      %v3342 = vadd.f32 0.0, %v3341
      %3343 = vmatprep.mubr.bf16.mxu0 %v3160
      %3344 = vmatmul.mubr.bf16.gmra.mrb[0].mxu0 %v3159
      %v3345 = vpop.f32.mrb[0].mxu0
      %v3346 = vadd.f32 0.0, %v3345
      %v3347 = vpop.f32.mrb[0].mxu0
      %v3348 = vadd.f32 0.0, %v3347
      %v3349 = vpop.f32.mrb[0].mxu0
      %v3350 = vadd.f32 0.0, %v3349
      %v3351 = vpop.f32.mrb[0].mxu0
      %v3352 = vadd.f32 0.0, %v3351
      %3353 = vmatprep.mubr.bf16.mxu0 %v3162
      %3354 = vmatmul.mubr.bf16.gmra.mrb[0].mxu0 %v3161
      %v3355 = vpop.f32.mrb[0].mxu0
      %v3356 = vadd.f32 0.0, %v3355
      %v3357 = vpop.f32.mrb[0].mxu0
      %v3358 = vadd.f32 0.0, %v3357
      %v3359 = vpop.f32.mrb[0].mxu0
      %v3360 = vadd.f32 0.0, %v3359
      %v3361 = vpop.f32.mrb[0].mxu0
      %v3362 = vadd.f32 0.0, %v3361
      %3363 = vdwg.mxu0
      %3364 = vmatprep.subr.bf16.mxu0 %v3166
      %3365 = vmatpush1.bf16.msra.mxu0 %v3165
      %3366 = vmatprep.subr.bf16.mxu0 %v3174
      %3367 = vmatpush1.bf16.msra.mxu0 %v3173
      %3368 = vmatprep.subr.bf16.mxu0 %v3182
      %3369 = vmatpush1.bf16.msra.mxu0 %v3181
      %3370 = vmatprep.subr.bf16.mxu0 %v3190
      %3371 = vmatpush1.bf16.msra.mxu0 %v3189
      %3372 = vmatprep.subr.bf16.mxu0 %v3198
      %3373 = vmatpush1.bf16.msra.mxu0 %v3197
      %3374 = vmatprep.subr.bf16.mxu0 %v3206
      %3375 = vmatpush1.bf16.msra.mxu0 %v3205
      %3376 = vmatprep.subr.bf16.mxu0 %v3214
      %3377 = vmatpush1.bf16.msra.mxu0 %v3213
      %3378 = vmatprep.subr.bf16.mxu0 %v3222
      %3379 = vmatpush1.bf16.msra.mxu0 %v3221
      %3380 = vmatprep.subr.bf16.mxu0 %v3230
      %3381 = vmatpush1.bf16.msra.mxu0 %v3229
      %3382 = vmatprep.subr.bf16.mxu0 %v3238
      %3383 = vmatpush1.bf16.msra.mxu0 %v3237
      %3384 = vmatprep.subr.bf16.mxu0 %v3246
      %3385 = vmatpush1.bf16.msra.mxu0 %v3245
      %3386 = vmatprep.subr.bf16.mxu0 %v3254
      %3387 = vmatpush1.bf16.msra.mxu0 %v3253
      %3388 = vmatprep.subr.bf16.mxu0 %v3262
      %3389 = vmatpush1.bf16.msra.mxu0 %v3261
      %3390 = vmatprep.subr.bf16.mxu0 %v3270
      %3391 = vmatpush1.bf16.msra.mxu0 %v3269
      %3392 = vmatprep.subr.bf16.mxu0 %v3278
      %3393 = vmatpush1.bf16.msra.mxu0 %v3277
      %3394 = vmatprep.subr.bf16.mxu0 %v3286
      %3395 = vmatpush1.bf16.msra.mxu0 %v3285
      %3396 = vmatprep.mubr.bf16.mxu0 %v3156
      %3397 = vmatmul.mubr.bf16.gmra.mrb[0].mxu0 %v3155
      %v3398 = vpop.f32.mrb[0].mxu0
      %v3399 = vadd.f32 0.0, %v3398
      %v3400 = vpop.f32.mrb[0].mxu0
      %v3401 = vadd.f32 0.0, %v3400
      %v3402 = vpop.f32.mrb[0].mxu0
      %v3403 = vadd.f32 0.0, %v3402
      %v3404 = vpop.f32.mrb[0].mxu0
      %v3405 = vadd.f32 0.0, %v3404
      %3406 = vmatprep.mubr.bf16.mxu0 %v3158
      %3407 = vmatmul.mubr.bf16.gmra.mrb[0].mxu0 %v3157
      %v3408 = vpop.f32.mrb[0].mxu0
      %v3409 = vadd.f32 0.0, %v3408
      %v3410 = vpop.f32.mrb[0].mxu0
      %v3411 = vadd.f32 0.0, %v3410
      %v3412 = vpop.f32.mrb[0].mxu0
      %v3413 = vadd.f32 0.0, %v3412
      %v3414 = vpop.f32.mrb[0].mxu0
      %v3415 = vadd.f32 0.0, %v3414
      %3416 = vmatprep.mubr.bf16.mxu0 %v3160
      %3417 = vmatmul.mubr.bf16.gmra.mrb[0].mxu0 %v3159
      %v3418 = vpop.f32.mrb[0].mxu0
      %v3419 = vadd.f32 0.0, %v3418
      %v3420 = vpop.f32.mrb[0].mxu0
      %v3421 = vadd.f32 0.0, %v3420
      %v3422 = vpop.f32.mrb[0].mxu0
      %v3423 = vadd.f32 0.0, %v3422
      %v3424 = vpop.f32.mrb[0].mxu0
      %v3425 = vadd.f32 0.0, %v3424
      %3426 = vmatprep.mubr.bf16.mxu0 %v3162
      %3427 = vmatmul.mubr.bf16.gmra.mrb[0].mxu0 %v3161
      %v3428 = vpop.f32.mrb[0].mxu0
      %v3429 = vadd.f32 0.0, %v3428
      %v3430 = vpop.f32.mrb[0].mxu0
      %v3431 = vadd.f32 0.0, %v3430
      %v3432 = vpop.f32.mrb[0].mxu0
      %v3433 = vadd.f32 0.0, %v3432
      %v3434 = vpop.f32.mrb[0].mxu0
      %v3435 = vadd.f32 0.0, %v3434
      %3436 = vdwg.mxu0
      %3437 = vmatprep.subr.bf16.mxu0 %v3168
      %3438 = vmatpush1.bf16.msra.mxu0 %v3167
      %3439 = vmatprep.subr.bf16.mxu0 %v3176
      %3440 = vmatpush1.bf16.msra.mxu0 %v3175
      %3441 = vmatprep.subr.bf16.mxu0 %v3184
      %3442 = vmatpush1.bf16.msra.mxu0 %v3183
      %3443 = vmatprep.subr.bf16.mxu0 %v3192
      %3444 = vmatpush1.bf16.msra.mxu0 %v3191
      %3445 = vmatprep.subr.bf16.mxu0 %v3200
      %3446 = vmatpush1.bf16.msra.mxu0 %v3199
      %3447 = vmatprep.subr.bf16.mxu0 %v3208
      %3448 = vmatpush1.bf16.msra.mxu0 %v3207
      %3449 = vmatprep.subr.bf16.mxu0 %v3216
      %3450 = vmatpush1.bf16.msra.mxu0 %v3215
      %3451 = vmatprep.subr.bf16.mxu0 %v3224
      %3452 = vmatpush1.bf16.msra.mxu0 %v3223
      %3453 = vmatprep.subr.bf16.mxu0 %v3232
      %3454 = vmatpush1.bf16.msra.mxu0 %v3231
      %3455 = vmatprep.subr.bf16.mxu0 %v3240
      %3456 = vmatpush1.bf16.msra.mxu0 %v3239
      %3457 = vmatprep.subr.bf16.mxu0 %v3248
      %3458 = vmatpush1.bf16.msra.mxu0 %v3247
      %3459 = vmatprep.subr.bf16.mxu0 %v3256
      %3460 = vmatpush1.bf16.msra.mxu0 %v3255
      %3461 = vmatprep.subr.bf16.mxu0 %v3264
      %3462 = vmatpush1.bf16.msra.mxu0 %v3263
      %3463 = vmatprep.subr.bf16.mxu0 %v3272
      %3464 = vmatpush1.bf16.msra.mxu0 %v3271
      %3465 = vmatprep.subr.bf16.mxu0 %v3280
      %3466 = vmatpush1.bf16.msra.mxu0 %v3279
      %3467 = vmatprep.subr.bf16.mxu0 %v3288
      %3468 = vmatpush1.bf16.msra.mxu0 %v3287
      %3469 = vmatprep.mubr.bf16.mxu0 %v3156
      %3470 = vmatmul.mubr.bf16.gmra.mrb[0].mxu0 %v3155
      %v3471 = vpop.f32.mrb[0].mxu0
      %v3472 = vadd.f32 0.0, %v3471
      %v3473 = vpop.f32.mrb[0].mxu0
      %v3474 = vadd.f32 0.0, %v3473
      %v3475 = vpop.f32.mrb[0].mxu0
      %v3476 = vadd.f32 0.0, %v3475
      %v3477 = vpop.f32.mrb[0].mxu0
      %v3478 = vadd.f32 0.0, %v3477
      %3479 = vmatprep.mubr.bf16.mxu0 %v3158
      %3480 = vmatmul.mubr.bf16.gmra.mrb[0].mxu0 %v3157
      %v3481 = vpop.f32.mrb[0].mxu0
      %v3482 = vadd.f32 0.0, %v3481
      %v3483 = vpop.f32.mrb[0].mxu0
      %v3484 = vadd.f32 0.0, %v3483
      %v3485 = vpop.f32.mrb[0].mxu0
      %v3486 = vadd.f32 0.0, %v3485
      %v3487 = vpop.f32.mrb[0].mxu0
      %v3488 = vadd.f32 0.0, %v3487
      %3489 = vmatprep.mubr.bf16.mxu0 %v3160
      %3490 = vmatmul.mubr.bf16.gmra.mrb[0].mxu0 %v3159
      %v3491 = vpop.f32.mrb[0].mxu0
      %v3492 = vadd.f32 0.0, %v3491
      %v3493 = vpop.f32.mrb[0].mxu0
      %v3494 = vadd.f32 0.0, %v3493
      %v3495 = vpop.f32.mrb[0].mxu0
      %v3496 = vadd.f32 0.0, %v3495
      %v3497 = vpop.f32.mrb[0].mxu0
      %v3498 = vadd.f32 0.0, %v3497
      %3499 = vmatprep.mubr.bf16.mxu0 %v3162
      %3500 = vmatmul.mubr.bf16.gmra.mrb[0].mxu0 %v3161
      %v3501 = vpop.f32.mrb[0].mxu0
      %v3502 = vadd.f32 0.0, %v3501
      %v3503 = vpop.f32.mrb[0].mxu0
      %v3504 = vadd.f32 0.0, %v3503
      %v3505 = vpop.f32.mrb[0].mxu0
      %v3506 = vadd.f32 0.0, %v3505
      %v3507 = vpop.f32.mrb[0].mxu0
      %v3508 = vadd.f32 0.0, %v3507
      %3509 = vdwg.mxu0
      %3510 = vmatprep.subr.bf16.mxu0 %v3170
      %3511 = vmatpush1.bf16.msra.mxu0 %v3169
      %3512 = vmatprep.subr.bf16.mxu0 %v3178
      %3513 = vmatpush1.bf16.msra.mxu0 %v3177
      %3514 = vmatprep.subr.bf16.mxu0 %v3186
      %3515 = vmatpush1.bf16.msra.mxu0 %v3185
      %3516 = vmatprep.subr.bf16.mxu0 %v3194
      %3517 = vmatpush1.bf16.msra.mxu0 %v3193
      %3518 = vmatprep.subr.bf16.mxu0 %v3202
      %3519 = vmatpush1.bf16.msra.mxu0 %v3201
      %3520 = vmatprep.subr.bf16.mxu0 %v3210
      %3521 = vmatpush1.bf16.msra.mxu0 %v3209
      %3522 = vmatprep.subr.bf16.mxu0 %v3218
      %3523 = vmatpush1.bf16.msra.mxu0 %v3217
      %3524 = vmatprep.subr.bf16.mxu0 %v3226
      %3525 = vmatpush1.bf16.msra.mxu0 %v3225
      %3526 = vmatprep.subr.bf16.mxu0 %v3234
      %3527 = vmatpush1.bf16.msra.mxu0 %v3233
      %3528 = vmatprep.subr.bf16.mxu0 %v3242
      %3529 = vmatpush1.bf16.msra.mxu0 %v3241
      %3530 = vmatprep.subr.bf16.mxu0 %v3250
      %3531 = vmatpush1.bf16.msra.mxu0 %v3249
      %3532 = vmatprep.subr.bf16.mxu0 %v3258
      %3533 = vmatpush1.bf16.msra.mxu0 %v3257
      %3534 = vmatprep.subr.bf16.mxu0 %v3266
      %3535 = vmatpush1.bf16.msra.mxu0 %v3265
      %3536 = vmatprep.subr.bf16.mxu0 %v3274
      %3537 = vmatpush1.bf16.msra.mxu0 %v3273
      %3538 = vmatprep.subr.bf16.mxu0 %v3282
      %3539 = vmatpush1.bf16.msra.mxu0 %v3281
      %3540 = vmatprep.subr.bf16.mxu0 %v3290
      %3541 = vmatpush1.bf16.msra.mxu0 %v3289
      %3542 = vmatprep.mubr.bf16.mxu0 %v3156
      %3543 = vmatmul.mubr.bf16.gmra.mrb[0].mxu0 %v3155
      %v3544 = vpop.f32.mrb[0].mxu0
      %v3545 = vadd.f32 0.0, %v3544
      %v3546 = vpop.f32.mrb[0].mxu0
      %v3547 = vadd.f32 0.0, %v3546
      %v3548 = vpop.f32.mrb[0].mxu0
      %v3549 = vadd.f32 0.0, %v3548
      %v3550 = vpop.f32.mrb[0].mxu0
      %v3551 = vadd.f32 0.0, %v3550
      %3552 = vmatprep.mubr.bf16.mxu0 %v3158
      %3553 = vmatmul.mubr.bf16.gmra.mrb[0].mxu0 %v3157
      %v3554 = vpop.f32.mrb[0].mxu0
      %v3555 = vadd.f32 0.0, %v3554
      %v3556 = vpop.f32.mrb[0].mxu0
      %v3557 = vadd.f32 0.0, %v3556
      %v3558 = vpop.f32.mrb[0].mxu0
      %v3559 = vadd.f32 0.0, %v3558
      %v3560 = vpop.f32.mrb[0].mxu0
      %v3561 = vadd.f32 0.0, %v3560
      %3562 = vmatprep.mubr.bf16.mxu0 %v3160
      %3563 = vmatmul.mubr.bf16.gmra.mrb[0].mxu0 %v3159
      %v3564 = vpop.f32.mrb[0].mxu0
      %v3565 = vadd.f32 0.0, %v3564
      %v3566 = vpop.f32.mrb[0].mxu0
      %v3567 = vadd.f32 0.0, %v3566
      %v3568 = vpop.f32.mrb[0].mxu0
      %v3569 = vadd.f32 0.0, %v3568
      %v3570 = vpop.f32.mrb[0].mxu0
      %v3571 = vadd.f32 0.0, %v3570
      %3572 = vmatprep.mubr.bf16.mxu0 %v3162
      %3573 = vmatmul.mubr.bf16.gmra.mrb[0].mxu0 %v3161
      %v3574 = vpop.f32.mrb[0].mxu0
      %v3575 = vadd.f32 0.0, %v3574
      %v3576 = vpop.f32.mrb[0].mxu0
      %v3577 = vadd.f32 0.0, %v3576
      %v3578 = vpop.f32.mrb[0].mxu0
      %v3579 = vadd.f32 0.0, %v3578
      %v3580 = vpop.f32.mrb[0].mxu0
      %v3581 = vadd.f32 0.0, %v3580
      %3582 = vdwg.mxu0
      %v3583 = vrcp.pop %v2895
      %v3584 = vrcp.pop %v2932
      %v3585 = vrcp.pop %v2969
      %v3586 = vrcp.pop %v3006
      %v3587 = vrcp.pop %v3043
      %v3588 = vrcp.pop %v3080
      %v3589 = vrcp.pop %v3117
      %v3590 = vrcp.pop %v3154
      %v3591 = vmul.f32 %v3326, %v3583
      %v3592 = vmul.f32 %v3328, %v3584
      %v3593 = vmul.f32 %v3399, %v3585
      %v3594 = vmul.f32 %v3401, %v3586
      %v3595 = vmul.f32 %v3472, %v3587
      %v3596 = vmul.f32 %v3474, %v3588
      %v3597 = vmul.f32 %v3545, %v3589
      %v3598 = vmul.f32 %v3547, %v3590
      %v3599 = vmul.f32 %v3330, %v3583
      %v3600 = vmul.f32 %v3332, %v3584
      %v3601 = vmul.f32 %v3403, %v3585
      %v3602 = vmul.f32 %v3405, %v3586
      %v3603 = vmul.f32 %v3476, %v3587
      %v3604 = vmul.f32 %v3478, %v3588
      %v3605 = vmul.f32 %v3549, %v3589
      %v3606 = vmul.f32 %v3551, %v3590
      %v3607 = vmul.f32 %v3336, %v3583
      %v3608 = vmul.f32 %v3338, %v3584
      %v3609 = vmul.f32 %v3409, %v3585
      %v3610 = vmul.f32 %v3411, %v3586
      %v3611 = vmul.f32 %v3482, %v3587
      %v3612 = vmul.f32 %v3484, %v3588
      %v3613 = vmul.f32 %v3555, %v3589
      %v3614 = vmul.f32 %v3557, %v3590
      %v3615 = vmul.f32 %v3340, %v3583
      %v3616 = vmul.f32 %v3342, %v3584
      %v3617 = vmul.f32 %v3413, %v3585
      %v3618 = vmul.f32 %v3415, %v3586
      %v3619 = vmul.f32 %v3486, %v3587
      %v3620 = vmul.f32 %v3488, %v3588
      %v3621 = vmul.f32 %v3559, %v3589
      %v3622 = vmul.f32 %v3561, %v3590
      %v3623 = vmul.f32 %v3346, %v3583
      %v3624 = vmul.f32 %v3348, %v3584
      %v3625 = vmul.f32 %v3419, %v3585
      %v3626 = vmul.f32 %v3421, %v3586
      %v3627 = vmul.f32 %v3492, %v3587
      %v3628 = vmul.f32 %v3494, %v3588
      %v3629 = vmul.f32 %v3565, %v3589
      %v3630 = vmul.f32 %v3567, %v3590
      %v3631 = vmul.f32 %v3350, %v3583
      %v3632 = vmul.f32 %v3352, %v3584
      %v3633 = vmul.f32 %v3423, %v3585
      %v3634 = vmul.f32 %v3425, %v3586
      %v3635 = vmul.f32 %v3496, %v3587
      %v3636 = vmul.f32 %v3498, %v3588
      %v3637 = vmul.f32 %v3569, %v3589
      %v3638 = vmul.f32 %v3571, %v3590
      %v3639 = vmul.f32 %v3356, %v3583
      %v3640 = vmul.f32 %v3358, %v3584
      %v3641 = vmul.f32 %v3429, %v3585
      %v3642 = vmul.f32 %v3431, %v3586
      %v3643 = vmul.f32 %v3502, %v3587
      %v3644 = vmul.f32 %v3504, %v3588
      %v3645 = vmul.f32 %v3575, %v3589
      %v3646 = vmul.f32 %v3577, %v3590
      %v3647 = vmul.f32 %v3360, %v3583
      %v3648 = vmul.f32 %v3362, %v3584
      %v3649 = vmul.f32 %v3433, %v3585
      %v3650 = vmul.f32 %v3435, %v3586
      %v3651 = vmul.f32 %v3506, %v3587
      %v3652 = vmul.f32 %v3508, %v3588
      %v3653 = vmul.f32 %v3579, %v3589
      %v3654 = vmul.f32 %v3581, %v3590
      %v3655 = vld [vmem:[%s5] sm:$0xff]
      %v3656 = vld [vmem:[%s5 + $0x8] sm:$0xff]
      %v3657 = vld [vmem:[%s5 + $0x10] sm:$0xff]
      %v3658 = vld [vmem:[%s5 + $0x18] sm:$0xff]
      %v3659 = vld [vmem:[%s5 + $0x20] sm:$0xff]
      %v3660 = vld [vmem:[%s5 + $0x28] sm:$0xff]
      %v3661 = vld [vmem:[%s5 + $0x30] sm:$0xff]
      %v3662 = vld [vmem:[%s5 + $0x38] sm:$0xff]
      %3664 = vset.pattern.permute.xlu0 0
      %3665 = vperm.xlu0 %3664, %v3655
      %v3666 = vpop.permute.xlu0 %3665
      %3669 = vset.pattern.permute.xlu0 0
      %3670 = vperm.xlu0 %3669, %v3656
      %v3671 = vpop.permute.xlu0 %3670
      %3674 = vset.pattern.permute.xlu0 0
      %3675 = vperm.xlu0 %3674, %v3657
      %v3676 = vpop.permute.xlu0 %3675
      %3679 = vset.pattern.permute.xlu0 0
      %3680 = vperm.xlu0 %3679, %v3658
      %v3681 = vpop.permute.xlu0 %3680
      %3684 = vset.pattern.permute.xlu0 0
      %3685 = vperm.xlu0 %3684, %v3659
      %v3686 = vpop.permute.xlu0 %3685
      %3689 = vset.pattern.permute.xlu0 0
      %3690 = vperm.xlu0 %3689, %v3660
      %v3691 = vpop.permute.xlu0 %3690
      %3694 = vset.pattern.permute.xlu0 0
      %3695 = vperm.xlu0 %3694, %v3661
      %v3696 = vpop.permute.xlu0 %3695
      %3699 = vset.pattern.permute.xlu0 0
      %3700 = vperm.xlu0 %3699, %v3662
      %v3701 = vpop.permute.xlu0 %3700
      %v3703 = vadd.f32 %v3591, %v3666
      %v3704 = vadd.f32 %v3592, %v3666
      %v3705 = vadd.f32 %v3593, %v3666
      %v3706 = vadd.f32 %v3594, %v3666
      %v3707 = vadd.f32 %v3595, %v3666
      %v3708 = vadd.f32 %v3596, %v3666
      %v3709 = vadd.f32 %v3597, %v3666
      %v3710 = vadd.f32 %v3598, %v3666
      %v3711 = vadd.f32 %v3599, %v3671
      %v3712 = vadd.f32 %v3600, %v3671
      %v3713 = vadd.f32 %v3601, %v3671
      %v3714 = vadd.f32 %v3602, %v3671
      %v3715 = vadd.f32 %v3603, %v3671
      %v3716 = vadd.f32 %v3604, %v3671
      %v3717 = vadd.f32 %v3605, %v3671
      %v3718 = vadd.f32 %v3606, %v3671
      %v3719 = vadd.f32 %v3607, %v3676
      %v3720 = vadd.f32 %v3608, %v3676
      %v3721 = vadd.f32 %v3609, %v3676
      %v3722 = vadd.f32 %v3610, %v3676
      %v3723 = vadd.f32 %v3611, %v3676
      %v3724 = vadd.f32 %v3612, %v3676
      %v3725 = vadd.f32 %v3613, %v3676
      %v3726 = vadd.f32 %v3614, %v3676
      %v3727 = vadd.f32 %v3615, %v3681
      %v3728 = vadd.f32 %v3616, %v3681
      %v3729 = vadd.f32 %v3617, %v3681
      %v3730 = vadd.f32 %v3618, %v3681
      %v3731 = vadd.f32 %v3619, %v3681
      %v3732 = vadd.f32 %v3620, %v3681
      %v3733 = vadd.f32 %v3621, %v3681
      %v3734 = vadd.f32 %v3622, %v3681
      %v3735 = vadd.f32 %v3623, %v3686
      %v3736 = vadd.f32 %v3624, %v3686
      %v3737 = vadd.f32 %v3625, %v3686
      %v3738 = vadd.f32 %v3626, %v3686
      %v3739 = vadd.f32 %v3627, %v3686
      %v3740 = vadd.f32 %v3628, %v3686
      %v3741 = vadd.f32 %v3629, %v3686
      %v3742 = vadd.f32 %v3630, %v3686
      %v3743 = vadd.f32 %v3631, %v3691
      %v3744 = vadd.f32 %v3632, %v3691
      %v3745 = vadd.f32 %v3633, %v3691
      %v3746 = vadd.f32 %v3634, %v3691
      %v3747 = vadd.f32 %v3635, %v3691
      %v3748 = vadd.f32 %v3636, %v3691
      %v3749 = vadd.f32 %v3637, %v3691
      %v3750 = vadd.f32 %v3638, %v3691
      %v3751 = vadd.f32 %v3639, %v3696
      %v3752 = vadd.f32 %v3640, %v3696
      %v3753 = vadd.f32 %v3641, %v3696
      %v3754 = vadd.f32 %v3642, %v3696
      %v3755 = vadd.f32 %v3643, %v3696
      %v3756 = vadd.f32 %v3644, %v3696
      %v3757 = vadd.f32 %v3645, %v3696
      %v3758 = vadd.f32 %v3646, %v3696
      %v3759 = vadd.f32 %v3647, %v3701
      %v3760 = vadd.f32 %v3648, %v3701
      %v3761 = vadd.f32 %v3649, %v3701
      %v3762 = vadd.f32 %v3650, %v3701
      %v3763 = vadd.f32 %v3651, %v3701
      %v3764 = vadd.f32 %v3652, %v3701
      %v3765 = vadd.f32 %v3653, %v3701
      %v3766 = vadd.f32 %v3654, %v3701
      %v3767 = vadd.f32 %v3703, %v312
      %v3768 = vadd.f32 %v3704, %v313
      %v3769 = vadd.f32 %v3705, %v314
      %v3770 = vadd.f32 %v3706, %v315
      %v3771 = vadd.f32 %v3707, %v316
      %v3772 = vadd.f32 %v3708, %v317
      %v3773 = vadd.f32 %v3709, %v318
      %v3774 = vadd.f32 %v3710, %v319
      %v3775 = vadd.f32 %v3711, %v320
      %v3776 = vadd.f32 %v3712, %v321
      %v3777 = vadd.f32 %v3713, %v322
      %v3778 = vadd.f32 %v3714, %v323
      %v3779 = vadd.f32 %v3715, %v324
      %v3780 = vadd.f32 %v3716, %v325
      %v3781 = vadd.f32 %v3717, %v326
      %v3782 = vadd.f32 %v3718, %v327
      %v3783 = vadd.f32 %v3719, %v328
      %v3784 = vadd.f32 %v3720, %v329
      %v3785 = vadd.f32 %v3721, %v330
      %v3786 = vadd.f32 %v3722, %v331
      %v3787 = vadd.f32 %v3723, %v332
      %v3788 = vadd.f32 %v3724, %v333
      %v3789 = vadd.f32 %v3725, %v334
      %v3790 = vadd.f32 %v3726, %v335
      %v3791 = vadd.f32 %v3727, %v336
      %v3792 = vadd.f32 %v3728, %v337
      %v3793 = vadd.f32 %v3729, %v338
      %v3794 = vadd.f32 %v3730, %v339
      %v3795 = vadd.f32 %v3731, %v340
      %v3796 = vadd.f32 %v3732, %v341
      %v3797 = vadd.f32 %v3733, %v342
      %v3798 = vadd.f32 %v3734, %v343
      %v3799 = vadd.f32 %v3735, %v344
      %v3800 = vadd.f32 %v3736, %v345
      %v3801 = vadd.f32 %v3737, %v346
      %v3802 = vadd.f32 %v3738, %v347
      %v3803 = vadd.f32 %v3739, %v348
      %v3804 = vadd.f32 %v3740, %v349
      %v3805 = vadd.f32 %v3741, %v350
      %v3806 = vadd.f32 %v3742, %v351
      %v3807 = vadd.f32 %v3743, %v352
      %v3808 = vadd.f32 %v3744, %v353
      %v3809 = vadd.f32 %v3745, %v354
      %v3810 = vadd.f32 %v3746, %v355
      %v3811 = vadd.f32 %v3747, %v356
      %v3812 = vadd.f32 %v3748, %v357
      %v3813 = vadd.f32 %v3749, %v358
      %v3814 = vadd.f32 %v3750, %v359
      %v3815 = vadd.f32 %v3751, %v360
      %v3816 = vadd.f32 %v3752, %v361
      %v3817 = vadd.f32 %v3753, %v362
      %v3818 = vadd.f32 %v3754, %v363
      %v3819 = vadd.f32 %v3755, %v364
      %v3820 = vadd.f32 %v3756, %v365
      %v3821 = vadd.f32 %v3757, %v366
      %v3822 = vadd.f32 %v3758, %v367
      %v3823 = vadd.f32 %v3759, %v368
      %v3824 = vadd.f32 %v3760, %v369
      %v3825 = vadd.f32 %v3761, %v370
      %v3826 = vadd.f32 %v3762, %v371
      %v3827 = vadd.f32 %v3763, %v372
      %v3828 = vadd.f32 %v3764, %v373
      %v3829 = vadd.f32 %v3765, %v374
      %v3830 = vadd.f32 %v3766, %v375
      %3831 = vst [vmem:[%s309] sm:$0xff] %v3767
      %3832 = vst [vmem:[%s309 + $0x8] sm:$0xff] %v3768
      %3833 = vst [vmem:[%s309 + $0x10] sm:$0xff] %v3769
      %3834 = vst [vmem:[%s309 + $0x18] sm:$0xff] %v3770
      %3835 = vst [vmem:[%s309 + $0x20] sm:$0xff] %v3771
      %3836 = vst [vmem:[%s309 + $0x28] sm:$0xff] %v3772
      %3837 = vst [vmem:[%s309 + $0x30] sm:$0xff] %v3773
      %3838 = vst [vmem:[%s309 + $0x38] sm:$0xff] %v3774
      %3839 = vst [vmem:[%s309 + $0x40] sm:$0xff] %v3775
      %3840 = vst [vmem:[%s309 + $0x48] sm:$0xff] %v3776
      %3841 = vst [vmem:[%s309 + $0x50] sm:$0xff] %v3777
      %3842 = vst [vmem:[%s309 + $0x58] sm:$0xff] %v3778
      %3843 = vst [vmem:[%s309 + $0x60] sm:$0xff] %v3779
      %3844 = vst [vmem:[%s309 + $0x68] sm:$0xff] %v3780
      %3845 = vst [vmem:[%s309 + $0x70] sm:$0xff] %v3781
      %3846 = vst [vmem:[%s309 + $0x78] sm:$0xff] %v3782
      %3847 = vst [vmem:[%s309 + $0x80] sm:$0xff] %v3783
      %3848 = vst [vmem:[%s309 + $0x88] sm:$0xff] %v3784
      %3849 = vst [vmem:[%s309 + $0x90] sm:$0xff] %v3785
      %3850 = vst [vmem:[%s309 + $0x98] sm:$0xff] %v3786
      %3851 = vst [vmem:[%s309 + $0xa0] sm:$0xff] %v3787
      %3852 = vst [vmem:[%s309 + $0xa8] sm:$0xff] %v3788
      %3853 = vst [vmem:[%s309 + $0xb0] sm:$0xff] %v3789
      %3854 = vst [vmem:[%s309 + $0xb8] sm:$0xff] %v3790
      %3855 = vst [vmem:[%s309 + $0xc0] sm:$0xff] %v3791
      %3856 = vst [vmem:[%s309 + $0xc8] sm:$0xff] %v3792
      %3857 = vst [vmem:[%s309 + $0xd0] sm:$0xff] %v3793
      %3858 = vst [vmem:[%s309 + $0xd8] sm:$0xff] %v3794
      %3859 = vst [vmem:[%s309 + $0xe0] sm:$0xff] %v3795
      %3860 = vst [vmem:[%s309 + $0xe8] sm:$0xff] %v3796
      %3861 = vst [vmem:[%s309 + $0xf0] sm:$0xff] %v3797
      %3862 = vst [vmem:[%s309 + $0xf8] sm:$0xff] %v3798
      %3863 = vst [vmem:[%s309 + $0x100] sm:$0xff] %v3799
      %3864 = vst [vmem:[%s309 + $0x108] sm:$0xff] %v3800
      %3865 = vst [vmem:[%s309 + $0x110] sm:$0xff] %v3801
      %3866 = vst [vmem:[%s309 + $0x118] sm:$0xff] %v3802
      %3867 = vst [vmem:[%s309 + $0x120] sm:$0xff] %v3803
      %3868 = vst [vmem:[%s309 + $0x128] sm:$0xff] %v3804
      %3869 = vst [vmem:[%s309 + $0x130] sm:$0xff] %v3805
      %3870 = vst [vmem:[%s309 + $0x138] sm:$0xff] %v3806
      %3871 = vst [vmem:[%s309 + $0x140] sm:$0xff] %v3807
      %3872 = vst [vmem:[%s309 + $0x148] sm:$0xff] %v3808
      %3873 = vst [vmem:[%s309 + $0x150] sm:$0xff] %v3809
      %3874 = vst [vmem:[%s309 + $0x158] sm:$0xff] %v3810
      %3875 = vst [vmem:[%s309 + $0x160] sm:$0xff] %v3811
      %3876 = vst [vmem:[%s309 + $0x168] sm:$0xff] %v3812
      %3877 = vst [vmem:[%s309 + $0x170] sm:$0xff] %v3813
      %3878 = vst [vmem:[%s309 + $0x178] sm:$0xff] %v3814
      %3879 = vst [vmem:[%s309 + $0x180] sm:$0xff] %v3815
      %3880 = vst [vmem:[%s309 + $0x188] sm:$0xff] %v3816
      %3881 = vst [vmem:[%s309 + $0x190] sm:$0xff] %v3817
      %3882 = vst [vmem:[%s309 + $0x198] sm:$0xff] %v3818
      %3883 = vst [vmem:[%s309 + $0x1a0] sm:$0xff] %v3819
      %3884 = vst [vmem:[%s309 + $0x1a8] sm:$0xff] %v3820
      %3885 = vst [vmem:[%s309 + $0x1b0] sm:$0xff] %v3821
      %3886 = vst [vmem:[%s309 + $0x1b8] sm:$0xff] %v3822
      %3887 = vst [vmem:[%s309 + $0x1c0] sm:$0xff] %v3823
      %3888 = vst [vmem:[%s309 + $0x1c8] sm:$0xff] %v3824
      %3889 = vst [vmem:[%s309 + $0x1d0] sm:$0xff] %v3825
      %3890 = vst [vmem:[%s309 + $0x1d8] sm:$0xff] %v3826
      %3891 = vst [vmem:[%s309 + $0x1e0] sm:$0xff] %v3827
      %3892 = vst [vmem:[%s309 + $0x1e8] sm:$0xff] %v3828
      %3893 = vst [vmem:[%s309 + $0x1f0] sm:$0xff] %v3829
      %3894 = vst [vmem:[%s309 + $0x1f8] sm:$0xff] %v3830
      %s3895 = smul.u32 8, %s22
      %p3896 = scmp.lt.s32.totalorder %s21, 1
      %s3897 = scalar_select %p3896, %s21, 1
      %p3898 = scmp.lt.s32.totalorder %s3895, 7
      %s3899 = scalar_select %p3898, %s3895, 7
      %s3900 = smul.addr %s3897, 64
      %s3901 = sadd.s32 %s3899, %s3900
      %s3902 = smul.addr %s3901, 8
      %s3903 = scalar_lea.vmem %s6, %s3902
      // Predicated region
      $region45: #{nonlocal_block_forward.1} parent=43 // pred_check
        %p3904 = pneg %p187
      $region46: #{nonlocal_block_forward.1} parent=43 // pred_check_branch
        %3906 = sbr.rel (%p3904) target = $region48
      $region47: #{nonlocal_block_forward.1} parent=43 // pred_region
        %s3907 = smul.u32 8, %s22
      $region48: #{nonlocal_block_forward.1} parent=43 // pred_fallthru
        _
    $region44: #{nonlocal_block_forward.1} parent=5 // pred_fallthru
      _
    %p3908 = scmp.le.s32.totalorder 2, %s12
    // Predicated region
    $region49: #{nonlocal_block_forward.1} parent=5 // pred_check
      %p3909 = pneg %p3908
    $region50: #{nonlocal_block_forward.1} parent=5 // pred_check_branch
      %3911 = sbr.rel (%p3909) target = $region52
    $region51: #{nonlocal_block_forward.1} parent=5 // pred_region
      %s3912 = ssub.s32 %s12, 2
      // Predicated region
      $region53: #{nonlocal_block_forward.1} parent=51 // pred_check
        %p3913 = pneg %p193
      $region54: #{nonlocal_block_forward.1} parent=51 // pred_check_branch
        %3915 = sbr.rel (%p3913) target = $region56
      $region55: #{nonlocal_block_forward.1} parent=51 // pred_region
        %s3916 = smul.u32 8, %s24
        %p3917 = scmp.lt.s32.totalorder %s23, 1
        %s3918 = scalar_select %p3917, %s23, 1
        %p3919 = scmp.lt.s32.totalorder %s3916, 7
        %s3920 = scalar_select %p3919, %s3916, 7
        %s3921 = smul.addr %s3918, 64
        %s3922 = sadd.s32 %s3920, %s3921
        %s3923 = smul.addr %s3922, 8
        %s3924 = scalar_lea.vmem %s6, %s3923
      $region56: #{nonlocal_block_forward.1} parent=51 // pred_fallthru
        _
    $region52: #{nonlocal_block_forward.1} parent=5 // pred_fallthru
      _
  $region6: #{nonlocal_block_forward.1} parent=0 // loop_footer
    %s16 = sadd.s32 1, %s12
  $region7: #{nonlocal_block_forward.1} parent=0 // loop_footer_branch
    %11 = sbr.rel target = $region3
  $region8: #{nonlocal_block_forward.1} parent=0 // loop_exit
    _

</llo_original>
